<compile_context>
chip_gen: v5e
topology: v5e:2x2
jax: 0.10.0
libtpu: 0.0.40
codegen_flags: <defaults>
</compile_context>

<pallas_src>
import functools

import jax
import jax.numpy as jnp
from jax.experimental import pallas as pl
from jax.experimental.pallas import tpu as pltpu


def _pick_band_rows(h):
    """Output rows handled per grid step. Divides H exactly (no edge masking)."""
    if h <= 64:
        return h
    for cand in (64, 32, 16, 8, 4, 2):
        if h % cand == 0:
            return cand
    return h


def _conv_relu_kernel(x_ref, w_ref, b_ref, o_ref, *, th, w_out, c_in, c_out, k):
    """Fused conv(kxk, SAME) + bias + ReLU for one band of output rows.

    x_ref: [Hp, Wp, C]   bf16  whole padded NHWC image (VMEM-resident per batch)
    w_ref: [k*k, C, Co]  bf16  one [C, Co] tap per (kh, kw) offset
    b_ref: [1, 1, Co]    f32
    o_ref: [th, W, Co]   f32   one band of output rows
    """
    row0 = pl.multiple_of(pl.program_id(1) * th, th)
    # In-kernel "im2col": the k*k shifted views are built from the VMEM-resident
    # image; the patch matrix never exists in HBM.
    band = x_ref[pl.ds(row0, th + k - 1), :, :]              # [th+k-1, Wp, C]
    acc = jnp.zeros((th, w_out, c_out), jnp.float32)
    for kh in range(k):
        for kw in range(k):
            piece = band[kh:kh + th, kw:kw + w_out, :]       # [th, W, C]
            tap = jnp.broadcast_to(w_ref[kh * k + kw][None, :, :],
                                   (th, c_in, c_out))        # [th, C, Co] (tiny)
            # Batched matmul (band rows = batch dim), f32 accumulation on MXU.
            acc = acc + jnp.einsum("hwc,hco->hwo", piece, tap,
                                   preferred_element_type=jnp.float32)
    o_ref[...] = jnp.maximum(acc + b_ref[...], 0.0)


def _pallas_conv_relu(xp, w_taps, b_row, *, h, w, th, k):
    n, hp, wp, c_in = xp.shape
    kk, _, c_out = w_taps.shape
    assert kk == k * k and h % th == 0
    n_bands = h // th

    kernel = functools.partial(_conv_relu_kernel, th=th, w_out=w,
                               c_in=c_in, c_out=c_out, k=k)
    flops = 2 * n * h * w * k * k * c_in * c_out
    bytes_accessed = (xp.size * 2                    # bf16 image read
                      + n * h * w * c_out * 4        # f32 output write
                      + w_taps.size * 2 + b_row.size * 4)

    return pl.pallas_call(
        kernel,
        out_shape=jax.ShapeDtypeStruct((n, h, w, c_out), jnp.float32),
        grid_spec=pltpu.PrefetchScalarGridSpec(
            num_scalar_prefetch=0,
            grid=(n, n_bands),
            in_specs=[
                # Whole padded image; index_map ignores the band axis, so the
                # block stays VMEM-resident across bands (re-DMA'd only per n).
                pl.BlockSpec((None, hp, wp, c_in), lambda i, b: (i, 0, 0, 0)),
                pl.BlockSpec((kk, c_in, c_out), lambda i, b: (0, 0, 0)),
                pl.BlockSpec((1, 1, c_out), lambda i, b: (0, 0, 0)),
            ],
            out_specs=pl.BlockSpec((None, th, w, c_out),
                                   lambda i, b: (i, b, 0, 0)),
        ),
        compiler_params=pltpu.CompilerParams(
            # Batch axis parallel (two programs -> both v7x TCs busy even at the
            # toy shape); band axis sequential so the resident image block is
            # not re-fetched per band.
            dimension_semantics=("parallel", "arbitrary"),
        ),
        # Mem-bound custom call: give XLA realistic bytes for scheduling.
        cost_estimate=pl.CostEstimate(flops=flops, transcendentals=0,
                                      bytes_accessed=bytes_accessed),
    )(xp, w_taps, b_row)


class InnerConvModule:
    """Synthetic inner module: Conv2d(4->8, 3x3, pad=1, bias) + ReLU (NCHW I/O)."""

    def __init__(self, c_in=4, c_out=8, k=3, key=jax.random.PRNGKey(1)):
        kw_key, kb_key = jax.random.split(key)
        self.c_in, self.c_out, self.k = c_in, c_out, k
        fan_in = c_in * k * k
        self.weight = (jax.random.normal(kw_key, (c_out, c_in, k, k), jnp.float32)
                       * (2.0 / fan_in) ** 0.5)
        self.bias = jax.random.normal(kb_key, (c_out,), jnp.float32) * 0.01
        # Hoisted weight/bias repack (runs once, not every forward):
        # (Co, Ci, kh, kw) -> (kh, kw, Ci, Co) -> [k*k, Ci, Co] bf16 taps.
        self.w_taps = (jnp.transpose(self.weight, (2, 3, 1, 0))
                       .reshape(k * k, c_in, c_out).astype(jnp.bfloat16))
        self.b_row = self.bias.reshape(1, 1, c_out).astype(jnp.float32)

    def __call__(self, x):
        n, c, h, w = x.shape
        assert c == self.c_in
        k = self.k
        pad = k // 2
        th = _pick_band_rows(h)
        # NCHW -> NHWC once (module contract is NCHW, like the PyTorch conv);
        # callers able to provide NHWC directly could skip both transposes.
        # bf16 cast happens *before* the only materialized intermediate (the
        # padded image), halving its HBM bytes; accumulation stays f32.
        x_nhwc = jnp.transpose(x, (0, 2, 3, 1)).astype(jnp.bfloat16)
        xp = jnp.pad(x_nhwc, ((0, 0), (pad, pad), (pad, pad), (0, 0)))
        out_nhwc = _pallas_conv_relu(xp, self.w_taps, self.b_row,
                                     h=h, w=w, th=th, k=k)   # [N, H, W, Co] f32
        return jnp.transpose(out_nhwc, (0, 3, 1, 2))          # back to NCHW


class WrappedModel:
    """forward(x) = self.module(x)  (pure delegation, same as the PyTorch module)."""

    def __init__(self, module):
        self.module = module

    def __call__(self, x):
        return self.module(x)


if __name__ == "__main__":
    key = jax.random.PRNGKey(0)
    x = jax.random.normal(key, (2, 4, 16, 16), jnp.float32)   # NCHW

    model = WrappedModel(InnerConvModule(c_in=4, c_out=8, k=3))
    y = jax.block_until_ready(model(x))

    assert y.shape == (2, 8, 16, 16), y.shape
    assert y.dtype == jnp.float32
    assert bool(jnp.all(jnp.isfinite(y)))

    # Reference: plain-XLA conv + bias + ReLU (loose tol: bf16 MXU operands).
    inner = model.module
    ref = jax.lax.conv_general_dilated(
        x, inner.weight, window_strides=(1, 1), padding="SAME",
        dimension_numbers=("NCHW", "OIHW", "NCHW"))
    ref = jnp.maximum(ref + inner.bias.reshape(1, -1, 1, 1), 0.0)
    assert bool(jnp.allclose(y, ref, atol=1e-1, rtol=1e-1)), (
        float(jnp.max(jnp.abs(y - ref))))

    print("KERNEL_OK")
</pallas_src>

<mosaic_0001>
module attributes {stable_mosaic.version = 11 : i64} {
  func.func @_conv_relu_kernel(%arg0: i32, %arg1: i32, %arg2: memref<1x18x18x4xbf16, #tpu.memory_space<vmem>>, %arg3: memref<9x4x8xbf16, #tpu.memory_space<vmem>>, %arg4: memref<1x1x8xf32, #tpu.memory_space<vmem>>, %arg5: memref<1x16x16x8xf32, #tpu.memory_space<vmem>>) attributes {dimension_semantics = [#tpu.dimension_semantics<parallel>, #tpu.dimension_semantics<arbitrary>], iteration_bounds = array<i64: 2, 1>, scalar_prefetch = 0 : i64, scratch_operands = 0 : i64, tpu.core_type = #tpu.core_type<tc>, window_params = [{transform_indices = @transform_0, window_bounds = array<i64: 1, 18, 18, 4>}, {pipeline_mode = #tpu.pipeline_mode<synchronous>, transform_indices = @transform_1, window_bounds = array<i64: 9, 4, 8>}, {pipeline_mode = #tpu.pipeline_mode<synchronous>, transform_indices = @transform_2, window_bounds = array<i64: 1, 1, 8>}, {transform_indices = @transform_3, window_bounds = array<i64: 1, 16, 16, 8>}]} {
    %c16_i32 = arith.constant 16 : i32
    %0 = arith.muli %arg1, %c16_i32 : i32
    %1 = tpu.assume_multiple %0, 16 : i32
    %c0 = arith.constant 0 : index
    %2 = arith.index_cast %1 : i32 to index
    %c0_0 = arith.constant 0 : index
    %c0_1 = arith.constant 0 : index
    %3 = vector.load %arg2[%c0, %2, %c0_0, %c0_1] : memref<1x18x18x4xbf16, #tpu.memory_space<vmem>>, vector<1x18x18x4xbf16>
    %4 = vector.shape_cast %3 : vector<1x18x18x4xbf16> to vector<18x18x4xbf16>
    %cst = arith.constant 0.000000e+00 : f32
    %5 = vector.broadcast %cst : f32 to vector<16x16x8xf32>
    %6 = vector.extract_strided_slice %4 {offsets = [0, 0, 0], sizes = [16, 16, 4], strides = [1, 1, 1]} : vector<18x18x4xbf16> to vector<16x16x4xbf16>
    %c0_2 = arith.constant 0 : index
    %c0_3 = arith.constant 0 : index
    %c0_4 = arith.constant 0 : index
    %7 = vector.load %arg3[%c0_2, %c0_3, %c0_4] : memref<9x4x8xbf16, #tpu.memory_space<vmem>>, vector<1x4x8xbf16>
    %8 = vector.shape_cast %7 : vector<1x4x8xbf16> to vector<4x8xbf16>
    %9 = vector.shape_cast %8 : vector<4x8xbf16> to vector<1x4x8xbf16>
    %10 = vector.shape_cast %9 : vector<1x4x8xbf16> to vector<1x4x8xbf16>
    %11 = vector.broadcast %10 : vector<1x4x8xbf16> to vector<16x4x8xbf16>
    "tpu.trace_start"() <{level = 10 : i32, message = "hwc,hco->hwo"}> : () -> ()
    %cst_5 = arith.constant dense<0.000000e+00> : vector<16x16x8xf32>
    %12 = tpu.matmul %6, %11, %cst_5 {dimension_numbers = #tpu.dot_dimension_numbers<[2], [1], [1], [2], [0, 0, 0, 1, 1, 2], [0], [0]>} : vector<16x16x4xbf16>, vector<16x4x8xbf16>, vector<16x16x8xf32> -> vector<16x16x8xf32>
    "tpu.trace_stop"() : () -> ()
    %13 = arith.addf %5, %12 : vector<16x16x8xf32>
    %14 = vector.extract_strided_slice %4 {offsets = [0, 1, 0], sizes = [16, 16, 4], strides = [1, 1, 1]} : vector<18x18x4xbf16> to vector<16x16x4xbf16>
    %c1 = arith.constant 1 : index
    %c0_6 = arith.constant 0 : index
    %c0_7 = arith.constant 0 : index
    %15 = vector.load %arg3[%c1, %c0_6, %c0_7] : memref<9x4x8xbf16, #tpu.memory_space<vmem>>, vector<1x4x8xbf16>
    %16 = vector.shape_cast %15 : vector<1x4x8xbf16> to vector<4x8xbf16>
    %17 = vector.shape_cast %16 : vector<4x8xbf16> to vector<1x4x8xbf16>
    %18 = vector.shape_cast %17 : vector<1x4x8xbf16> to vector<1x4x8xbf16>
    %19 = vector.broadcast %18 : vector<1x4x8xbf16> to vector<16x4x8xbf16>
    "tpu.trace_start"() <{level = 10 : i32, message = "hwc,hco->hwo"}> : () -> ()
    %cst_8 = arith.constant dense<0.000000e+00> : vector<16x16x8xf32>
    %20 = tpu.matmul %14, %19, %cst_8 {dimension_numbers = #tpu.dot_dimension_numbers<[2], [1], [1], [2], [0, 0, 0, 1, 1, 2], [0], [0]>} : vector<16x16x4xbf16>, vector<16x4x8xbf16>, vector<16x16x8xf32> -> vector<16x16x8xf32>
    "tpu.trace_stop"() : () -> ()
    %21 = arith.addf %13, %20 : vector<16x16x8xf32>
    %22 = vector.extract_strided_slice %4 {offsets = [0, 2, 0], sizes = [16, 16, 4], strides = [1, 1, 1]} : vector<18x18x4xbf16> to vector<16x16x4xbf16>
    %c2 = arith.constant 2 : index
    %c0_9 = arith.constant 0 : index
    %c0_10 = arith.constant 0 : index
    %23 = vector.load %arg3[%c2, %c0_9, %c0_10] : memref<9x4x8xbf16, #tpu.memory_space<vmem>>, vector<1x4x8xbf16>
    %24 = vector.shape_cast %23 : vector<1x4x8xbf16> to vector<4x8xbf16>
    %25 = vector.shape_cast %24 : vector<4x8xbf16> to vector<1x4x8xbf16>
    %26 = vector.shape_cast %25 : vector<1x4x8xbf16> to vector<1x4x8xbf16>
    %27 = vector.broadcast %26 : vector<1x4x8xbf16> to vector<16x4x8xbf16>
    "tpu.trace_start"() <{level = 10 : i32, message = "hwc,hco->hwo"}> : () -> ()
    %cst_11 = arith.constant dense<0.000000e+00> : vector<16x16x8xf32>
    %28 = tpu.matmul %22, %27, %cst_11 {dimension_numbers = #tpu.dot_dimension_numbers<[2], [1], [1], [2], [0, 0, 0, 1, 1, 2], [0], [0]>} : vector<16x16x4xbf16>, vector<16x4x8xbf16>, vector<16x16x8xf32> -> vector<16x16x8xf32>
    "tpu.trace_stop"() : () -> ()
    %29 = arith.addf %21, %28 : vector<16x16x8xf32>
    %30 = vector.extract_strided_slice %4 {offsets = [1, 0, 0], sizes = [16, 16, 4], strides = [1, 1, 1]} : vector<18x18x4xbf16> to vector<16x16x4xbf16>
    %c3 = arith.constant 3 : index
    %c0_12 = arith.constant 0 : index
    %c0_13 = arith.constant 0 : index
    %31 = vector.load %arg3[%c3, %c0_12, %c0_13] : memref<9x4x8xbf16, #tpu.memory_space<vmem>>, vector<1x4x8xbf16>
    %32 = vector.shape_cast %31 : vector<1x4x8xbf16> to vector<4x8xbf16>
    %33 = vector.shape_cast %32 : vector<4x8xbf16> to vector<1x4x8xbf16>
    %34 = vector.shape_cast %33 : vector<1x4x8xbf16> to vector<1x4x8xbf16>
    %35 = vector.broadcast %34 : vector<1x4x8xbf16> to vector<16x4x8xbf16>
    "tpu.trace_start"() <{level = 10 : i32, message = "hwc,hco->hwo"}> : () -> ()
    %cst_14 = arith.constant dense<0.000000e+00> : vector<16x16x8xf32>
    %36 = tpu.matmul %30, %35, %cst_14 {dimension_numbers = #tpu.dot_dimension_numbers<[2], [1], [1], [2], [0, 0, 0, 1, 1, 2], [0], [0]>} : vector<16x16x4xbf16>, vector<16x4x8xbf16>, vector<16x16x8xf32> -> vector<16x16x8xf32>
    "tpu.trace_stop"() : () -> ()
    %37 = arith.addf %29, %36 : vector<16x16x8xf32>
    %38 = vector.extract_strided_slice %4 {offsets = [1, 1, 0], sizes = [16, 16, 4], strides = [1, 1, 1]} : vector<18x18x4xbf16> to vector<16x16x4xbf16>
    %c4 = arith.constant 4 : index
    %c0_15 = arith.constant 0 : index
    %c0_16 = arith.constant 0 : index
    %39 = vector.load %arg3[%c4, %c0_15, %c0_16] : memref<9x4x8xbf16, #tpu.memory_space<vmem>>, vector<1x4x8xbf16>
    %40 = vector.shape_cast %39 : vector<1x4x8xbf16> to vector<4x8xbf16>
    %41 = vector.shape_cast %40 : vector<4x8xbf16> to vector<1x4x8xbf16>
    %42 = vector.shape_cast %41 : vector<1x4x8xbf16> to vector<1x4x8xbf16>
    %43 = vector.broadcast %42 : vector<1x4x8xbf16> to vector<16x4x8xbf16>
    "tpu.trace_start"() <{level = 10 : i32, message = "hwc,hco->hwo"}> : () -> ()
    %cst_17 = arith.constant dense<0.000000e+00> : vector<16x16x8xf32>
    %44 = tpu.matmul %38, %43, %cst_17 {dimension_numbers = #tpu.dot_dimension_numbers<[2], [1], [1], [2], [0, 0, 0, 1, 1, 2], [0], [0]>} : vector<16x16x4xbf16>, vector<16x4x8xbf16>, vector<16x16x8xf32> -> vector<16x16x8xf32>
    "tpu.trace_stop"() : () -> ()
    %45 = arith.addf %37, %44 : vector<16x16x8xf32>
    %46 = vector.extract_strided_slice %4 {offsets = [1, 2, 0], sizes = [16, 16, 4], strides = [1, 1, 1]} : vector<18x18x4xbf16> to vector<16x16x4xbf16>
    %c5 = arith.constant 5 : index
    %c0_18 = arith.constant 0 : index
    %c0_19 = arith.constant 0 : index
    %47 = vector.load %arg3[%c5, %c0_18, %c0_19] : memref<9x4x8xbf16, #tpu.memory_space<vmem>>, vector<1x4x8xbf16>
    %48 = vector.shape_cast %47 : vector<1x4x8xbf16> to vector<4x8xbf16>
    %49 = vector.shape_cast %48 : vector<4x8xbf16> to vector<1x4x8xbf16>
    %50 = vector.shape_cast %49 : vector<1x4x8xbf16> to vector<1x4x8xbf16>
    %51 = vector.broadcast %50 : vector<1x4x8xbf16> to vector<16x4x8xbf16>
    "tpu.trace_start"() <{level = 10 : i32, message = "hwc,hco->hwo"}> : () -> ()
    %cst_20 = arith.constant dense<0.000000e+00> : vector<16x16x8xf32>
    %52 = tpu.matmul %46, %51, %cst_20 {dimension_numbers = #tpu.dot_dimension_numbers<[2], [1], [1], [2], [0, 0, 0, 1, 1, 2], [0], [0]>} : vector<16x16x4xbf16>, vector<16x4x8xbf16>, vector<16x16x8xf32> -> vector<16x16x8xf32>
    "tpu.trace_stop"() : () -> ()
    %53 = arith.addf %45, %52 : vector<16x16x8xf32>
    %54 = vector.extract_strided_slice %4 {offsets = [2, 0, 0], sizes = [16, 16, 4], strides = [1, 1, 1]} : vector<18x18x4xbf16> to vector<16x16x4xbf16>
    %c6 = arith.constant 6 : index
    %c0_21 = arith.constant 0 : index
    %c0_22 = arith.constant 0 : index
    %55 = vector.load %arg3[%c6, %c0_21, %c0_22] : memref<9x4x8xbf16, #tpu.memory_space<vmem>>, vector<1x4x8xbf16>
    %56 = vector.shape_cast %55 : vector<1x4x8xbf16> to vector<4x8xbf16>
    %57 = vector.shape_cast %56 : vector<4x8xbf16> to vector<1x4x8xbf16>
    %58 = vector.shape_cast %57 : vector<1x4x8xbf16> to vector<1x4x8xbf16>
    %59 = vector.broadcast %58 : vector<1x4x8xbf16> to vector<16x4x8xbf16>
    "tpu.trace_start"() <{level = 10 : i32, message = "hwc,hco->hwo"}> : () -> ()
    %cst_23 = arith.constant dense<0.000000e+00> : vector<16x16x8xf32>
    %60 = tpu.matmul %54, %59, %cst_23 {dimension_numbers = #tpu.dot_dimension_numbers<[2], [1], [1], [2], [0, 0, 0, 1, 1, 2], [0], [0]>} : vector<16x16x4xbf16>, vector<16x4x8xbf16>, vector<16x16x8xf32> -> vector<16x16x8xf32>
    "tpu.trace_stop"() : () -> ()
    %61 = arith.addf %53, %60 : vector<16x16x8xf32>
    %62 = vector.extract_strided_slice %4 {offsets = [2, 1, 0], sizes = [16, 16, 4], strides = [1, 1, 1]} : vector<18x18x4xbf16> to vector<16x16x4xbf16>
    %c7 = arith.constant 7 : index
    %c0_24 = arith.constant 0 : index
    %c0_25 = arith.constant 0 : index
    %63 = vector.load %arg3[%c7, %c0_24, %c0_25] : memref<9x4x8xbf16, #tpu.memory_space<vmem>>, vector<1x4x8xbf16>
    %64 = vector.shape_cast %63 : vector<1x4x8xbf16> to vector<4x8xbf16>
    %65 = vector.shape_cast %64 : vector<4x8xbf16> to vector<1x4x8xbf16>
    %66 = vector.shape_cast %65 : vector<1x4x8xbf16> to vector<1x4x8xbf16>
    %67 = vector.broadcast %66 : vector<1x4x8xbf16> to vector<16x4x8xbf16>
    "tpu.trace_start"() <{level = 10 : i32, message = "hwc,hco->hwo"}> : () -> ()
    %cst_26 = arith.constant dense<0.000000e+00> : vector<16x16x8xf32>
    %68 = tpu.matmul %62, %67, %cst_26 {dimension_numbers = #tpu.dot_dimension_numbers<[2], [1], [1], [2], [0, 0, 0, 1, 1, 2], [0], [0]>} : vector<16x16x4xbf16>, vector<16x4x8xbf16>, vector<16x16x8xf32> -> vector<16x16x8xf32>
    "tpu.trace_stop"() : () -> ()
    %69 = arith.addf %61, %68 : vector<16x16x8xf32>
    %70 = vector.extract_strided_slice %4 {offsets = [2, 2, 0], sizes = [16, 16, 4], strides = [1, 1, 1]} : vector<18x18x4xbf16> to vector<16x16x4xbf16>
    %c8 = arith.constant 8 : index
    %c0_27 = arith.constant 0 : index
    %c0_28 = arith.constant 0 : index
    %71 = vector.load %arg3[%c8, %c0_27, %c0_28] : memref<9x4x8xbf16, #tpu.memory_space<vmem>>, vector<1x4x8xbf16>
    %72 = vector.shape_cast %71 : vector<1x4x8xbf16> to vector<4x8xbf16>
    %73 = vector.shape_cast %72 : vector<4x8xbf16> to vector<1x4x8xbf16>
    %74 = vector.shape_cast %73 : vector<1x4x8xbf16> to vector<1x4x8xbf16>
    %75 = vector.broadcast %74 : vector<1x4x8xbf16> to vector<16x4x8xbf16>
    "tpu.trace_start"() <{level = 10 : i32, message = "hwc,hco->hwo"}> : () -> ()
    %cst_29 = arith.constant dense<0.000000e+00> : vector<16x16x8xf32>
    %76 = tpu.matmul %70, %75, %cst_29 {dimension_numbers = #tpu.dot_dimension_numbers<[2], [1], [1], [2], [0, 0, 0, 1, 1, 2], [0], [0]>} : vector<16x16x4xbf16>, vector<16x4x8xbf16>, vector<16x16x8xf32> -> vector<16x16x8xf32>
    "tpu.trace_stop"() : () -> ()
    %77 = arith.addf %69, %76 : vector<16x16x8xf32>
    %c0_30 = arith.constant 0 : index
    %c0_31 = arith.constant 0 : index
    %c0_32 = arith.constant 0 : index
    %78 = vector.load %arg4[%c0_30, %c0_31, %c0_32] : memref<1x1x8xf32, #tpu.memory_space<vmem>>, vector<1x1x8xf32>
    %79 = vector.broadcast %78 : vector<1x1x8xf32> to vector<16x16x8xf32>
    %80 = arith.addf %77, %79 : vector<16x16x8xf32>
    %cst_33 = arith.constant 0.000000e+00 : f32
    %81 = vector.broadcast %cst_33 : f32 to vector<16x16x8xf32>
    %82 = arith.maximumf %80, %81 : vector<16x16x8xf32>
    %c0_34 = arith.constant 0 : index
    %c0_35 = arith.constant 0 : index
    %c0_36 = arith.constant 0 : index
    %c0_37 = arith.constant 0 : index
    %83 = vector.load %arg5[%c0_34, %c0_35, %c0_36, %c0_37] : memref<1x16x16x8xf32, #tpu.memory_space<vmem>>, vector<1x16x16x8xf32>
    %84 = vector.shape_cast %83 : vector<1x16x16x8xf32> to vector<16x16x8xf32>
    %85 = vector.shape_cast %82 : vector<16x16x8xf32> to vector<1x16x16x8xf32>
    tpu.vector_store %arg5[%c0_34, %c0_35, %c0_36, %c0_37], %85 {strides = array<i32>} : memref<1x16x16x8xf32, #tpu.memory_space<vmem>>, vector<1x16x16x8xf32>,
    return
  }
  func.func @transform_0(%arg0: i32, %arg1: i32) -> (i32, i32, i32, i32) {
    %c0_i32 = arith.constant 0 : i32
    %c0_i32_0 = arith.constant 0 : i32
    %c0_i32_1 = arith.constant 0 : i32
    %c0_i32_2 = arith.constant 0 : i32
    return %arg0, %c0_i32, %c0_i32_0, %c0_i32_1 : i32, i32, i32, i32
  }
  func.func @transform_1(%arg0: i32, %arg1: i32) -> (i32, i32, i32) {
    %c0_i32 = arith.constant 0 : i32
    %c0_i32_0 = arith.constant 0 : i32
    %c0_i32_1 = arith.constant 0 : i32
    %c0_i32_2 = arith.constant 0 : i32
    return %c0_i32, %c0_i32_0, %c0_i32_1 : i32, i32, i32
  }
  func.func @transform_2(%arg0: i32, %arg1: i32) -> (i32, i32, i32) {
    %c0_i32 = arith.constant 0 : i32
    %c0_i32_0 = arith.constant 0 : i32
    %c0_i32_1 = arith.constant 0 : i32
    %c0_i32_2 = arith.constant 0 : i32
    return %c0_i32, %c0_i32_0, %c0_i32_1 : i32, i32, i32
  }
  func.func @transform_3(%arg0: i32, %arg1: i32) -> (i32, i32, i32, i32) {
    %c0_i32 = arith.constant 0 : i32
    %c0_i32_0 = arith.constant 0 : i32
    %c0_i32_1 = arith.constant 0 : i32
    return %arg0, %arg1, %c0_i32, %c0_i32_0 : i32, i32, i32, i32
  }
}

</mosaic_0001>

<llo_original>
// kernel: tpu_custom_call.1
$region0: #{tpu_custom_call.1}
  #allocation0 [shape = 'u32[]', space=smem, size = 0x4, offset = 0x4, fixed_abs, tag = 'smem constant byte address 0x4 - core index']
  #allocation1 [shape = 'u32[72,128]{1,0:T(1,128)}', space=vmem, size = 0x9000, scoped, tag = 'internal scratch']
  %s0 = inlined_call_operand.vmem [shape: bf16[2,18,18,4], index: 0, kind: input, shape index: {}]
  %s1 = inlined_call_operand.vmem [shape: bf16[9,4,8], index: 1, kind: input, shape index: {}]
  %s2 = inlined_call_operand.vmem [shape: f32[1,1,8], index: 2, kind: input, shape index: {}]
  %s3 = inlined_call_operand.vmem [shape: f32[2,16,16,8], index: 3, kind: output, shape index: {}]
  %s4 = sld [smem:[#allocation0]]
  $region45: #{tpu_custom_call.1} parent=0
    _
  %s6 = ssub.s32 1, %s4
  %s7 = scalar_select 0, %s6, %s4
  loop: start=0, step=1, limit=4
  $region2: #{tpu_custom_call.1} parent=0 // loop_pre_header
    _
  $region3: #{tpu_custom_call.1} parent=0 // loop_header
    %s9 = sphi 0, %s13
    %p10 = scmp.ge.s32.totalorder %s9, 4
    %s16 = sphi 0, %s28
    %s17 = sphi 0, %s24
    %s18 = sphi 0, %s16
    %s19 = sphi 0, %s17
    %s20 = sphi 0, %s18
    %s21 = sphi 0, %s19
    %s31 = sphi 0, %s33
    %s34 = sphi 0, %s31
    %s35 = sphi 0, %s34
    %s51 = sphi 0, %s35
    %s55 = sphi 0, %s55
    %s57 = sphi 0, %s55
    %s58 = sphi 0, %s57
    %s72 = sphi 0, %s58
    %s76 = sphi 0, %s76
    %s78 = sphi 0, %s76
    %s79 = sphi 0, %s78
    %s93 = sphi 0, %s79
    %s101 = sphi 0, %s103
    %s104 = sphi 0, %s101
    %s105 = sphi 0, %s104
    %s121 = sphi 0, %s105
  $region4: #{tpu_custom_call.1} parent=0 // loop_header_branch
    %12 = sbr.rel (%p10) target = $region8
  $region5: #{tpu_custom_call.1} parent=0 // loop_body
    %s14 = ssub.s32 %s9, 1
    %s15 = ssub.s32 %s9, 2
    %s22 = sadd.s32 1, %s17
    %p23 = scmp.ge.s32.totalorder %s22, 1
    %s24 = scalar_select %p23, 0, %s22
    %s25 = sadd.s32 1, %s16
    %s26 = scalar_select %p23, %s25, %s16
    %p27 = scmp.ge.s32.totalorder %s26, 2
    %s28 = scalar_select %p27, 0, %s26
    %s29 = ssub.s32 %s16, %s28
    %p30 = scmp.eq.s32.totalorder %s29, 0
    %s32 = sadd.s32 %s31, 1
    %s33 = scalar_select %p30, %s31, %s32
    %p36 = pneg %p30
    %p37 = scmp.eq.s32.totalorder %s9, 1
    %p38 = por %p36, %p37
    %p39 = scmp.ne.s32.totalorder %s31, %s34
    %p40 = scmp.eq.s32.totalorder %s9, 0
    %p41 = por %p39, %p40
    %p42 = scmp.ne.s32.totalorder %s31, %s34
    %p43 = scmp.eq.s32.totalorder %s14, 1
    %p44 = por %p42, %p43
    %p45 = scmp.ne.s32.totalorder %s34, %s35
    %p46 = scmp.eq.s32.totalorder %s14, 0
    %p47 = por %p45, %p46
    %p48 = scmp.ne.s32.totalorder %s34, %s35
    %p49 = scmp.eq.s32.totalorder %s15, 1
    %p50 = por %p48, %p49
    %p52 = scmp.ne.s32.totalorder %s35, %s51
    %p53 = scmp.eq.s32.totalorder %s15, 0
    %p54 = por %p52, %p53
    %s56 = sadd.s32 %s55, 1
    %p59 = scmp.eq.s32.totalorder %s9, 1
    %p60 = scmp.ne.s32.totalorder %s55, %s57
    %p61 = scmp.eq.s32.totalorder %s9, 0
    %p62 = por %p60, %p61
    %p63 = scmp.ne.s32.totalorder %s55, %s57
    %p64 = scmp.eq.s32.totalorder %s14, 1
    %p65 = por %p63, %p64
    %p66 = scmp.ne.s32.totalorder %s57, %s58
    %p67 = scmp.eq.s32.totalorder %s14, 0
    %p68 = por %p66, %p67
    %p69 = scmp.ne.s32.totalorder %s57, %s58
    %p70 = scmp.eq.s32.totalorder %s15, 1
    %p71 = por %p69, %p70
    %p73 = scmp.ne.s32.totalorder %s58, %s72
    %p74 = scmp.eq.s32.totalorder %s15, 0
    %p75 = por %p73, %p74
    %s77 = sadd.s32 %s76, 1
    %p80 = scmp.eq.s32.totalorder %s9, 1
    %p81 = scmp.ne.s32.totalorder %s76, %s78
    %p82 = scmp.eq.s32.totalorder %s9, 0
    %p83 = por %p81, %p82
    %p84 = scmp.ne.s32.totalorder %s76, %s78
    %p85 = scmp.eq.s32.totalorder %s14, 1
    %p86 = por %p84, %p85
    %p87 = scmp.ne.s32.totalorder %s78, %s79
    %p88 = scmp.eq.s32.totalorder %s14, 0
    %p89 = por %p87, %p88
    %p90 = scmp.ne.s32.totalorder %s78, %s79
    %p91 = scmp.eq.s32.totalorder %s15, 1
    %p92 = por %p90, %p91
    %p94 = scmp.ne.s32.totalorder %s79, %s93
    %p95 = scmp.eq.s32.totalorder %s15, 0
    %p96 = por %p94, %p95
    %s97 = ssub.s32 %s16, %s28
    %s98 = ssub.s32 %s17, %s24
    %s99 = sor.u32 %s97, %s98
    %p100 = scmp.eq.s32.totalorder %s99, 0
    %s102 = sadd.s32 %s101, 1
    %s103 = scalar_select %p100, %s101, %s102
    %p106 = pneg %p100
    %p107 = scmp.eq.s32.totalorder %s9, 1
    %p108 = por %p106, %p107
    %p109 = scmp.ne.s32.totalorder %s101, %s104
    %p110 = scmp.eq.s32.totalorder %s9, 0
    %p111 = por %p109, %p110
    %p112 = scmp.ne.s32.totalorder %s101, %s104
    %p113 = scmp.eq.s32.totalorder %s14, 1
    %p114 = por %p112, %p113
    %p115 = scmp.ne.s32.totalorder %s104, %s105
    %p116 = scmp.eq.s32.totalorder %s14, 0
    %p117 = por %p115, %p116
    %p118 = scmp.ne.s32.totalorder %s104, %s105
    %p119 = scmp.eq.s32.totalorder %s15, 1
    %p120 = por %p118, %p119
    %p122 = scmp.ne.s32.totalorder %s105, %s121
    %p123 = scmp.eq.s32.totalorder %s15, 0
    %p124 = por %p122, %p123
    %p125 = scmp.le.s32.totalorder 1, %s9
    %p126 = scmp.lt.s32.totalorder %s9, 3
    %p127 = pnand %p125, %p126
    %p128 = pneg %p127
    // Predicated region
    $region9: #{tpu_custom_call.1} parent=5 // pred_check
      _
    $region10: #{tpu_custom_call.1} parent=5 // pred_check_branch
      %130 = sbr.rel (%p127) target = $region12
    $region11: #{tpu_custom_call.1} parent=5 // pred_region
      %s131 = ssub.s32 %s9, 1
      // Predicated region
      $region13: #{tpu_custom_call.1} parent=11 // pred_check
        %p132 = pneg %p68
      $region14: #{tpu_custom_call.1} parent=11 // pred_check_branch
        %134 = sbr.rel (%p132) target = $region16
      $region15: #{tpu_custom_call.1} parent=11 // pred_region
        _
      $region16: #{tpu_custom_call.1} parent=11 // pred_fallthru
        _
      // Predicated region
      $region17: #{tpu_custom_call.1} parent=11 // pred_check
        %p135 = pneg %p89
      $region18: #{tpu_custom_call.1} parent=11 // pred_check_branch
        %137 = sbr.rel (%p135) target = $region20
      $region19: #{tpu_custom_call.1} parent=11 // pred_region
        _
      $region20: #{tpu_custom_call.1} parent=11 // pred_fallthru
        _
    $region12: #{tpu_custom_call.1} parent=5 // pred_fallthru
      _
    %p138 = scmp.lt.s32.totalorder %s9, 2
    // Predicated region
    $region21: #{tpu_custom_call.1} parent=5 // pred_check
      %p139 = pneg %p138
    $region22: #{tpu_custom_call.1} parent=5 // pred_check_branch
      %141 = sbr.rel (%p139) target = $region24
    $region23: #{tpu_custom_call.1} parent=5 // pred_region
      // Predicated region
      $region25: #{tpu_custom_call.1} parent=23 // pred_check
        %p142 = pneg %p41
      $region26: #{tpu_custom_call.1} parent=23 // pred_check_branch
        %144 = sbr.rel (%p142) target = $region28
      $region27: #{tpu_custom_call.1} parent=23 // pred_region
        %p145 = scmp.lt.s32.totalorder %s16, 1
        %s146 = scalar_select %p145, %s16, 1
        %s147 = smul.addr %s146, 54
        %s148 = smul.addr %s147, 4
        %s149 = scalar_lea.vmem %s0, %s148
      $region28: #{tpu_custom_call.1} parent=23 // pred_fallthru
        _
    $region24: #{tpu_custom_call.1} parent=5 // pred_fallthru
      _
    %p150 = scmp.le.s32.totalorder 1, %s9
    %p151 = scmp.lt.s32.totalorder %s9, 3
    %p152 = pnand %p150, %p151
    %p153 = pneg %p152
    // Predicated region
    $region29: #{tpu_custom_call.1} parent=5 // pred_check
      _
    $region30: #{tpu_custom_call.1} parent=5 // pred_check_branch
      %155 = sbr.rel (%p152) target = $region32
    $region31: #{tpu_custom_call.1} parent=5 // pred_region
      %s156 = ssub.s32 %s9, 1
      %p157 = scmp.lt.s32.totalorder %s18, 1
      %s158 = scalar_select %p157, %s18, 1
      %s159 = smul.addr %s158, 54
      %s160 = smul.addr %s159, 4
      %s161 = scalar_lea.vmem %s0, %s160
      %p162 = pneg %p47
      %p163 = pneg %p44
      %p164 = pneg %p68
      %p165 = pneg %p65
      %p166 = pneg %p89
      %p167 = pneg %p86
      %p168 = pneg %p117
      %p169 = pneg %p114
      %s170 = smul.u32 16, %s19
      %p171 = scmp.lt.s32.totalorder %s18, 1
      %s172 = scalar_select %p171, %s18, 1
      %p173 = scmp.lt.s32.totalorder %s170, 15
      %s174 = scalar_select %p173, %s170, 15
      %s175 = smul.addr %s174, 2
      %s176 = smul.addr %s172, 32
      %s177 = sadd.s32 %s175, %s176
      %s178 = smul.addr %s177, 8
      %s179 = scalar_lea.vmem %s3, %s178
      %p180 = scmp.lt.s32.totalorder %s18, 1
      %s181 = scalar_select %p180, %s18, 1
      %s182 = smul.addr %s181, 54
      %s183 = smul.addr %s182, 4
      %s184 = scalar_lea.vmem %s0, %s183
      %s185 = smul.u32 16, %s19
      %p186 = scmp.lt.s32.totalorder %s18, 1
      %s187 = scalar_select %p186, %s18, 1
      %p188 = scmp.lt.s32.totalorder %s185, 15
      %s189 = scalar_select %p188, %s185, 15
      %s190 = smul.addr %s189, 2
      %s191 = smul.addr %s187, 32
      %s192 = sadd.s32 %s190, %s191
      %s193 = smul.addr %s192, 8
      %s194 = scalar_lea.vmem %s3, %s193
      %s195 = smul.u32 16, %s19
      %s197 = smul.u32 %s19, 16
      %s198 = smul.u32 %s197, 3
      %s199 = smul.addr %s198, 4
      %s200 = scalar_lea.vmem %s184, %s199
      %v201 = vld [vmem:[%s200] sm:$0xf]
      %v202 = vld [vmem:[%s200 + $0x4] sm:$0xf]
      %v203 = vld [vmem:[%s200 + $0x8] sm:$0x1]
      %v204 = vld [vmem:[%s200 + $0xc] sm:$0xf]
      %v205 = vld [vmem:[%s200 + $0x10] sm:$0xf]
      %v206 = vld [vmem:[%s200 + $0x14] sm:$0x1]
      %v207 = vld [vmem:[%s200 + $0x18] sm:$0xf]
      %v208 = vld [vmem:[%s200 + $0x1c] sm:$0xf]
      %v209 = vld [vmem:[%s200 + $0x20] sm:$0x1]
      %v210 = vld [vmem:[%s200 + $0x24] sm:$0xf]
      %v211 = vld [vmem:[%s200 + $0x28] sm:$0xf]
      %v212 = vld [vmem:[%s200 + $0x2c] sm:$0x1]
      %v213 = vld [vmem:[%s200 + $0x30] sm:$0xf]
      %v214 = vld [vmem:[%s200 + $0x34] sm:$0xf]
      %v215 = vld [vmem:[%s200 + $0x38] sm:$0x1]
      %v216 = vld [vmem:[%s200 + $0x3c] sm:$0xf]
      %v217 = vld [vmem:[%s200 + $0x40] sm:$0xf]
      %v218 = vld [vmem:[%s200 + $0x44] sm:$0x1]
      %v219 = vld [vmem:[%s200 + $0x48] sm:$0xf]
      %v220 = vld [vmem:[%s200 + $0x4c] sm:$0xf]
      %v221 = vld [vmem:[%s200 + $0x50] sm:$0x1]
      %v222 = vld [vmem:[%s200 + $0x54] sm:$0xf]
      %v223 = vld [vmem:[%s200 + $0x58] sm:$0xf]
      %v224 = vld [vmem:[%s200 + $0x5c] sm:$0x1]
      %v225 = vld [vmem:[%s200 + $0x60] sm:$0xf]
      %v226 = vld [vmem:[%s200 + $0x64] sm:$0xf]
      %v227 = vld [vmem:[%s200 + $0x68] sm:$0x1]
      %v228 = vld [vmem:[%s200 + $0x6c] sm:$0xf]
      %v229 = vld [vmem:[%s200 + $0x70] sm:$0xf]
      %v230 = vld [vmem:[%s200 + $0x74] sm:$0x1]
      %v231 = vld [vmem:[%s200 + $0x78] sm:$0xf]
      %v232 = vld [vmem:[%s200 + $0x7c] sm:$0xf]
      %v233 = vld [vmem:[%s200 + $0x80] sm:$0x1]
      %v234 = vld [vmem:[%s200 + $0x84] sm:$0xf]
      %v235 = vld [vmem:[%s200 + $0x88] sm:$0xf]
      %v236 = vld [vmem:[%s200 + $0x8c] sm:$0x1]
      %v237 = vld [vmem:[%s200 + $0x90] sm:$0xf]
      %v238 = vld [vmem:[%s200 + $0x94] sm:$0xf]
      %v239 = vld [vmem:[%s200 + $0x98] sm:$0x1]
      %v240 = vld [vmem:[%s200 + $0x9c] sm:$0xf]
      %v241 = vld [vmem:[%s200 + $0xa0] sm:$0xf]
      %v242 = vld [vmem:[%s200 + $0xa4] sm:$0x1]
      %v243 = vld [vmem:[%s200 + $0xa8] sm:$0xf]
      %v244 = vld [vmem:[%s200 + $0xac] sm:$0xf]
      %v245 = vld [vmem:[%s200 + $0xb0] sm:$0x1]
      %v246 = vld [vmem:[%s200 + $0xb4] sm:$0xf]
      %v247 = vld [vmem:[%s200 + $0xb8] sm:$0xf]
      %v248 = vld [vmem:[%s200 + $0xbc] sm:$0x1]
      %v249 = vld [vmem:[%s200 + $0xc0] sm:$0xf]
      %v250 = vld [vmem:[%s200 + $0xc4] sm:$0xf]
      %v251 = vld [vmem:[%s200 + $0xc8] sm:$0x1]
      %v252 = vld [vmem:[%s200 + $0xcc] sm:$0xf]
      %v253 = vld [vmem:[%s200 + $0xd0] sm:$0xf]
      %v254 = vld [vmem:[%s200 + $0xd4] sm:$0x1]
      %v255 = vld [vmem:[%s1] sm:$0x3]
      %s256 = scalar_lea.vmem %s1, 2
      %v257 = vld [vmem:[%s256] sm:$0x3]
      %v261 = vunpack.c.l.b16 %v201
      %v262 = vunpack.c.l.b16 %v202
      %v263 = vunpack.c.l.b16 %v203
      %v264 = vpack.c.b16 %v262, %v261
      %v265 = vpack.c.b16 %v263, %v263
      %vm266 = vsmask.f32 7424
      %v268 = vshrl.u32 %v264, 16
      %v270 = vshll.u32 %v264, 16
      %v272 = vrot.slane %v270, 1
      %v273 = vor.u32 %v268, %v272
      %v275 = vshll.u32 %v265, 16
      %v277 = vrot.slane %v275, 1
      %v278 = vsel %vm266, %v273, %v277
      %vm279 = vcmask 31744
      %v281 = vsel %vm279, %v278, 0
      %vm283 = vcmask 1041408
      %v285 = vsel %vm283, %v257, 0
      %287 = vmatpush.bf16.msra.mxu0 0
      %288 = vmatpush.bf16.msra.mxu0 0
      %289 = vmatpush.bf16.msra.mxu0 0
      %290 = vmatpush.bf16.msra.mxu0 0
      %291 = vmatpush.bf16.msra.mxu0 0
      %292 = vmatpush.bf16.msra.mxu0 0
      %293 = vmatpush.bf16.msra.mxu0 0
      %294 = vmatpush.bf16.msra.mxu0 %v285
      %295 = vmatmul.bf16.gmra.mxu0 %v281
      %v296 = vpop.f32.mrf.mxu0
      %v297 = vadd.f32 0.0, %v296
      %v298 = vpop.f32.mrf.mxu0
      %v299 = vadd.f32 0.0, %v298
      %300 = vdwg.mxu0
      %v304 = vunpack.c.l.b16 %v204
      %v305 = vunpack.c.l.b16 %v205
      %v306 = vunpack.c.l.b16 %v206
      %v307 = vpack.c.b16 %v305, %v304
      %v308 = vpack.c.b16 %v306, %v306
      %v310 = vshrl.u32 %v307, 16
      %v312 = vshll.u32 %v307, 16
      %v314 = vrot.slane %v312, 1
      %v315 = vor.u32 %v310, %v314
      %v317 = vshll.u32 %v308, 16
      %v319 = vrot.slane %v317, 1
      %v320 = vsel %vm266, %v315, %v319
      %v322 = vsel %vm279, %v320, 0
      %324 = vmatpush.bf16.msra.mxu0 0
      %325 = vmatpush.bf16.msra.mxu0 0
      %326 = vmatpush.bf16.msra.mxu0 0
      %327 = vmatpush.bf16.msra.mxu0 0
      %328 = vmatpush.bf16.msra.mxu0 0
      %329 = vmatpush.bf16.msra.mxu0 0
      %330 = vmatpush.bf16.msra.mxu0 0
      %331 = vmatpush.bf16.msra.mxu0 %v285
      %332 = vmatmul.bf16.gmra.mxu0 %v322
      %v333 = vpop.f32.mrf.mxu0
      %v334 = vadd.f32 0.0, %v333
      %v335 = vpop.f32.mrf.mxu0
      %v336 = vadd.f32 0.0, %v335
      %337 = vdwg.mxu0
      %v341 = vunpack.c.l.b16 %v207
      %v342 = vunpack.c.l.b16 %v208
      %v343 = vunpack.c.l.b16 %v209
      %v344 = vpack.c.b16 %v342, %v341
      %v345 = vpack.c.b16 %v343, %v343
      %v347 = vshrl.u32 %v344, 16
      %v349 = vshll.u32 %v344, 16
      %v351 = vrot.slane %v349, 1
      %v352 = vor.u32 %v347, %v351
      %v354 = vshll.u32 %v345, 16
      %v356 = vrot.slane %v354, 1
      %v357 = vsel %vm266, %v352, %v356
      %v359 = vsel %vm279, %v357, 0
      %361 = vmatpush.bf16.msra.mxu0 0
      %362 = vmatpush.bf16.msra.mxu0 0
      %363 = vmatpush.bf16.msra.mxu0 0
      %364 = vmatpush.bf16.msra.mxu0 0
      %365 = vmatpush.bf16.msra.mxu0 0
      %366 = vmatpush.bf16.msra.mxu0 0
      %367 = vmatpush.bf16.msra.mxu0 0
      %368 = vmatpush.bf16.msra.mxu0 %v285
      %369 = vmatmul.bf16.gmra.mxu0 %v359
      %v370 = vpop.f32.mrf.mxu0
      %v371 = vadd.f32 0.0, %v370
      %v372 = vpop.f32.mrf.mxu0
      %v373 = vadd.f32 0.0, %v372
      %374 = vdwg.mxu0
      %v378 = vunpack.c.l.b16 %v210
      %v379 = vunpack.c.l.b16 %v211
      %v380 = vunpack.c.l.b16 %v212
      %v381 = vpack.c.b16 %v379, %v378
      %v382 = vpack.c.b16 %v380, %v380
      %v384 = vshrl.u32 %v381, 16
      %v386 = vshll.u32 %v381, 16
      %v388 = vrot.slane %v386, 1
      %v389 = vor.u32 %v384, %v388
      %v391 = vshll.u32 %v382, 16
      %v393 = vrot.slane %v391, 1
      %v394 = vsel %vm266, %v389, %v393
      %v396 = vsel %vm279, %v394, 0
      %398 = vmatpush.bf16.msra.mxu0 0
      %399 = vmatpush.bf16.msra.mxu0 0
      %400 = vmatpush.bf16.msra.mxu0 0
      %401 = vmatpush.bf16.msra.mxu0 0
      %402 = vmatpush.bf16.msra.mxu0 0
      %403 = vmatpush.bf16.msra.mxu0 0
      %404 = vmatpush.bf16.msra.mxu0 0
      %405 = vmatpush.bf16.msra.mxu0 %v285
      %406 = vmatmul.bf16.gmra.mxu0 %v396
      %v407 = vpop.f32.mrf.mxu0
      %v408 = vadd.f32 0.0, %v407
      %v409 = vpop.f32.mrf.mxu0
      %v410 = vadd.f32 0.0, %v409
      %411 = vdwg.mxu0
      %v415 = vunpack.c.l.b16 %v213
      %v416 = vunpack.c.l.b16 %v214
      %v417 = vunpack.c.l.b16 %v215
      %v418 = vpack.c.b16 %v416, %v415
      %v419 = vpack.c.b16 %v417, %v417
      %v421 = vshrl.u32 %v418, 16
      %v423 = vshll.u32 %v418, 16
      %v425 = vrot.slane %v423, 1
      %v426 = vor.u32 %v421, %v425
      %v428 = vshll.u32 %v419, 16
      %v430 = vrot.slane %v428, 1
      %v431 = vsel %vm266, %v426, %v430
      %v433 = vsel %vm279, %v431, 0
      %435 = vmatpush.bf16.msra.mxu0 0
      %436 = vmatpush.bf16.msra.mxu0 0
      %437 = vmatpush.bf16.msra.mxu0 0
      %438 = vmatpush.bf16.msra.mxu0 0
      %439 = vmatpush.bf16.msra.mxu0 0
      %440 = vmatpush.bf16.msra.mxu0 0
      %441 = vmatpush.bf16.msra.mxu0 0
      %442 = vmatpush.bf16.msra.mxu0 %v285
      %443 = vmatmul.bf16.gmra.mxu0 %v433
      %v444 = vpop.f32.mrf.mxu0
      %v445 = vadd.f32 0.0, %v444
      %v446 = vpop.f32.mrf.mxu0
      %v447 = vadd.f32 0.0, %v446
      %448 = vdwg.mxu0
      %v452 = vunpack.c.l.b16 %v216
      %v453 = vunpack.c.l.b16 %v217
      %v454 = vunpack.c.l.b16 %v218
      %v455 = vpack.c.b16 %v453, %v452
      %v456 = vpack.c.b16 %v454, %v454
      %v458 = vshrl.u32 %v455, 16
      %v460 = vshll.u32 %v455, 16
      %v462 = vrot.slane %v460, 1
      %v463 = vor.u32 %v458, %v462
      %v465 = vshll.u32 %v456, 16
      %v467 = vrot.slane %v465, 1
      %v468 = vsel %vm266, %v463, %v467
      %v470 = vsel %vm279, %v468, 0
      %472 = vmatpush.bf16.msra.mxu0 0
      %473 = vmatpush.bf16.msra.mxu0 0
      %474 = vmatpush.bf16.msra.mxu0 0
      %475 = vmatpush.bf16.msra.mxu0 0
      %476 = vmatpush.bf16.msra.mxu0 0
      %477 = vmatpush.bf16.msra.mxu0 0
      %478 = vmatpush.bf16.msra.mxu0 0
      %479 = vmatpush.bf16.msra.mxu0 %v285
      %480 = vmatmul.bf16.gmra.mxu0 %v470
      %v481 = vpop.f32.mrf.mxu0
      %v482 = vadd.f32 0.0, %v481
      %v483 = vpop.f32.mrf.mxu0
      %v484 = vadd.f32 0.0, %v483
      %485 = vdwg.mxu0
      %v489 = vunpack.c.l.b16 %v219
      %v490 = vunpack.c.l.b16 %v220
      %v491 = vunpack.c.l.b16 %v221
      %v492 = vpack.c.b16 %v490, %v489
      %v493 = vpack.c.b16 %v491, %v491
      %v495 = vshrl.u32 %v492, 16
      %v497 = vshll.u32 %v492, 16
      %v499 = vrot.slane %v497, 1
      %v500 = vor.u32 %v495, %v499
      %v502 = vshll.u32 %v493, 16
      %v504 = vrot.slane %v502, 1
      %v505 = vsel %vm266, %v500, %v504
      %v507 = vsel %vm279, %v505, 0
      %509 = vmatpush.bf16.msra.mxu0 0
      %510 = vmatpush.bf16.msra.mxu0 0
      %511 = vmatpush.bf16.msra.mxu0 0
      %512 = vmatpush.bf16.msra.mxu0 0
      %513 = vmatpush.bf16.msra.mxu0 0
      %514 = vmatpush.bf16.msra.mxu0 0
      %515 = vmatpush.bf16.msra.mxu0 0
      %516 = vmatpush.bf16.msra.mxu0 %v285
      %517 = vmatmul.bf16.gmra.mxu0 %v507
      %v518 = vpop.f32.mrf.mxu0
      %v519 = vadd.f32 0.0, %v518
      %v520 = vpop.f32.mrf.mxu0
      %v521 = vadd.f32 0.0, %v520
      %522 = vdwg.mxu0
      %v526 = vunpack.c.l.b16 %v222
      %v527 = vunpack.c.l.b16 %v223
      %v528 = vunpack.c.l.b16 %v224
      %v529 = vpack.c.b16 %v527, %v526
      %v530 = vpack.c.b16 %v528, %v528
      %v532 = vshrl.u32 %v529, 16
      %v534 = vshll.u32 %v529, 16
      %v536 = vrot.slane %v534, 1
      %v537 = vor.u32 %v532, %v536
      %v539 = vshll.u32 %v530, 16
      %v541 = vrot.slane %v539, 1
      %v542 = vsel %vm266, %v537, %v541
      %v544 = vsel %vm279, %v542, 0
      %546 = vmatpush.bf16.msra.mxu0 0
      %547 = vmatpush.bf16.msra.mxu0 0
      %548 = vmatpush.bf16.msra.mxu0 0
      %549 = vmatpush.bf16.msra.mxu0 0
      %550 = vmatpush.bf16.msra.mxu0 0
      %551 = vmatpush.bf16.msra.mxu0 0
      %552 = vmatpush.bf16.msra.mxu0 0
      %553 = vmatpush.bf16.msra.mxu0 %v285
      %554 = vmatmul.bf16.gmra.mxu0 %v544
      %v555 = vpop.f32.mrf.mxu0
      %v556 = vadd.f32 0.0, %v555
      %v557 = vpop.f32.mrf.mxu0
      %v558 = vadd.f32 0.0, %v557
      %559 = vdwg.mxu0
      %v563 = vunpack.c.l.b16 %v225
      %v564 = vunpack.c.l.b16 %v226
      %v565 = vunpack.c.l.b16 %v227
      %v566 = vpack.c.b16 %v564, %v563
      %v567 = vpack.c.b16 %v565, %v565
      %v569 = vshrl.u32 %v566, 16
      %v571 = vshll.u32 %v566, 16
      %v573 = vrot.slane %v571, 1
      %v574 = vor.u32 %v569, %v573
      %v576 = vshll.u32 %v567, 16
      %v578 = vrot.slane %v576, 1
      %v579 = vsel %vm266, %v574, %v578
      %v581 = vsel %vm279, %v579, 0
      %583 = vmatpush.bf16.msra.mxu0 0
      %584 = vmatpush.bf16.msra.mxu0 0
      %585 = vmatpush.bf16.msra.mxu0 0
      %586 = vmatpush.bf16.msra.mxu0 0
      %587 = vmatpush.bf16.msra.mxu0 0
      %588 = vmatpush.bf16.msra.mxu0 0
      %589 = vmatpush.bf16.msra.mxu0 0
      %590 = vmatpush.bf16.msra.mxu0 %v285
      %591 = vmatmul.bf16.gmra.mxu0 %v581
      %v592 = vpop.f32.mrf.mxu0
      %v593 = vadd.f32 0.0, %v592
      %v594 = vpop.f32.mrf.mxu0
      %v595 = vadd.f32 0.0, %v594
      %596 = vdwg.mxu0
      %v600 = vunpack.c.l.b16 %v228
      %v601 = vunpack.c.l.b16 %v229
      %v602 = vunpack.c.l.b16 %v230
      %v603 = vpack.c.b16 %v601, %v600
      %v604 = vpack.c.b16 %v602, %v602
      %v606 = vshrl.u32 %v603, 16
      %v608 = vshll.u32 %v603, 16
      %v610 = vrot.slane %v608, 1
      %v611 = vor.u32 %v606, %v610
      %v613 = vshll.u32 %v604, 16
      %v615 = vrot.slane %v613, 1
      %v616 = vsel %vm266, %v611, %v615
      %v618 = vsel %vm279, %v616, 0
      %620 = vmatpush.bf16.msra.mxu0 0
      %621 = vmatpush.bf16.msra.mxu0 0
      %622 = vmatpush.bf16.msra.mxu0 0
      %623 = vmatpush.bf16.msra.mxu0 0
      %624 = vmatpush.bf16.msra.mxu0 0
      %625 = vmatpush.bf16.msra.mxu0 0
      %626 = vmatpush.bf16.msra.mxu0 0
      %627 = vmatpush.bf16.msra.mxu0 %v285
      %628 = vmatmul.bf16.gmra.mxu0 %v618
      %v629 = vpop.f32.mrf.mxu0
      %v630 = vadd.f32 0.0, %v629
      %v631 = vpop.f32.mrf.mxu0
      %v632 = vadd.f32 0.0, %v631
      %633 = vdwg.mxu0
      %v637 = vunpack.c.l.b16 %v231
      %v638 = vunpack.c.l.b16 %v232
      %v639 = vunpack.c.l.b16 %v233
      %v640 = vpack.c.b16 %v638, %v637
      %v641 = vpack.c.b16 %v639, %v639
      %v643 = vshrl.u32 %v640, 16
      %v645 = vshll.u32 %v640, 16
      %v647 = vrot.slane %v645, 1
      %v648 = vor.u32 %v643, %v647
      %v650 = vshll.u32 %v641, 16
      %v652 = vrot.slane %v650, 1
      %v653 = vsel %vm266, %v648, %v652
      %v655 = vsel %vm279, %v653, 0
      %657 = vmatpush.bf16.msra.mxu0 0
      %658 = vmatpush.bf16.msra.mxu0 0
      %659 = vmatpush.bf16.msra.mxu0 0
      %660 = vmatpush.bf16.msra.mxu0 0
      %661 = vmatpush.bf16.msra.mxu0 0
      %662 = vmatpush.bf16.msra.mxu0 0
      %663 = vmatpush.bf16.msra.mxu0 0
      %664 = vmatpush.bf16.msra.mxu0 %v285
      %665 = vmatmul.bf16.gmra.mxu0 %v655
      %v666 = vpop.f32.mrf.mxu0
      %v667 = vadd.f32 0.0, %v666
      %v668 = vpop.f32.mrf.mxu0
      %v669 = vadd.f32 0.0, %v668
      %670 = vdwg.mxu0
      %v674 = vunpack.c.l.b16 %v234
      %v675 = vunpack.c.l.b16 %v235
      %v676 = vunpack.c.l.b16 %v236
      %v677 = vpack.c.b16 %v675, %v674
      %v678 = vpack.c.b16 %v676, %v676
      %v680 = vshrl.u32 %v677, 16
      %v682 = vshll.u32 %v677, 16
      %v684 = vrot.slane %v682, 1
      %v685 = vor.u32 %v680, %v684
      %v687 = vshll.u32 %v678, 16
      %v689 = vrot.slane %v687, 1
      %v690 = vsel %vm266, %v685, %v689
      %v692 = vsel %vm279, %v690, 0
      %694 = vmatpush.bf16.msra.mxu0 0
      %695 = vmatpush.bf16.msra.mxu0 0
      %696 = vmatpush.bf16.msra.mxu0 0
      %697 = vmatpush.bf16.msra.mxu0 0
      %698 = vmatpush.bf16.msra.mxu0 0
      %699 = vmatpush.bf16.msra.mxu0 0
      %700 = vmatpush.bf16.msra.mxu0 0
      %701 = vmatpush.bf16.msra.mxu0 %v285
      %702 = vmatmul.bf16.gmra.mxu0 %v692
      %v703 = vpop.f32.mrf.mxu0
      %v704 = vadd.f32 0.0, %v703
      %v705 = vpop.f32.mrf.mxu0
      %v706 = vadd.f32 0.0, %v705
      %707 = vdwg.mxu0
      %v711 = vunpack.c.l.b16 %v237
      %v712 = vunpack.c.l.b16 %v238
      %v713 = vunpack.c.l.b16 %v239
      %v714 = vpack.c.b16 %v712, %v711
      %v715 = vpack.c.b16 %v713, %v713
      %v717 = vshrl.u32 %v714, 16
      %v719 = vshll.u32 %v714, 16
      %v721 = vrot.slane %v719, 1
      %v722 = vor.u32 %v717, %v721
      %v724 = vshll.u32 %v715, 16
      %v726 = vrot.slane %v724, 1
      %v727 = vsel %vm266, %v722, %v726
      %v729 = vsel %vm279, %v727, 0
      %731 = vmatpush.bf16.msra.mxu0 0
      %732 = vmatpush.bf16.msra.mxu0 0
      %733 = vmatpush.bf16.msra.mxu0 0
      %734 = vmatpush.bf16.msra.mxu0 0
      %735 = vmatpush.bf16.msra.mxu0 0
      %736 = vmatpush.bf16.msra.mxu0 0
      %737 = vmatpush.bf16.msra.mxu0 0
      %738 = vmatpush.bf16.msra.mxu0 %v285
      %739 = vmatmul.bf16.gmra.mxu0 %v729
      %v740 = vpop.f32.mrf.mxu0
      %v741 = vadd.f32 0.0, %v740
      %v742 = vpop.f32.mrf.mxu0
      %v743 = vadd.f32 0.0, %v742
      %744 = vdwg.mxu0
      %v748 = vunpack.c.l.b16 %v240
      %v749 = vunpack.c.l.b16 %v241
      %v750 = vunpack.c.l.b16 %v242
      %v751 = vpack.c.b16 %v749, %v748
      %v752 = vpack.c.b16 %v750, %v750
      %v754 = vshrl.u32 %v751, 16
      %v756 = vshll.u32 %v751, 16
      %v758 = vrot.slane %v756, 1
      %v759 = vor.u32 %v754, %v758
      %v761 = vshll.u32 %v752, 16
      %v763 = vrot.slane %v761, 1
      %v764 = vsel %vm266, %v759, %v763
      %v766 = vsel %vm279, %v764, 0
      %768 = vmatpush.bf16.msra.mxu0 0
      %769 = vmatpush.bf16.msra.mxu0 0
      %770 = vmatpush.bf16.msra.mxu0 0
      %771 = vmatpush.bf16.msra.mxu0 0
      %772 = vmatpush.bf16.msra.mxu0 0
      %773 = vmatpush.bf16.msra.mxu0 0
      %774 = vmatpush.bf16.msra.mxu0 0
      %775 = vmatpush.bf16.msra.mxu0 %v285
      %776 = vmatmul.bf16.gmra.mxu0 %v766
      %v777 = vpop.f32.mrf.mxu0
      %v778 = vadd.f32 0.0, %v777
      %v779 = vpop.f32.mrf.mxu0
      %v780 = vadd.f32 0.0, %v779
      %781 = vdwg.mxu0
      %v785 = vunpack.c.l.b16 %v243
      %v786 = vunpack.c.l.b16 %v244
      %v787 = vunpack.c.l.b16 %v245
      %v788 = vpack.c.b16 %v786, %v785
      %v789 = vpack.c.b16 %v787, %v787
      %v791 = vshrl.u32 %v788, 16
      %v793 = vshll.u32 %v788, 16
      %v795 = vrot.slane %v793, 1
      %v796 = vor.u32 %v791, %v795
      %v798 = vshll.u32 %v789, 16
      %v800 = vrot.slane %v798, 1
      %v801 = vsel %vm266, %v796, %v800
      %v803 = vsel %vm279, %v801, 0
      %805 = vmatpush.bf16.msra.mxu0 0
      %806 = vmatpush.bf16.msra.mxu0 0
      %807 = vmatpush.bf16.msra.mxu0 0
      %808 = vmatpush.bf16.msra.mxu0 0
      %809 = vmatpush.bf16.msra.mxu0 0
      %810 = vmatpush.bf16.msra.mxu0 0
      %811 = vmatpush.bf16.msra.mxu0 0
      %812 = vmatpush.bf16.msra.mxu0 %v285
      %813 = vmatmul.bf16.gmra.mxu0 %v803
      %v814 = vpop.f32.mrf.mxu0
      %v815 = vadd.f32 0.0, %v814
      %v816 = vpop.f32.mrf.mxu0
      %v817 = vadd.f32 0.0, %v816
      %818 = vdwg.mxu0
      %v822 = vunpack.c.l.b16 %v246
      %v823 = vunpack.c.l.b16 %v247
      %v824 = vunpack.c.l.b16 %v248
      %v825 = vpack.c.b16 %v823, %v822
      %v826 = vpack.c.b16 %v824, %v824
      %v828 = vshrl.u32 %v825, 16
      %v830 = vshll.u32 %v825, 16
      %v832 = vrot.slane %v830, 1
      %v833 = vor.u32 %v828, %v832
      %v835 = vshll.u32 %v826, 16
      %v837 = vrot.slane %v835, 1
      %v838 = vsel %vm266, %v833, %v837
      %v840 = vsel %vm279, %v838, 0
      %842 = vmatpush.bf16.msra.mxu0 0
      %843 = vmatpush.bf16.msra.mxu0 0
      %844 = vmatpush.bf16.msra.mxu0 0
      %845 = vmatpush.bf16.msra.mxu0 0
      %846 = vmatpush.bf16.msra.mxu0 0
      %847 = vmatpush.bf16.msra.mxu0 0
      %848 = vmatpush.bf16.msra.mxu0 0
      %849 = vmatpush.bf16.msra.mxu0 %v285
      %850 = vmatmul.bf16.gmra.mxu0 %v840
      %v851 = vpop.f32.mrf.mxu0
      %v852 = vadd.f32 0.0, %v851
      %v853 = vpop.f32.mrf.mxu0
      %v854 = vadd.f32 0.0, %v853
      %855 = vdwg.mxu0
      %v856 = vsel %vm279, %v264, 0
      %v859 = vsel %vm283, %v255, 0
      %861 = vmatpush.bf16.msra.mxu0 0
      %862 = vmatpush.bf16.msra.mxu0 0
      %863 = vmatpush.bf16.msra.mxu0 0
      %864 = vmatpush.bf16.msra.mxu0 0
      %865 = vmatpush.bf16.msra.mxu0 0
      %866 = vmatpush.bf16.msra.mxu0 0
      %867 = vmatpush.bf16.msra.mxu0 0
      %868 = vmatpush.bf16.msra.mxu0 %v859
      %869 = vmatmul.bf16.gmra.mxu0 %v856
      %v870 = vpop.f32.mrf.mxu0
      %v871 = vadd.f32 %v297, %v870
      %v872 = vpop.f32.mrf.mxu0
      %v873 = vadd.f32 %v299, %v872
      %874 = vdwg.mxu0
      %v875 = vsel %vm279, %v307, 0
      %877 = vmatpush.bf16.msra.mxu0 0
      %878 = vmatpush.bf16.msra.mxu0 0
      %879 = vmatpush.bf16.msra.mxu0 0
      %880 = vmatpush.bf16.msra.mxu0 0
      %881 = vmatpush.bf16.msra.mxu0 0
      %882 = vmatpush.bf16.msra.mxu0 0
      %883 = vmatpush.bf16.msra.mxu0 0
      %884 = vmatpush.bf16.msra.mxu0 %v859
      %885 = vmatmul.bf16.gmra.mxu0 %v875
      %v886 = vpop.f32.mrf.mxu0
      %v887 = vadd.f32 %v334, %v886
      %v888 = vpop.f32.mrf.mxu0
      %v889 = vadd.f32 %v336, %v888
      %890 = vdwg.mxu0
      %v891 = vsel %vm279, %v344, 0
      %893 = vmatpush.bf16.msra.mxu0 0
      %894 = vmatpush.bf16.msra.mxu0 0
      %895 = vmatpush.bf16.msra.mxu0 0
      %896 = vmatpush.bf16.msra.mxu0 0
      %897 = vmatpush.bf16.msra.mxu0 0
      %898 = vmatpush.bf16.msra.mxu0 0
      %899 = vmatpush.bf16.msra.mxu0 0
      %900 = vmatpush.bf16.msra.mxu0 %v859
      %901 = vmatmul.bf16.gmra.mxu0 %v891
      %v902 = vpop.f32.mrf.mxu0
      %v903 = vadd.f32 %v371, %v902
      %v904 = vpop.f32.mrf.mxu0
      %v905 = vadd.f32 %v373, %v904
      %906 = vdwg.mxu0
      %v907 = vsel %vm279, %v381, 0
      %909 = vmatpush.bf16.msra.mxu0 0
      %910 = vmatpush.bf16.msra.mxu0 0
      %911 = vmatpush.bf16.msra.mxu0 0
      %912 = vmatpush.bf16.msra.mxu0 0
      %913 = vmatpush.bf16.msra.mxu0 0
      %914 = vmatpush.bf16.msra.mxu0 0
      %915 = vmatpush.bf16.msra.mxu0 0
      %916 = vmatpush.bf16.msra.mxu0 %v859
      %917 = vmatmul.bf16.gmra.mxu0 %v907
      %v918 = vpop.f32.mrf.mxu0
      %v919 = vadd.f32 %v408, %v918
      %v920 = vpop.f32.mrf.mxu0
      %v921 = vadd.f32 %v410, %v920
      %922 = vdwg.mxu0
      %v923 = vsel %vm279, %v418, 0
      %925 = vmatpush.bf16.msra.mxu0 0
      %926 = vmatpush.bf16.msra.mxu0 0
      %927 = vmatpush.bf16.msra.mxu0 0
      %928 = vmatpush.bf16.msra.mxu0 0
      %929 = vmatpush.bf16.msra.mxu0 0
      %930 = vmatpush.bf16.msra.mxu0 0
      %931 = vmatpush.bf16.msra.mxu0 0
      %932 = vmatpush.bf16.msra.mxu0 %v859
      %933 = vmatmul.bf16.gmra.mxu0 %v923
      %v934 = vpop.f32.mrf.mxu0
      %v935 = vadd.f32 %v445, %v934
      %v936 = vpop.f32.mrf.mxu0
      %v937 = vadd.f32 %v447, %v936
      %938 = vdwg.mxu0
      %v939 = vsel %vm279, %v455, 0
      %941 = vmatpush.bf16.msra.mxu0 0
      %942 = vmatpush.bf16.msra.mxu0 0
      %943 = vmatpush.bf16.msra.mxu0 0
      %944 = vmatpush.bf16.msra.mxu0 0
      %945 = vmatpush.bf16.msra.mxu0 0
      %946 = vmatpush.bf16.msra.mxu0 0
      %947 = vmatpush.bf16.msra.mxu0 0
      %948 = vmatpush.bf16.msra.mxu0 %v859
      %949 = vmatmul.bf16.gmra.mxu0 %v939
      %v950 = vpop.f32.mrf.mxu0
      %v951 = vadd.f32 %v482, %v950
      %v952 = vpop.f32.mrf.mxu0
      %v953 = vadd.f32 %v484, %v952
      %954 = vdwg.mxu0
      %v955 = vsel %vm279, %v492, 0
      %957 = vmatpush.bf16.msra.mxu0 0
      %958 = vmatpush.bf16.msra.mxu0 0
      %959 = vmatpush.bf16.msra.mxu0 0
      %960 = vmatpush.bf16.msra.mxu0 0
      %961 = vmatpush.bf16.msra.mxu0 0
      %962 = vmatpush.bf16.msra.mxu0 0
      %963 = vmatpush.bf16.msra.mxu0 0
      %964 = vmatpush.bf16.msra.mxu0 %v859
      %965 = vmatmul.bf16.gmra.mxu0 %v955
      %v966 = vpop.f32.mrf.mxu0
      %v967 = vadd.f32 %v519, %v966
      %v968 = vpop.f32.mrf.mxu0
      %v969 = vadd.f32 %v521, %v968
      %970 = vdwg.mxu0
      %v971 = vsel %vm279, %v529, 0
      %973 = vmatpush.bf16.msra.mxu0 0
      %974 = vmatpush.bf16.msra.mxu0 0
      %975 = vmatpush.bf16.msra.mxu0 0
      %976 = vmatpush.bf16.msra.mxu0 0
      %977 = vmatpush.bf16.msra.mxu0 0
      %978 = vmatpush.bf16.msra.mxu0 0
      %979 = vmatpush.bf16.msra.mxu0 0
      %980 = vmatpush.bf16.msra.mxu0 %v859
      %981 = vmatmul.bf16.gmra.mxu0 %v971
      %v982 = vpop.f32.mrf.mxu0
      %v983 = vadd.f32 %v556, %v982
      %v984 = vpop.f32.mrf.mxu0
      %v985 = vadd.f32 %v558, %v984
      %986 = vdwg.mxu0
      %v987 = vsel %vm279, %v566, 0
      %989 = vmatpush.bf16.msra.mxu0 0
      %990 = vmatpush.bf16.msra.mxu0 0
      %991 = vmatpush.bf16.msra.mxu0 0
      %992 = vmatpush.bf16.msra.mxu0 0
      %993 = vmatpush.bf16.msra.mxu0 0
      %994 = vmatpush.bf16.msra.mxu0 0
      %995 = vmatpush.bf16.msra.mxu0 0
      %996 = vmatpush.bf16.msra.mxu0 %v859
      %997 = vmatmul.bf16.gmra.mxu0 %v987
      %v998 = vpop.f32.mrf.mxu0
      %v999 = vadd.f32 %v593, %v998
      %v1000 = vpop.f32.mrf.mxu0
      %v1001 = vadd.f32 %v595, %v1000
      %1002 = vdwg.mxu0
      %v1003 = vsel %vm279, %v603, 0
      %1005 = vmatpush.bf16.msra.mxu0 0
      %1006 = vmatpush.bf16.msra.mxu0 0
      %1007 = vmatpush.bf16.msra.mxu0 0
      %1008 = vmatpush.bf16.msra.mxu0 0
      %1009 = vmatpush.bf16.msra.mxu0 0
      %1010 = vmatpush.bf16.msra.mxu0 0
      %1011 = vmatpush.bf16.msra.mxu0 0
      %1012 = vmatpush.bf16.msra.mxu0 %v859
      %1013 = vmatmul.bf16.gmra.mxu0 %v1003
      %v1014 = vpop.f32.mrf.mxu0
      %v1015 = vadd.f32 %v630, %v1014
      %v1016 = vpop.f32.mrf.mxu0
      %v1017 = vadd.f32 %v632, %v1016
      %1018 = vdwg.mxu0
      %v1019 = vsel %vm279, %v640, 0
      %1021 = vmatpush.bf16.msra.mxu0 0
      %1022 = vmatpush.bf16.msra.mxu0 0
      %1023 = vmatpush.bf16.msra.mxu0 0
      %1024 = vmatpush.bf16.msra.mxu0 0
      %1025 = vmatpush.bf16.msra.mxu0 0
      %1026 = vmatpush.bf16.msra.mxu0 0
      %1027 = vmatpush.bf16.msra.mxu0 0
      %1028 = vmatpush.bf16.msra.mxu0 %v859
      %1029 = vmatmul.bf16.gmra.mxu0 %v1019
      %v1030 = vpop.f32.mrf.mxu0
      %v1031 = vadd.f32 %v667, %v1030
      %v1032 = vpop.f32.mrf.mxu0
      %v1033 = vadd.f32 %v669, %v1032
      %1034 = vdwg.mxu0
      %v1035 = vsel %vm279, %v677, 0
      %1037 = vmatpush.bf16.msra.mxu0 0
      %1038 = vmatpush.bf16.msra.mxu0 0
      %1039 = vmatpush.bf16.msra.mxu0 0
      %1040 = vmatpush.bf16.msra.mxu0 0
      %1041 = vmatpush.bf16.msra.mxu0 0
      %1042 = vmatpush.bf16.msra.mxu0 0
      %1043 = vmatpush.bf16.msra.mxu0 0
      %1044 = vmatpush.bf16.msra.mxu0 %v859
      %1045 = vmatmul.bf16.gmra.mxu0 %v1035
      %v1046 = vpop.f32.mrf.mxu0
      %v1047 = vadd.f32 %v704, %v1046
      %v1048 = vpop.f32.mrf.mxu0
      %v1049 = vadd.f32 %v706, %v1048
      %1050 = vdwg.mxu0
      %v1051 = vsel %vm279, %v714, 0
      %1053 = vmatpush.bf16.msra.mxu0 0
      %1054 = vmatpush.bf16.msra.mxu0 0
      %1055 = vmatpush.bf16.msra.mxu0 0
      %1056 = vmatpush.bf16.msra.mxu0 0
      %1057 = vmatpush.bf16.msra.mxu0 0
      %1058 = vmatpush.bf16.msra.mxu0 0
      %1059 = vmatpush.bf16.msra.mxu0 0
      %1060 = vmatpush.bf16.msra.mxu0 %v859
      %1061 = vmatmul.bf16.gmra.mxu0 %v1051
      %v1062 = vpop.f32.mrf.mxu0
      %v1063 = vadd.f32 %v741, %v1062
      %v1064 = vpop.f32.mrf.mxu0
      %v1065 = vadd.f32 %v743, %v1064
      %1066 = vdwg.mxu0
      %v1067 = vsel %vm279, %v751, 0
      %1069 = vmatpush.bf16.msra.mxu0 0
      %1070 = vmatpush.bf16.msra.mxu0 0
      %1071 = vmatpush.bf16.msra.mxu0 0
      %1072 = vmatpush.bf16.msra.mxu0 0
      %1073 = vmatpush.bf16.msra.mxu0 0
      %1074 = vmatpush.bf16.msra.mxu0 0
      %1075 = vmatpush.bf16.msra.mxu0 0
      %1076 = vmatpush.bf16.msra.mxu0 %v859
      %1077 = vmatmul.bf16.gmra.mxu0 %v1067
      %v1078 = vpop.f32.mrf.mxu0
      %v1079 = vadd.f32 %v778, %v1078
      %v1080 = vpop.f32.mrf.mxu0
      %v1081 = vadd.f32 %v780, %v1080
      %1082 = vdwg.mxu0
      %v1083 = vsel %vm279, %v788, 0
      %1085 = vmatpush.bf16.msra.mxu0 0
      %1086 = vmatpush.bf16.msra.mxu0 0
      %1087 = vmatpush.bf16.msra.mxu0 0
      %1088 = vmatpush.bf16.msra.mxu0 0
      %1089 = vmatpush.bf16.msra.mxu0 0
      %1090 = vmatpush.bf16.msra.mxu0 0
      %1091 = vmatpush.bf16.msra.mxu0 0
      %1092 = vmatpush.bf16.msra.mxu0 %v859
      %1093 = vmatmul.bf16.gmra.mxu0 %v1083
      %v1094 = vpop.f32.mrf.mxu0
      %v1095 = vadd.f32 %v815, %v1094
      %v1096 = vpop.f32.mrf.mxu0
      %v1097 = vadd.f32 %v817, %v1096
      %1098 = vdwg.mxu0
      %v1099 = vsel %vm279, %v825, 0
      %1101 = vmatpush.bf16.msra.mxu0 0
      %1102 = vmatpush.bf16.msra.mxu0 0
      %1103 = vmatpush.bf16.msra.mxu0 0
      %1104 = vmatpush.bf16.msra.mxu0 0
      %1105 = vmatpush.bf16.msra.mxu0 0
      %1106 = vmatpush.bf16.msra.mxu0 0
      %1107 = vmatpush.bf16.msra.mxu0 0
      %1108 = vmatpush.bf16.msra.mxu0 %v859
      %1109 = vmatmul.bf16.gmra.mxu0 %v1099
      %v1110 = vpop.f32.mrf.mxu0
      %v1111 = vadd.f32 %v852, %v1110
      %v1112 = vpop.f32.mrf.mxu0
      %v1113 = vadd.f32 %v854, %v1112
      %1114 = vdwg.mxu0
      %s1115 = scalar_lea.vmem %s1, 4
      %v1116 = vld [vmem:[%s1115] sm:$0x3]
      %vm1117 = vcmask 1046528
      %v1118 = vrot.slane %v264, 1
      %v1119 = vrot.slane %v265, 1
      %v1120 = vsel %vm1117, %v1118, %v1119
      %v1122 = vsel %vm279, %v1120, 0
      %v1125 = vsel %vm283, %v1116, 0
      %1127 = vmatpush.bf16.msra.mxu0 0
      %1128 = vmatpush.bf16.msra.mxu0 0
      %1129 = vmatpush.bf16.msra.mxu0 0
      %1130 = vmatpush.bf16.msra.mxu0 0
      %1131 = vmatpush.bf16.msra.mxu0 0
      %1132 = vmatpush.bf16.msra.mxu0 0
      %1133 = vmatpush.bf16.msra.mxu0 0
      %1134 = vmatpush.bf16.msra.mxu0 %v1125
      %1135 = vmatmul.bf16.gmra.mxu0 %v1122
      %v1136 = vpop.f32.mrf.mxu0
      %v1137 = vadd.f32 0.0, %v1136
      %v1138 = vpop.f32.mrf.mxu0
      %v1139 = vadd.f32 0.0, %v1138
      %1140 = vdwg.mxu0
      %v1141 = vrot.slane %v307, 1
      %v1142 = vrot.slane %v308, 1
      %v1143 = vsel %vm1117, %v1141, %v1142
      %v1145 = vsel %vm279, %v1143, 0
      %1147 = vmatpush.bf16.msra.mxu0 0
      %1148 = vmatpush.bf16.msra.mxu0 0
      %1149 = vmatpush.bf16.msra.mxu0 0
      %1150 = vmatpush.bf16.msra.mxu0 0
      %1151 = vmatpush.bf16.msra.mxu0 0
      %1152 = vmatpush.bf16.msra.mxu0 0
      %1153 = vmatpush.bf16.msra.mxu0 0
      %1154 = vmatpush.bf16.msra.mxu0 %v1125
      %1155 = vmatmul.bf16.gmra.mxu0 %v1145
      %v1156 = vpop.f32.mrf.mxu0
      %v1157 = vadd.f32 0.0, %v1156
      %v1158 = vpop.f32.mrf.mxu0
      %v1159 = vadd.f32 0.0, %v1158
      %1160 = vdwg.mxu0
      %v1161 = vrot.slane %v344, 1
      %v1162 = vrot.slane %v345, 1
      %v1163 = vsel %vm1117, %v1161, %v1162
      %v1165 = vsel %vm279, %v1163, 0
      %1167 = vmatpush.bf16.msra.mxu0 0
      %1168 = vmatpush.bf16.msra.mxu0 0
      %1169 = vmatpush.bf16.msra.mxu0 0
      %1170 = vmatpush.bf16.msra.mxu0 0
      %1171 = vmatpush.bf16.msra.mxu0 0
      %1172 = vmatpush.bf16.msra.mxu0 0
      %1173 = vmatpush.bf16.msra.mxu0 0
      %1174 = vmatpush.bf16.msra.mxu0 %v1125
      %1175 = vmatmul.bf16.gmra.mxu0 %v1165
      %v1176 = vpop.f32.mrf.mxu0
      %v1177 = vadd.f32 0.0, %v1176
      %v1178 = vpop.f32.mrf.mxu0
      %v1179 = vadd.f32 0.0, %v1178
      %1180 = vdwg.mxu0
      %v1181 = vrot.slane %v381, 1
      %v1182 = vrot.slane %v382, 1
      %v1183 = vsel %vm1117, %v1181, %v1182
      %v1185 = vsel %vm279, %v1183, 0
      %1187 = vmatpush.bf16.msra.mxu0 0
      %1188 = vmatpush.bf16.msra.mxu0 0
      %1189 = vmatpush.bf16.msra.mxu0 0
      %1190 = vmatpush.bf16.msra.mxu0 0
      %1191 = vmatpush.bf16.msra.mxu0 0
      %1192 = vmatpush.bf16.msra.mxu0 0
      %1193 = vmatpush.bf16.msra.mxu0 0
      %1194 = vmatpush.bf16.msra.mxu0 %v1125
      %1195 = vmatmul.bf16.gmra.mxu0 %v1185
      %v1196 = vpop.f32.mrf.mxu0
      %v1197 = vadd.f32 0.0, %v1196
      %v1198 = vpop.f32.mrf.mxu0
      %v1199 = vadd.f32 0.0, %v1198
      %1200 = vdwg.mxu0
      %v1201 = vrot.slane %v418, 1
      %v1202 = vrot.slane %v419, 1
      %v1203 = vsel %vm1117, %v1201, %v1202
      %v1205 = vsel %vm279, %v1203, 0
      %1207 = vmatpush.bf16.msra.mxu0 0
      %1208 = vmatpush.bf16.msra.mxu0 0
      %1209 = vmatpush.bf16.msra.mxu0 0
      %1210 = vmatpush.bf16.msra.mxu0 0
      %1211 = vmatpush.bf16.msra.mxu0 0
      %1212 = vmatpush.bf16.msra.mxu0 0
      %1213 = vmatpush.bf16.msra.mxu0 0
      %1214 = vmatpush.bf16.msra.mxu0 %v1125
      %1215 = vmatmul.bf16.gmra.mxu0 %v1205
      %v1216 = vpop.f32.mrf.mxu0
      %v1217 = vadd.f32 0.0, %v1216
      %v1218 = vpop.f32.mrf.mxu0
      %v1219 = vadd.f32 0.0, %v1218
      %1220 = vdwg.mxu0
      %v1221 = vrot.slane %v455, 1
      %v1222 = vrot.slane %v456, 1
      %v1223 = vsel %vm1117, %v1221, %v1222
      %v1225 = vsel %vm279, %v1223, 0
      %1227 = vmatpush.bf16.msra.mxu0 0
      %1228 = vmatpush.bf16.msra.mxu0 0
      %1229 = vmatpush.bf16.msra.mxu0 0
      %1230 = vmatpush.bf16.msra.mxu0 0
      %1231 = vmatpush.bf16.msra.mxu0 0
      %1232 = vmatpush.bf16.msra.mxu0 0
      %1233 = vmatpush.bf16.msra.mxu0 0
      %1234 = vmatpush.bf16.msra.mxu0 %v1125
      %1235 = vmatmul.bf16.gmra.mxu0 %v1225
      %v1236 = vpop.f32.mrf.mxu0
      %v1237 = vadd.f32 0.0, %v1236
      %v1238 = vpop.f32.mrf.mxu0
      %v1239 = vadd.f32 0.0, %v1238
      %1240 = vdwg.mxu0
      %v1241 = vrot.slane %v492, 1
      %v1242 = vrot.slane %v493, 1
      %v1243 = vsel %vm1117, %v1241, %v1242
      %v1245 = vsel %vm279, %v1243, 0
      %1247 = vmatpush.bf16.msra.mxu0 0
      %1248 = vmatpush.bf16.msra.mxu0 0
      %1249 = vmatpush.bf16.msra.mxu0 0
      %1250 = vmatpush.bf16.msra.mxu0 0
      %1251 = vmatpush.bf16.msra.mxu0 0
      %1252 = vmatpush.bf16.msra.mxu0 0
      %1253 = vmatpush.bf16.msra.mxu0 0
      %1254 = vmatpush.bf16.msra.mxu0 %v1125
      %1255 = vmatmul.bf16.gmra.mxu0 %v1245
      %v1256 = vpop.f32.mrf.mxu0
      %v1257 = vadd.f32 0.0, %v1256
      %v1258 = vpop.f32.mrf.mxu0
      %v1259 = vadd.f32 0.0, %v1258
      %1260 = vdwg.mxu0
      %v1261 = vrot.slane %v529, 1
      %v1262 = vrot.slane %v530, 1
      %v1263 = vsel %vm1117, %v1261, %v1262
      %v1265 = vsel %vm279, %v1263, 0
      %1267 = vmatpush.bf16.msra.mxu0 0
      %1268 = vmatpush.bf16.msra.mxu0 0
      %1269 = vmatpush.bf16.msra.mxu0 0
      %1270 = vmatpush.bf16.msra.mxu0 0
      %1271 = vmatpush.bf16.msra.mxu0 0
      %1272 = vmatpush.bf16.msra.mxu0 0
      %1273 = vmatpush.bf16.msra.mxu0 0
      %1274 = vmatpush.bf16.msra.mxu0 %v1125
      %1275 = vmatmul.bf16.gmra.mxu0 %v1265
      %v1276 = vpop.f32.mrf.mxu0
      %v1277 = vadd.f32 0.0, %v1276
      %v1278 = vpop.f32.mrf.mxu0
      %v1279 = vadd.f32 0.0, %v1278
      %1280 = vdwg.mxu0
      %v1281 = vrot.slane %v566, 1
      %v1282 = vrot.slane %v567, 1
      %v1283 = vsel %vm1117, %v1281, %v1282
      %v1285 = vsel %vm279, %v1283, 0
      %1287 = vmatpush.bf16.msra.mxu0 0
      %1288 = vmatpush.bf16.msra.mxu0 0
      %1289 = vmatpush.bf16.msra.mxu0 0
      %1290 = vmatpush.bf16.msra.mxu0 0
      %1291 = vmatpush.bf16.msra.mxu0 0
      %1292 = vmatpush.bf16.msra.mxu0 0
      %1293 = vmatpush.bf16.msra.mxu0 0
      %1294 = vmatpush.bf16.msra.mxu0 %v1125
      %1295 = vmatmul.bf16.gmra.mxu0 %v1285
      %v1296 = vpop.f32.mrf.mxu0
      %v1297 = vadd.f32 0.0, %v1296
      %v1298 = vpop.f32.mrf.mxu0
      %v1299 = vadd.f32 0.0, %v1298
      %1300 = vdwg.mxu0
      %v1301 = vrot.slane %v603, 1
      %v1302 = vrot.slane %v604, 1
      %v1303 = vsel %vm1117, %v1301, %v1302
      %v1305 = vsel %vm279, %v1303, 0
      %1307 = vmatpush.bf16.msra.mxu0 0
      %1308 = vmatpush.bf16.msra.mxu0 0
      %1309 = vmatpush.bf16.msra.mxu0 0
      %1310 = vmatpush.bf16.msra.mxu0 0
      %1311 = vmatpush.bf16.msra.mxu0 0
      %1312 = vmatpush.bf16.msra.mxu0 0
      %1313 = vmatpush.bf16.msra.mxu0 0
      %1314 = vmatpush.bf16.msra.mxu0 %v1125
      %1315 = vmatmul.bf16.gmra.mxu0 %v1305
      %v1316 = vpop.f32.mrf.mxu0
      %v1317 = vadd.f32 0.0, %v1316
      %v1318 = vpop.f32.mrf.mxu0
      %v1319 = vadd.f32 0.0, %v1318
      %1320 = vdwg.mxu0
      %v1321 = vrot.slane %v640, 1
      %v1322 = vrot.slane %v641, 1
      %v1323 = vsel %vm1117, %v1321, %v1322
      %v1325 = vsel %vm279, %v1323, 0
      %1327 = vmatpush.bf16.msra.mxu0 0
      %1328 = vmatpush.bf16.msra.mxu0 0
      %1329 = vmatpush.bf16.msra.mxu0 0
      %1330 = vmatpush.bf16.msra.mxu0 0
      %1331 = vmatpush.bf16.msra.mxu0 0
      %1332 = vmatpush.bf16.msra.mxu0 0
      %1333 = vmatpush.bf16.msra.mxu0 0
      %1334 = vmatpush.bf16.msra.mxu0 %v1125
      %1335 = vmatmul.bf16.gmra.mxu0 %v1325
      %v1336 = vpop.f32.mrf.mxu0
      %v1337 = vadd.f32 0.0, %v1336
      %v1338 = vpop.f32.mrf.mxu0
      %v1339 = vadd.f32 0.0, %v1338
      %1340 = vdwg.mxu0
      %v1341 = vrot.slane %v677, 1
      %v1342 = vrot.slane %v678, 1
      %v1343 = vsel %vm1117, %v1341, %v1342
      %v1345 = vsel %vm279, %v1343, 0
      %1347 = vmatpush.bf16.msra.mxu0 0
      %1348 = vmatpush.bf16.msra.mxu0 0
      %1349 = vmatpush.bf16.msra.mxu0 0
      %1350 = vmatpush.bf16.msra.mxu0 0
      %1351 = vmatpush.bf16.msra.mxu0 0
      %1352 = vmatpush.bf16.msra.mxu0 0
      %1353 = vmatpush.bf16.msra.mxu0 0
      %1354 = vmatpush.bf16.msra.mxu0 %v1125
      %1355 = vmatmul.bf16.gmra.mxu0 %v1345
      %v1356 = vpop.f32.mrf.mxu0
      %v1357 = vadd.f32 0.0, %v1356
      %v1358 = vpop.f32.mrf.mxu0
      %v1359 = vadd.f32 0.0, %v1358
      %1360 = vdwg.mxu0
      %v1361 = vrot.slane %v714, 1
      %v1362 = vrot.slane %v715, 1
      %v1363 = vsel %vm1117, %v1361, %v1362
      %v1365 = vsel %vm279, %v1363, 0
      %1367 = vmatpush.bf16.msra.mxu0 0
      %1368 = vmatpush.bf16.msra.mxu0 0
      %1369 = vmatpush.bf16.msra.mxu0 0
      %1370 = vmatpush.bf16.msra.mxu0 0
      %1371 = vmatpush.bf16.msra.mxu0 0
      %1372 = vmatpush.bf16.msra.mxu0 0
      %1373 = vmatpush.bf16.msra.mxu0 0
      %1374 = vmatpush.bf16.msra.mxu0 %v1125
      %1375 = vmatmul.bf16.gmra.mxu0 %v1365
      %v1376 = vpop.f32.mrf.mxu0
      %v1377 = vadd.f32 0.0, %v1376
      %v1378 = vpop.f32.mrf.mxu0
      %v1379 = vadd.f32 0.0, %v1378
      %1380 = vdwg.mxu0
      %v1381 = vrot.slane %v751, 1
      %v1382 = vrot.slane %v752, 1
      %v1383 = vsel %vm1117, %v1381, %v1382
      %v1385 = vsel %vm279, %v1383, 0
      %1387 = vmatpush.bf16.msra.mxu0 0
      %1388 = vmatpush.bf16.msra.mxu0 0
      %1389 = vmatpush.bf16.msra.mxu0 0
      %1390 = vmatpush.bf16.msra.mxu0 0
      %1391 = vmatpush.bf16.msra.mxu0 0
      %1392 = vmatpush.bf16.msra.mxu0 0
      %1393 = vmatpush.bf16.msra.mxu0 0
      %1394 = vmatpush.bf16.msra.mxu0 %v1125
      %1395 = vmatmul.bf16.gmra.mxu0 %v1385
      %v1396 = vpop.f32.mrf.mxu0
      %v1397 = vadd.f32 0.0, %v1396
      %v1398 = vpop.f32.mrf.mxu0
      %v1399 = vadd.f32 0.0, %v1398
      %1400 = vdwg.mxu0
      %v1401 = vrot.slane %v788, 1
      %v1402 = vrot.slane %v789, 1
      %v1403 = vsel %vm1117, %v1401, %v1402
      %v1405 = vsel %vm279, %v1403, 0
      %1407 = vmatpush.bf16.msra.mxu0 0
      %1408 = vmatpush.bf16.msra.mxu0 0
      %1409 = vmatpush.bf16.msra.mxu0 0
      %1410 = vmatpush.bf16.msra.mxu0 0
      %1411 = vmatpush.bf16.msra.mxu0 0
      %1412 = vmatpush.bf16.msra.mxu0 0
      %1413 = vmatpush.bf16.msra.mxu0 0
      %1414 = vmatpush.bf16.msra.mxu0 %v1125
      %1415 = vmatmul.bf16.gmra.mxu0 %v1405
      %v1416 = vpop.f32.mrf.mxu0
      %v1417 = vadd.f32 0.0, %v1416
      %v1418 = vpop.f32.mrf.mxu0
      %v1419 = vadd.f32 0.0, %v1418
      %1420 = vdwg.mxu0
      %v1421 = vrot.slane %v825, 1
      %v1422 = vrot.slane %v826, 1
      %v1423 = vsel %vm1117, %v1421, %v1422
      %v1425 = vsel %vm279, %v1423, 0
      %1427 = vmatpush.bf16.msra.mxu0 0
      %1428 = vmatpush.bf16.msra.mxu0 0
      %1429 = vmatpush.bf16.msra.mxu0 0
      %1430 = vmatpush.bf16.msra.mxu0 0
      %1431 = vmatpush.bf16.msra.mxu0 0
      %1432 = vmatpush.bf16.msra.mxu0 0
      %1433 = vmatpush.bf16.msra.mxu0 0
      %1434 = vmatpush.bf16.msra.mxu0 %v1125
      %1435 = vmatmul.bf16.gmra.mxu0 %v1425
      %v1436 = vpop.f32.mrf.mxu0
      %v1437 = vadd.f32 0.0, %v1436
      %v1438 = vpop.f32.mrf.mxu0
      %v1439 = vadd.f32 0.0, %v1438
      %1440 = vdwg.mxu0
      %v1441 = vadd.f32 %v871, %v1137
      %v1442 = vadd.f32 %v873, %v1139
      %v1443 = vadd.f32 %v887, %v1157
      %v1444 = vadd.f32 %v889, %v1159
      %v1445 = vadd.f32 %v903, %v1177
      %v1446 = vadd.f32 %v905, %v1179
      %v1447 = vadd.f32 %v919, %v1197
      %v1448 = vadd.f32 %v921, %v1199
      %v1449 = vadd.f32 %v935, %v1217
      %v1450 = vadd.f32 %v937, %v1219
      %v1451 = vadd.f32 %v951, %v1237
      %v1452 = vadd.f32 %v953, %v1239
      %v1453 = vadd.f32 %v967, %v1257
      %v1454 = vadd.f32 %v969, %v1259
      %v1455 = vadd.f32 %v983, %v1277
      %v1456 = vadd.f32 %v985, %v1279
      %v1457 = vadd.f32 %v999, %v1297
      %v1458 = vadd.f32 %v1001, %v1299
      %v1459 = vadd.f32 %v1015, %v1317
      %v1460 = vadd.f32 %v1017, %v1319
      %v1461 = vadd.f32 %v1031, %v1337
      %v1462 = vadd.f32 %v1033, %v1339
      %v1463 = vadd.f32 %v1047, %v1357
      %v1464 = vadd.f32 %v1049, %v1359
      %v1465 = vadd.f32 %v1063, %v1377
      %v1466 = vadd.f32 %v1065, %v1379
      %v1467 = vadd.f32 %v1079, %v1397
      %v1468 = vadd.f32 %v1081, %v1399
      %v1469 = vadd.f32 %v1095, %v1417
      %v1470 = vadd.f32 %v1097, %v1419
      %v1471 = vadd.f32 %v1111, %v1437
      %v1472 = vadd.f32 %v1113, %v1439
      %s1473 = scalar_lea.vmem %s1, 6
      %v1474 = vld [vmem:[%s1473] sm:$0x3]
      %v1476 = vsel %vm283, %v1474, 0
      %1478 = vmatpush.bf16.msra.mxu0 0
      %1479 = vmatpush.bf16.msra.mxu0 0
      %1480 = vmatpush.bf16.msra.mxu0 0
      %1481 = vmatpush.bf16.msra.mxu0 0
      %1482 = vmatpush.bf16.msra.mxu0 0
      %1483 = vmatpush.bf16.msra.mxu0 0
      %1484 = vmatpush.bf16.msra.mxu0 0
      %1485 = vmatpush.bf16.msra.mxu0 %v1476
      %1486 = vmatmul.bf16.gmra.mxu0 %v875
      %v1487 = vpop.f32.mrf.mxu0
      %v1488 = vadd.f32 0.0, %v1487
      %v1489 = vpop.f32.mrf.mxu0
      %v1490 = vadd.f32 0.0, %v1489
      %1491 = vdwg.mxu0
      %1492 = vmatpush.bf16.msra.mxu0 0
      %1493 = vmatpush.bf16.msra.mxu0 0
      %1494 = vmatpush.bf16.msra.mxu0 0
      %1495 = vmatpush.bf16.msra.mxu0 0
      %1496 = vmatpush.bf16.msra.mxu0 0
      %1497 = vmatpush.bf16.msra.mxu0 0
      %1498 = vmatpush.bf16.msra.mxu0 0
      %1499 = vmatpush.bf16.msra.mxu0 %v1476
      %1500 = vmatmul.bf16.gmra.mxu0 %v891
      %v1501 = vpop.f32.mrf.mxu0
      %v1502 = vadd.f32 0.0, %v1501
      %v1503 = vpop.f32.mrf.mxu0
      %v1504 = vadd.f32 0.0, %v1503
      %1505 = vdwg.mxu0
      %1506 = vmatpush.bf16.msra.mxu0 0
      %1507 = vmatpush.bf16.msra.mxu0 0
      %1508 = vmatpush.bf16.msra.mxu0 0
      %1509 = vmatpush.bf16.msra.mxu0 0
      %1510 = vmatpush.bf16.msra.mxu0 0
      %1511 = vmatpush.bf16.msra.mxu0 0
      %1512 = vmatpush.bf16.msra.mxu0 0
      %1513 = vmatpush.bf16.msra.mxu0 %v1476
      %1514 = vmatmul.bf16.gmra.mxu0 %v907
      %v1515 = vpop.f32.mrf.mxu0
      %v1516 = vadd.f32 0.0, %v1515
      %v1517 = vpop.f32.mrf.mxu0
      %v1518 = vadd.f32 0.0, %v1517
      %1519 = vdwg.mxu0
      %1520 = vmatpush.bf16.msra.mxu0 0
      %1521 = vmatpush.bf16.msra.mxu0 0
      %1522 = vmatpush.bf16.msra.mxu0 0
      %1523 = vmatpush.bf16.msra.mxu0 0
      %1524 = vmatpush.bf16.msra.mxu0 0
      %1525 = vmatpush.bf16.msra.mxu0 0
      %1526 = vmatpush.bf16.msra.mxu0 0
      %1527 = vmatpush.bf16.msra.mxu0 %v1476
      %1528 = vmatmul.bf16.gmra.mxu0 %v923
      %v1529 = vpop.f32.mrf.mxu0
      %v1530 = vadd.f32 0.0, %v1529
      %v1531 = vpop.f32.mrf.mxu0
      %v1532 = vadd.f32 0.0, %v1531
      %1533 = vdwg.mxu0
      %1534 = vmatpush.bf16.msra.mxu0 0
      %1535 = vmatpush.bf16.msra.mxu0 0
      %1536 = vmatpush.bf16.msra.mxu0 0
      %1537 = vmatpush.bf16.msra.mxu0 0
      %1538 = vmatpush.bf16.msra.mxu0 0
      %1539 = vmatpush.bf16.msra.mxu0 0
      %1540 = vmatpush.bf16.msra.mxu0 0
      %1541 = vmatpush.bf16.msra.mxu0 %v1476
      %1542 = vmatmul.bf16.gmra.mxu0 %v939
      %v1543 = vpop.f32.mrf.mxu0
      %v1544 = vadd.f32 0.0, %v1543
      %v1545 = vpop.f32.mrf.mxu0
      %v1546 = vadd.f32 0.0, %v1545
      %1547 = vdwg.mxu0
      %1548 = vmatpush.bf16.msra.mxu0 0
      %1549 = vmatpush.bf16.msra.mxu0 0
      %1550 = vmatpush.bf16.msra.mxu0 0
      %1551 = vmatpush.bf16.msra.mxu0 0
      %1552 = vmatpush.bf16.msra.mxu0 0
      %1553 = vmatpush.bf16.msra.mxu0 0
      %1554 = vmatpush.bf16.msra.mxu0 0
      %1555 = vmatpush.bf16.msra.mxu0 %v1476
      %1556 = vmatmul.bf16.gmra.mxu0 %v955
      %v1557 = vpop.f32.mrf.mxu0
      %v1558 = vadd.f32 0.0, %v1557
      %v1559 = vpop.f32.mrf.mxu0
      %v1560 = vadd.f32 0.0, %v1559
      %1561 = vdwg.mxu0
      %1562 = vmatpush.bf16.msra.mxu0 0
      %1563 = vmatpush.bf16.msra.mxu0 0
      %1564 = vmatpush.bf16.msra.mxu0 0
      %1565 = vmatpush.bf16.msra.mxu0 0
      %1566 = vmatpush.bf16.msra.mxu0 0
      %1567 = vmatpush.bf16.msra.mxu0 0
      %1568 = vmatpush.bf16.msra.mxu0 0
      %1569 = vmatpush.bf16.msra.mxu0 %v1476
      %1570 = vmatmul.bf16.gmra.mxu0 %v971
      %v1571 = vpop.f32.mrf.mxu0
      %v1572 = vadd.f32 0.0, %v1571
      %v1573 = vpop.f32.mrf.mxu0
      %v1574 = vadd.f32 0.0, %v1573
      %1575 = vdwg.mxu0
      %1576 = vmatpush.bf16.msra.mxu0 0
      %1577 = vmatpush.bf16.msra.mxu0 0
      %1578 = vmatpush.bf16.msra.mxu0 0
      %1579 = vmatpush.bf16.msra.mxu0 0
      %1580 = vmatpush.bf16.msra.mxu0 0
      %1581 = vmatpush.bf16.msra.mxu0 0
      %1582 = vmatpush.bf16.msra.mxu0 0
      %1583 = vmatpush.bf16.msra.mxu0 %v1476
      %1584 = vmatmul.bf16.gmra.mxu0 %v987
      %v1585 = vpop.f32.mrf.mxu0
      %v1586 = vadd.f32 0.0, %v1585
      %v1587 = vpop.f32.mrf.mxu0
      %v1588 = vadd.f32 0.0, %v1587
      %1589 = vdwg.mxu0
      %1590 = vmatpush.bf16.msra.mxu0 0
      %1591 = vmatpush.bf16.msra.mxu0 0
      %1592 = vmatpush.bf16.msra.mxu0 0
      %1593 = vmatpush.bf16.msra.mxu0 0
      %1594 = vmatpush.bf16.msra.mxu0 0
      %1595 = vmatpush.bf16.msra.mxu0 0
      %1596 = vmatpush.bf16.msra.mxu0 0
      %1597 = vmatpush.bf16.msra.mxu0 %v1476
      %1598 = vmatmul.bf16.gmra.mxu0 %v1003
      %v1599 = vpop.f32.mrf.mxu0
      %v1600 = vadd.f32 0.0, %v1599
      %v1601 = vpop.f32.mrf.mxu0
      %v1602 = vadd.f32 0.0, %v1601
      %1603 = vdwg.mxu0
      %1604 = vmatpush.bf16.msra.mxu0 0
      %1605 = vmatpush.bf16.msra.mxu0 0
      %1606 = vmatpush.bf16.msra.mxu0 0
      %1607 = vmatpush.bf16.msra.mxu0 0
      %1608 = vmatpush.bf16.msra.mxu0 0
      %1609 = vmatpush.bf16.msra.mxu0 0
      %1610 = vmatpush.bf16.msra.mxu0 0
      %1611 = vmatpush.bf16.msra.mxu0 %v1476
      %1612 = vmatmul.bf16.gmra.mxu0 %v1019
      %v1613 = vpop.f32.mrf.mxu0
      %v1614 = vadd.f32 0.0, %v1613
      %v1615 = vpop.f32.mrf.mxu0
      %v1616 = vadd.f32 0.0, %v1615
      %1617 = vdwg.mxu0
      %1618 = vmatpush.bf16.msra.mxu0 0
      %1619 = vmatpush.bf16.msra.mxu0 0
      %1620 = vmatpush.bf16.msra.mxu0 0
      %1621 = vmatpush.bf16.msra.mxu0 0
      %1622 = vmatpush.bf16.msra.mxu0 0
      %1623 = vmatpush.bf16.msra.mxu0 0
      %1624 = vmatpush.bf16.msra.mxu0 0
      %1625 = vmatpush.bf16.msra.mxu0 %v1476
      %1626 = vmatmul.bf16.gmra.mxu0 %v1035
      %v1627 = vpop.f32.mrf.mxu0
      %v1628 = vadd.f32 0.0, %v1627
      %v1629 = vpop.f32.mrf.mxu0
      %v1630 = vadd.f32 0.0, %v1629
      %1631 = vdwg.mxu0
      %1632 = vmatpush.bf16.msra.mxu0 0
      %1633 = vmatpush.bf16.msra.mxu0 0
      %1634 = vmatpush.bf16.msra.mxu0 0
      %1635 = vmatpush.bf16.msra.mxu0 0
      %1636 = vmatpush.bf16.msra.mxu0 0
      %1637 = vmatpush.bf16.msra.mxu0 0
      %1638 = vmatpush.bf16.msra.mxu0 0
      %1639 = vmatpush.bf16.msra.mxu0 %v1476
      %1640 = vmatmul.bf16.gmra.mxu0 %v1051
      %v1641 = vpop.f32.mrf.mxu0
      %v1642 = vadd.f32 0.0, %v1641
      %v1643 = vpop.f32.mrf.mxu0
      %v1644 = vadd.f32 0.0, %v1643
      %1645 = vdwg.mxu0
      %1646 = vmatpush.bf16.msra.mxu0 0
      %1647 = vmatpush.bf16.msra.mxu0 0
      %1648 = vmatpush.bf16.msra.mxu0 0
      %1649 = vmatpush.bf16.msra.mxu0 0
      %1650 = vmatpush.bf16.msra.mxu0 0
      %1651 = vmatpush.bf16.msra.mxu0 0
      %1652 = vmatpush.bf16.msra.mxu0 0
      %1653 = vmatpush.bf16.msra.mxu0 %v1476
      %1654 = vmatmul.bf16.gmra.mxu0 %v1067
      %v1655 = vpop.f32.mrf.mxu0
      %v1656 = vadd.f32 0.0, %v1655
      %v1657 = vpop.f32.mrf.mxu0
      %v1658 = vadd.f32 0.0, %v1657
      %1659 = vdwg.mxu0
      %1660 = vmatpush.bf16.msra.mxu0 0
      %1661 = vmatpush.bf16.msra.mxu0 0
      %1662 = vmatpush.bf16.msra.mxu0 0
      %1663 = vmatpush.bf16.msra.mxu0 0
      %1664 = vmatpush.bf16.msra.mxu0 0
      %1665 = vmatpush.bf16.msra.mxu0 0
      %1666 = vmatpush.bf16.msra.mxu0 0
      %1667 = vmatpush.bf16.msra.mxu0 %v1476
      %1668 = vmatmul.bf16.gmra.mxu0 %v1083
      %v1669 = vpop.f32.mrf.mxu0
      %v1670 = vadd.f32 0.0, %v1669
      %v1671 = vpop.f32.mrf.mxu0
      %v1672 = vadd.f32 0.0, %v1671
      %1673 = vdwg.mxu0
      %1674 = vmatpush.bf16.msra.mxu0 0
      %1675 = vmatpush.bf16.msra.mxu0 0
      %1676 = vmatpush.bf16.msra.mxu0 0
      %1677 = vmatpush.bf16.msra.mxu0 0
      %1678 = vmatpush.bf16.msra.mxu0 0
      %1679 = vmatpush.bf16.msra.mxu0 0
      %1680 = vmatpush.bf16.msra.mxu0 0
      %1681 = vmatpush.bf16.msra.mxu0 %v1476
      %1682 = vmatmul.bf16.gmra.mxu0 %v1099
      %v1683 = vpop.f32.mrf.mxu0
      %v1684 = vadd.f32 0.0, %v1683
      %v1685 = vpop.f32.mrf.mxu0
      %v1686 = vadd.f32 0.0, %v1685
      %1687 = vdwg.mxu0
      %v1690 = vunpack.c.l.b16 %v249
      %v1691 = vunpack.c.l.b16 %v250
      %v1692 = vpack.c.b16 %v1691, %v1690
      %v1694 = vsel %vm279, %v1692, 0
      %1696 = vmatpush.bf16.msra.mxu0 0
      %1697 = vmatpush.bf16.msra.mxu0 0
      %1698 = vmatpush.bf16.msra.mxu0 0
      %1699 = vmatpush.bf16.msra.mxu0 0
      %1700 = vmatpush.bf16.msra.mxu0 0
      %1701 = vmatpush.bf16.msra.mxu0 0
      %1702 = vmatpush.bf16.msra.mxu0 0
      %1703 = vmatpush.bf16.msra.mxu0 %v1476
      %1704 = vmatmul.bf16.gmra.mxu0 %v1694
      %v1705 = vpop.f32.mrf.mxu0
      %v1706 = vadd.f32 0.0, %v1705
      %v1707 = vpop.f32.mrf.mxu0
      %v1708 = vadd.f32 0.0, %v1707
      %1709 = vdwg.mxu0
      %v1710 = vadd.f32 %v1441, %v1488
      %v1711 = vadd.f32 %v1442, %v1490
      %v1712 = vadd.f32 %v1443, %v1502
      %v1713 = vadd.f32 %v1444, %v1504
      %v1714 = vadd.f32 %v1445, %v1516
      %v1715 = vadd.f32 %v1446, %v1518
      %v1716 = vadd.f32 %v1447, %v1530
      %v1717 = vadd.f32 %v1448, %v1532
      %v1718 = vadd.f32 %v1449, %v1544
      %v1719 = vadd.f32 %v1450, %v1546
      %v1720 = vadd.f32 %v1451, %v1558
      %v1721 = vadd.f32 %v1452, %v1560
      %v1722 = vadd.f32 %v1453, %v1572
      %v1723 = vadd.f32 %v1454, %v1574
      %v1724 = vadd.f32 %v1455, %v1586
      %v1725 = vadd.f32 %v1456, %v1588
      %v1726 = vadd.f32 %v1457, %v1600
      %v1727 = vadd.f32 %v1458, %v1602
      %v1728 = vadd.f32 %v1459, %v1614
      %v1729 = vadd.f32 %v1460, %v1616
      %v1730 = vadd.f32 %v1461, %v1628
      %v1731 = vadd.f32 %v1462, %v1630
      %v1732 = vadd.f32 %v1463, %v1642
      %v1733 = vadd.f32 %v1464, %v1644
      %v1734 = vadd.f32 %v1465, %v1656
      %v1735 = vadd.f32 %v1466, %v1658
      %v1736 = vadd.f32 %v1467, %v1670
      %v1737 = vadd.f32 %v1468, %v1672
      %v1738 = vadd.f32 %v1469, %v1684
      %v1739 = vadd.f32 %v1470, %v1686
      %v1740 = vadd.f32 %v1471, %v1706
      %v1741 = vadd.f32 %v1472, %v1708
      %s1742 = scalar_lea.vmem %s1, 8
      %v1743 = vld [vmem:[%s1742] sm:$0x3]
      %v1745 = vsel %vm283, %v1743, 0
      %1747 = vmatpush.bf16.msra.mxu0 0
      %1748 = vmatpush.bf16.msra.mxu0 0
      %1749 = vmatpush.bf16.msra.mxu0 0
      %1750 = vmatpush.bf16.msra.mxu0 0
      %1751 = vmatpush.bf16.msra.mxu0 0
      %1752 = vmatpush.bf16.msra.mxu0 0
      %1753 = vmatpush.bf16.msra.mxu0 0
      %1754 = vmatpush.bf16.msra.mxu0 %v1745
      %1755 = vmatmul.bf16.gmra.mxu0 %v322
      %v1756 = vpop.f32.mrf.mxu0
      %v1757 = vadd.f32 0.0, %v1756
      %v1758 = vpop.f32.mrf.mxu0
      %v1759 = vadd.f32 0.0, %v1758
      %1760 = vdwg.mxu0
      %1761 = vmatpush.bf16.msra.mxu0 0
      %1762 = vmatpush.bf16.msra.mxu0 0
      %1763 = vmatpush.bf16.msra.mxu0 0
      %1764 = vmatpush.bf16.msra.mxu0 0
      %1765 = vmatpush.bf16.msra.mxu0 0
      %1766 = vmatpush.bf16.msra.mxu0 0
      %1767 = vmatpush.bf16.msra.mxu0 0
      %1768 = vmatpush.bf16.msra.mxu0 %v1745
      %1769 = vmatmul.bf16.gmra.mxu0 %v359
      %v1770 = vpop.f32.mrf.mxu0
      %v1771 = vadd.f32 0.0, %v1770
      %v1772 = vpop.f32.mrf.mxu0
      %v1773 = vadd.f32 0.0, %v1772
      %1774 = vdwg.mxu0
      %1775 = vmatpush.bf16.msra.mxu0 0
      %1776 = vmatpush.bf16.msra.mxu0 0
      %1777 = vmatpush.bf16.msra.mxu0 0
      %1778 = vmatpush.bf16.msra.mxu0 0
      %1779 = vmatpush.bf16.msra.mxu0 0
      %1780 = vmatpush.bf16.msra.mxu0 0
      %1781 = vmatpush.bf16.msra.mxu0 0
      %1782 = vmatpush.bf16.msra.mxu0 %v1745
      %1783 = vmatmul.bf16.gmra.mxu0 %v396
      %v1784 = vpop.f32.mrf.mxu0
      %v1785 = vadd.f32 0.0, %v1784
      %v1786 = vpop.f32.mrf.mxu0
      %v1787 = vadd.f32 0.0, %v1786
      %1788 = vdwg.mxu0
      %1789 = vmatpush.bf16.msra.mxu0 0
      %1790 = vmatpush.bf16.msra.mxu0 0
      %1791 = vmatpush.bf16.msra.mxu0 0
      %1792 = vmatpush.bf16.msra.mxu0 0
      %1793 = vmatpush.bf16.msra.mxu0 0
      %1794 = vmatpush.bf16.msra.mxu0 0
      %1795 = vmatpush.bf16.msra.mxu0 0
      %1796 = vmatpush.bf16.msra.mxu0 %v1745
      %1797 = vmatmul.bf16.gmra.mxu0 %v433
      %v1798 = vpop.f32.mrf.mxu0
      %v1799 = vadd.f32 0.0, %v1798
      %v1800 = vpop.f32.mrf.mxu0
      %v1801 = vadd.f32 0.0, %v1800
      %1802 = vdwg.mxu0
      %1803 = vmatpush.bf16.msra.mxu0 0
      %1804 = vmatpush.bf16.msra.mxu0 0
      %1805 = vmatpush.bf16.msra.mxu0 0
      %1806 = vmatpush.bf16.msra.mxu0 0
      %1807 = vmatpush.bf16.msra.mxu0 0
      %1808 = vmatpush.bf16.msra.mxu0 0
      %1809 = vmatpush.bf16.msra.mxu0 0
      %1810 = vmatpush.bf16.msra.mxu0 %v1745
      %1811 = vmatmul.bf16.gmra.mxu0 %v470
      %v1812 = vpop.f32.mrf.mxu0
      %v1813 = vadd.f32 0.0, %v1812
      %v1814 = vpop.f32.mrf.mxu0
      %v1815 = vadd.f32 0.0, %v1814
      %1816 = vdwg.mxu0
      %1817 = vmatpush.bf16.msra.mxu0 0
      %1818 = vmatpush.bf16.msra.mxu0 0
      %1819 = vmatpush.bf16.msra.mxu0 0
      %1820 = vmatpush.bf16.msra.mxu0 0
      %1821 = vmatpush.bf16.msra.mxu0 0
      %1822 = vmatpush.bf16.msra.mxu0 0
      %1823 = vmatpush.bf16.msra.mxu0 0
      %1824 = vmatpush.bf16.msra.mxu0 %v1745
      %1825 = vmatmul.bf16.gmra.mxu0 %v507
      %v1826 = vpop.f32.mrf.mxu0
      %v1827 = vadd.f32 0.0, %v1826
      %v1828 = vpop.f32.mrf.mxu0
      %v1829 = vadd.f32 0.0, %v1828
      %1830 = vdwg.mxu0
      %1831 = vmatpush.bf16.msra.mxu0 0
      %1832 = vmatpush.bf16.msra.mxu0 0
      %1833 = vmatpush.bf16.msra.mxu0 0
      %1834 = vmatpush.bf16.msra.mxu0 0
      %1835 = vmatpush.bf16.msra.mxu0 0
      %1836 = vmatpush.bf16.msra.mxu0 0
      %1837 = vmatpush.bf16.msra.mxu0 0
      %1838 = vmatpush.bf16.msra.mxu0 %v1745
      %1839 = vmatmul.bf16.gmra.mxu0 %v544
      %v1840 = vpop.f32.mrf.mxu0
      %v1841 = vadd.f32 0.0, %v1840
      %v1842 = vpop.f32.mrf.mxu0
      %v1843 = vadd.f32 0.0, %v1842
      %1844 = vdwg.mxu0
      %1845 = vmatpush.bf16.msra.mxu0 0
      %1846 = vmatpush.bf16.msra.mxu0 0
      %1847 = vmatpush.bf16.msra.mxu0 0
      %1848 = vmatpush.bf16.msra.mxu0 0
      %1849 = vmatpush.bf16.msra.mxu0 0
      %1850 = vmatpush.bf16.msra.mxu0 0
      %1851 = vmatpush.bf16.msra.mxu0 0
      %1852 = vmatpush.bf16.msra.mxu0 %v1745
      %1853 = vmatmul.bf16.gmra.mxu0 %v581
      %v1854 = vpop.f32.mrf.mxu0
      %v1855 = vadd.f32 0.0, %v1854
      %v1856 = vpop.f32.mrf.mxu0
      %v1857 = vadd.f32 0.0, %v1856
      %1858 = vdwg.mxu0
      %1859 = vmatpush.bf16.msra.mxu0 0
      %1860 = vmatpush.bf16.msra.mxu0 0
      %1861 = vmatpush.bf16.msra.mxu0 0
      %1862 = vmatpush.bf16.msra.mxu0 0
      %1863 = vmatpush.bf16.msra.mxu0 0
      %1864 = vmatpush.bf16.msra.mxu0 0
      %1865 = vmatpush.bf16.msra.mxu0 0
      %1866 = vmatpush.bf16.msra.mxu0 %v1745
      %1867 = vmatmul.bf16.gmra.mxu0 %v618
      %v1868 = vpop.f32.mrf.mxu0
      %v1869 = vadd.f32 0.0, %v1868
      %v1870 = vpop.f32.mrf.mxu0
      %v1871 = vadd.f32 0.0, %v1870
      %1872 = vdwg.mxu0
      %1873 = vmatpush.bf16.msra.mxu0 0
      %1874 = vmatpush.bf16.msra.mxu0 0
      %1875 = vmatpush.bf16.msra.mxu0 0
      %1876 = vmatpush.bf16.msra.mxu0 0
      %1877 = vmatpush.bf16.msra.mxu0 0
      %1878 = vmatpush.bf16.msra.mxu0 0
      %1879 = vmatpush.bf16.msra.mxu0 0
      %1880 = vmatpush.bf16.msra.mxu0 %v1745
      %1881 = vmatmul.bf16.gmra.mxu0 %v655
      %v1882 = vpop.f32.mrf.mxu0
      %v1883 = vadd.f32 0.0, %v1882
      %v1884 = vpop.f32.mrf.mxu0
      %v1885 = vadd.f32 0.0, %v1884
      %1886 = vdwg.mxu0
      %1887 = vmatpush.bf16.msra.mxu0 0
      %1888 = vmatpush.bf16.msra.mxu0 0
      %1889 = vmatpush.bf16.msra.mxu0 0
      %1890 = vmatpush.bf16.msra.mxu0 0
      %1891 = vmatpush.bf16.msra.mxu0 0
      %1892 = vmatpush.bf16.msra.mxu0 0
      %1893 = vmatpush.bf16.msra.mxu0 0
      %1894 = vmatpush.bf16.msra.mxu0 %v1745
      %1895 = vmatmul.bf16.gmra.mxu0 %v692
      %v1896 = vpop.f32.mrf.mxu0
      %v1897 = vadd.f32 0.0, %v1896
      %v1898 = vpop.f32.mrf.mxu0
      %v1899 = vadd.f32 0.0, %v1898
      %1900 = vdwg.mxu0
      %1901 = vmatpush.bf16.msra.mxu0 0
      %1902 = vmatpush.bf16.msra.mxu0 0
      %1903 = vmatpush.bf16.msra.mxu0 0
      %1904 = vmatpush.bf16.msra.mxu0 0
      %1905 = vmatpush.bf16.msra.mxu0 0
      %1906 = vmatpush.bf16.msra.mxu0 0
      %1907 = vmatpush.bf16.msra.mxu0 0
      %1908 = vmatpush.bf16.msra.mxu0 %v1745
      %1909 = vmatmul.bf16.gmra.mxu0 %v729
      %v1910 = vpop.f32.mrf.mxu0
      %v1911 = vadd.f32 0.0, %v1910
      %v1912 = vpop.f32.mrf.mxu0
      %v1913 = vadd.f32 0.0, %v1912
      %1914 = vdwg.mxu0
      %1915 = vmatpush.bf16.msra.mxu0 0
      %1916 = vmatpush.bf16.msra.mxu0 0
      %1917 = vmatpush.bf16.msra.mxu0 0
      %1918 = vmatpush.bf16.msra.mxu0 0
      %1919 = vmatpush.bf16.msra.mxu0 0
      %1920 = vmatpush.bf16.msra.mxu0 0
      %1921 = vmatpush.bf16.msra.mxu0 0
      %1922 = vmatpush.bf16.msra.mxu0 %v1745
      %1923 = vmatmul.bf16.gmra.mxu0 %v766
      %v1924 = vpop.f32.mrf.mxu0
      %v1925 = vadd.f32 0.0, %v1924
      %v1926 = vpop.f32.mrf.mxu0
      %v1927 = vadd.f32 0.0, %v1926
      %1928 = vdwg.mxu0
      %1929 = vmatpush.bf16.msra.mxu0 0
      %1930 = vmatpush.bf16.msra.mxu0 0
      %1931 = vmatpush.bf16.msra.mxu0 0
      %1932 = vmatpush.bf16.msra.mxu0 0
      %1933 = vmatpush.bf16.msra.mxu0 0
      %1934 = vmatpush.bf16.msra.mxu0 0
      %1935 = vmatpush.bf16.msra.mxu0 0
      %1936 = vmatpush.bf16.msra.mxu0 %v1745
      %1937 = vmatmul.bf16.gmra.mxu0 %v803
      %v1938 = vpop.f32.mrf.mxu0
      %v1939 = vadd.f32 0.0, %v1938
      %v1940 = vpop.f32.mrf.mxu0
      %v1941 = vadd.f32 0.0, %v1940
      %1942 = vdwg.mxu0
      %1943 = vmatpush.bf16.msra.mxu0 0
      %1944 = vmatpush.bf16.msra.mxu0 0
      %1945 = vmatpush.bf16.msra.mxu0 0
      %1946 = vmatpush.bf16.msra.mxu0 0
      %1947 = vmatpush.bf16.msra.mxu0 0
      %1948 = vmatpush.bf16.msra.mxu0 0
      %1949 = vmatpush.bf16.msra.mxu0 0
      %1950 = vmatpush.bf16.msra.mxu0 %v1745
      %1951 = vmatmul.bf16.gmra.mxu0 %v840
      %v1952 = vpop.f32.mrf.mxu0
      %v1953 = vadd.f32 0.0, %v1952
      %v1954 = vpop.f32.mrf.mxu0
      %v1955 = vadd.f32 0.0, %v1954
      %1956 = vdwg.mxu0
      %v1958 = vunpack.c.l.b16 %v251
      %v1959 = vpack.c.b16 %v1958, %v1958
      %v1960 = vshrl.u32 %v1692, 16
      %v1962 = vshll.u32 %v1692, 16
      %v1964 = vrot.slane %v1962, 1
      %v1965 = vor.u32 %v1960, %v1964
      %v1967 = vshll.u32 %v1959, 16
      %v1969 = vrot.slane %v1967, 1
      %v1970 = vsel %vm266, %v1965, %v1969
      %v1972 = vsel %vm279, %v1970, 0
      %1974 = vmatpush.bf16.msra.mxu0 0
      %1975 = vmatpush.bf16.msra.mxu0 0
      %1976 = vmatpush.bf16.msra.mxu0 0
      %1977 = vmatpush.bf16.msra.mxu0 0
      %1978 = vmatpush.bf16.msra.mxu0 0
      %1979 = vmatpush.bf16.msra.mxu0 0
      %1980 = vmatpush.bf16.msra.mxu0 0
      %1981 = vmatpush.bf16.msra.mxu0 %v1745
      %1982 = vmatmul.bf16.gmra.mxu0 %v1972
      %v1983 = vpop.f32.mrf.mxu0
      %v1984 = vadd.f32 0.0, %v1983
      %v1985 = vpop.f32.mrf.mxu0
      %v1986 = vadd.f32 0.0, %v1985
      %1987 = vdwg.mxu0
      %v1988 = vadd.f32 %v1710, %v1757
      %v1989 = vadd.f32 %v1711, %v1759
      %v1990 = vadd.f32 %v1712, %v1771
      %v1991 = vadd.f32 %v1713, %v1773
      %v1992 = vadd.f32 %v1714, %v1785
      %v1993 = vadd.f32 %v1715, %v1787
      %v1994 = vadd.f32 %v1716, %v1799
      %v1995 = vadd.f32 %v1717, %v1801
      %v1996 = vadd.f32 %v1718, %v1813
      %v1997 = vadd.f32 %v1719, %v1815
      %v1998 = vadd.f32 %v1720, %v1827
      %v1999 = vadd.f32 %v1721, %v1829
      %v2000 = vadd.f32 %v1722, %v1841
      %v2001 = vadd.f32 %v1723, %v1843
      %v2002 = vadd.f32 %v1724, %v1855
      %v2003 = vadd.f32 %v1725, %v1857
      %v2004 = vadd.f32 %v1726, %v1869
      %v2005 = vadd.f32 %v1727, %v1871
      %v2006 = vadd.f32 %v1728, %v1883
      %v2007 = vadd.f32 %v1729, %v1885
      %v2008 = vadd.f32 %v1730, %v1897
      %v2009 = vadd.f32 %v1731, %v1899
      %v2010 = vadd.f32 %v1732, %v1911
      %v2011 = vadd.f32 %v1733, %v1913
      %v2012 = vadd.f32 %v1734, %v1925
      %v2013 = vadd.f32 %v1735, %v1927
      %v2014 = vadd.f32 %v1736, %v1939
      %v2015 = vadd.f32 %v1737, %v1941
      %v2016 = vadd.f32 %v1738, %v1953
      %v2017 = vadd.f32 %v1739, %v1955
      %v2018 = vadd.f32 %v1740, %v1984
      %v2019 = vadd.f32 %v1741, %v1986
      %s2020 = scalar_lea.vmem %s1, 10
      %v2021 = vld [vmem:[%s2020] sm:$0x3]
      %v2023 = vsel %vm283, %v2021, 0
      %2025 = vmatpush.bf16.msra.mxu0 0
      %2026 = vmatpush.bf16.msra.mxu0 0
      %2027 = vmatpush.bf16.msra.mxu0 0
      %2028 = vmatpush.bf16.msra.mxu0 0
      %2029 = vmatpush.bf16.msra.mxu0 0
      %2030 = vmatpush.bf16.msra.mxu0 0
      %2031 = vmatpush.bf16.msra.mxu0 0
      %2032 = vmatpush.bf16.msra.mxu0 %v2023
      %2033 = vmatmul.bf16.gmra.mxu0 %v1145
      %v2034 = vpop.f32.mrf.mxu0
      %v2035 = vadd.f32 0.0, %v2034
      %v2036 = vpop.f32.mrf.mxu0
      %v2037 = vadd.f32 0.0, %v2036
      %2038 = vdwg.mxu0
      %2039 = vmatpush.bf16.msra.mxu0 0
      %2040 = vmatpush.bf16.msra.mxu0 0
      %2041 = vmatpush.bf16.msra.mxu0 0
      %2042 = vmatpush.bf16.msra.mxu0 0
      %2043 = vmatpush.bf16.msra.mxu0 0
      %2044 = vmatpush.bf16.msra.mxu0 0
      %2045 = vmatpush.bf16.msra.mxu0 0
      %2046 = vmatpush.bf16.msra.mxu0 %v2023
      %2047 = vmatmul.bf16.gmra.mxu0 %v1165
      %v2048 = vpop.f32.mrf.mxu0
      %v2049 = vadd.f32 0.0, %v2048
      %v2050 = vpop.f32.mrf.mxu0
      %v2051 = vadd.f32 0.0, %v2050
      %2052 = vdwg.mxu0
      %2053 = vmatpush.bf16.msra.mxu0 0
      %2054 = vmatpush.bf16.msra.mxu0 0
      %2055 = vmatpush.bf16.msra.mxu0 0
      %2056 = vmatpush.bf16.msra.mxu0 0
      %2057 = vmatpush.bf16.msra.mxu0 0
      %2058 = vmatpush.bf16.msra.mxu0 0
      %2059 = vmatpush.bf16.msra.mxu0 0
      %2060 = vmatpush.bf16.msra.mxu0 %v2023
      %2061 = vmatmul.bf16.gmra.mxu0 %v1185
      %v2062 = vpop.f32.mrf.mxu0
      %v2063 = vadd.f32 0.0, %v2062
      %v2064 = vpop.f32.mrf.mxu0
      %v2065 = vadd.f32 0.0, %v2064
      %2066 = vdwg.mxu0
      %2067 = vmatpush.bf16.msra.mxu0 0
      %2068 = vmatpush.bf16.msra.mxu0 0
      %2069 = vmatpush.bf16.msra.mxu0 0
      %2070 = vmatpush.bf16.msra.mxu0 0
      %2071 = vmatpush.bf16.msra.mxu0 0
      %2072 = vmatpush.bf16.msra.mxu0 0
      %2073 = vmatpush.bf16.msra.mxu0 0
      %2074 = vmatpush.bf16.msra.mxu0 %v2023
      %2075 = vmatmul.bf16.gmra.mxu0 %v1205
      %v2076 = vpop.f32.mrf.mxu0
      %v2077 = vadd.f32 0.0, %v2076
      %v2078 = vpop.f32.mrf.mxu0
      %v2079 = vadd.f32 0.0, %v2078
      %2080 = vdwg.mxu0
      %2081 = vmatpush.bf16.msra.mxu0 0
      %2082 = vmatpush.bf16.msra.mxu0 0
      %2083 = vmatpush.bf16.msra.mxu0 0
      %2084 = vmatpush.bf16.msra.mxu0 0
      %2085 = vmatpush.bf16.msra.mxu0 0
      %2086 = vmatpush.bf16.msra.mxu0 0
      %2087 = vmatpush.bf16.msra.mxu0 0
      %2088 = vmatpush.bf16.msra.mxu0 %v2023
      %2089 = vmatmul.bf16.gmra.mxu0 %v1225
      %v2090 = vpop.f32.mrf.mxu0
      %v2091 = vadd.f32 0.0, %v2090
      %v2092 = vpop.f32.mrf.mxu0
      %v2093 = vadd.f32 0.0, %v2092
      %2094 = vdwg.mxu0
      %2095 = vmatpush.bf16.msra.mxu0 0
      %2096 = vmatpush.bf16.msra.mxu0 0
      %2097 = vmatpush.bf16.msra.mxu0 0
      %2098 = vmatpush.bf16.msra.mxu0 0
      %2099 = vmatpush.bf16.msra.mxu0 0
      %2100 = vmatpush.bf16.msra.mxu0 0
      %2101 = vmatpush.bf16.msra.mxu0 0
      %2102 = vmatpush.bf16.msra.mxu0 %v2023
      %2103 = vmatmul.bf16.gmra.mxu0 %v1245
      %v2104 = vpop.f32.mrf.mxu0
      %v2105 = vadd.f32 0.0, %v2104
      %v2106 = vpop.f32.mrf.mxu0
      %v2107 = vadd.f32 0.0, %v2106
      %2108 = vdwg.mxu0
      %2109 = vmatpush.bf16.msra.mxu0 0
      %2110 = vmatpush.bf16.msra.mxu0 0
      %2111 = vmatpush.bf16.msra.mxu0 0
      %2112 = vmatpush.bf16.msra.mxu0 0
      %2113 = vmatpush.bf16.msra.mxu0 0
      %2114 = vmatpush.bf16.msra.mxu0 0
      %2115 = vmatpush.bf16.msra.mxu0 0
      %2116 = vmatpush.bf16.msra.mxu0 %v2023
      %2117 = vmatmul.bf16.gmra.mxu0 %v1265
      %v2118 = vpop.f32.mrf.mxu0
      %v2119 = vadd.f32 0.0, %v2118
      %v2120 = vpop.f32.mrf.mxu0
      %v2121 = vadd.f32 0.0, %v2120
      %2122 = vdwg.mxu0
      %2123 = vmatpush.bf16.msra.mxu0 0
      %2124 = vmatpush.bf16.msra.mxu0 0
      %2125 = vmatpush.bf16.msra.mxu0 0
      %2126 = vmatpush.bf16.msra.mxu0 0
      %2127 = vmatpush.bf16.msra.mxu0 0
      %2128 = vmatpush.bf16.msra.mxu0 0
      %2129 = vmatpush.bf16.msra.mxu0 0
      %2130 = vmatpush.bf16.msra.mxu0 %v2023
      %2131 = vmatmul.bf16.gmra.mxu0 %v1285
      %v2132 = vpop.f32.mrf.mxu0
      %v2133 = vadd.f32 0.0, %v2132
      %v2134 = vpop.f32.mrf.mxu0
      %v2135 = vadd.f32 0.0, %v2134
      %2136 = vdwg.mxu0
      %2137 = vmatpush.bf16.msra.mxu0 0
      %2138 = vmatpush.bf16.msra.mxu0 0
      %2139 = vmatpush.bf16.msra.mxu0 0
      %2140 = vmatpush.bf16.msra.mxu0 0
      %2141 = vmatpush.bf16.msra.mxu0 0
      %2142 = vmatpush.bf16.msra.mxu0 0
      %2143 = vmatpush.bf16.msra.mxu0 0
      %2144 = vmatpush.bf16.msra.mxu0 %v2023
      %2145 = vmatmul.bf16.gmra.mxu0 %v1305
      %v2146 = vpop.f32.mrf.mxu0
      %v2147 = vadd.f32 0.0, %v2146
      %v2148 = vpop.f32.mrf.mxu0
      %v2149 = vadd.f32 0.0, %v2148
      %2150 = vdwg.mxu0
      %2151 = vmatpush.bf16.msra.mxu0 0
      %2152 = vmatpush.bf16.msra.mxu0 0
      %2153 = vmatpush.bf16.msra.mxu0 0
      %2154 = vmatpush.bf16.msra.mxu0 0
      %2155 = vmatpush.bf16.msra.mxu0 0
      %2156 = vmatpush.bf16.msra.mxu0 0
      %2157 = vmatpush.bf16.msra.mxu0 0
      %2158 = vmatpush.bf16.msra.mxu0 %v2023
      %2159 = vmatmul.bf16.gmra.mxu0 %v1325
      %v2160 = vpop.f32.mrf.mxu0
      %v2161 = vadd.f32 0.0, %v2160
      %v2162 = vpop.f32.mrf.mxu0
      %v2163 = vadd.f32 0.0, %v2162
      %2164 = vdwg.mxu0
      %2165 = vmatpush.bf16.msra.mxu0 0
      %2166 = vmatpush.bf16.msra.mxu0 0
      %2167 = vmatpush.bf16.msra.mxu0 0
      %2168 = vmatpush.bf16.msra.mxu0 0
      %2169 = vmatpush.bf16.msra.mxu0 0
      %2170 = vmatpush.bf16.msra.mxu0 0
      %2171 = vmatpush.bf16.msra.mxu0 0
      %2172 = vmatpush.bf16.msra.mxu0 %v2023
      %2173 = vmatmul.bf16.gmra.mxu0 %v1345
      %v2174 = vpop.f32.mrf.mxu0
      %v2175 = vadd.f32 0.0, %v2174
      %v2176 = vpop.f32.mrf.mxu0
      %v2177 = vadd.f32 0.0, %v2176
      %2178 = vdwg.mxu0
      %2179 = vmatpush.bf16.msra.mxu0 0
      %2180 = vmatpush.bf16.msra.mxu0 0
      %2181 = vmatpush.bf16.msra.mxu0 0
      %2182 = vmatpush.bf16.msra.mxu0 0
      %2183 = vmatpush.bf16.msra.mxu0 0
      %2184 = vmatpush.bf16.msra.mxu0 0
      %2185 = vmatpush.bf16.msra.mxu0 0
      %2186 = vmatpush.bf16.msra.mxu0 %v2023
      %2187 = vmatmul.bf16.gmra.mxu0 %v1365
      %v2188 = vpop.f32.mrf.mxu0
      %v2189 = vadd.f32 0.0, %v2188
      %v2190 = vpop.f32.mrf.mxu0
      %v2191 = vadd.f32 0.0, %v2190
      %2192 = vdwg.mxu0
      %2193 = vmatpush.bf16.msra.mxu0 0
      %2194 = vmatpush.bf16.msra.mxu0 0
      %2195 = vmatpush.bf16.msra.mxu0 0
      %2196 = vmatpush.bf16.msra.mxu0 0
      %2197 = vmatpush.bf16.msra.mxu0 0
      %2198 = vmatpush.bf16.msra.mxu0 0
      %2199 = vmatpush.bf16.msra.mxu0 0
      %2200 = vmatpush.bf16.msra.mxu0 %v2023
      %2201 = vmatmul.bf16.gmra.mxu0 %v1385
      %v2202 = vpop.f32.mrf.mxu0
      %v2203 = vadd.f32 0.0, %v2202
      %v2204 = vpop.f32.mrf.mxu0
      %v2205 = vadd.f32 0.0, %v2204
      %2206 = vdwg.mxu0
      %2207 = vmatpush.bf16.msra.mxu0 0
      %2208 = vmatpush.bf16.msra.mxu0 0
      %2209 = vmatpush.bf16.msra.mxu0 0
      %2210 = vmatpush.bf16.msra.mxu0 0
      %2211 = vmatpush.bf16.msra.mxu0 0
      %2212 = vmatpush.bf16.msra.mxu0 0
      %2213 = vmatpush.bf16.msra.mxu0 0
      %2214 = vmatpush.bf16.msra.mxu0 %v2023
      %2215 = vmatmul.bf16.gmra.mxu0 %v1405
      %v2216 = vpop.f32.mrf.mxu0
      %v2217 = vadd.f32 0.0, %v2216
      %v2218 = vpop.f32.mrf.mxu0
      %v2219 = vadd.f32 0.0, %v2218
      %2220 = vdwg.mxu0
      %2221 = vmatpush.bf16.msra.mxu0 0
      %2222 = vmatpush.bf16.msra.mxu0 0
      %2223 = vmatpush.bf16.msra.mxu0 0
      %2224 = vmatpush.bf16.msra.mxu0 0
      %2225 = vmatpush.bf16.msra.mxu0 0
      %2226 = vmatpush.bf16.msra.mxu0 0
      %2227 = vmatpush.bf16.msra.mxu0 0
      %2228 = vmatpush.bf16.msra.mxu0 %v2023
      %2229 = vmatmul.bf16.gmra.mxu0 %v1425
      %v2230 = vpop.f32.mrf.mxu0
      %v2231 = vadd.f32 0.0, %v2230
      %v2232 = vpop.f32.mrf.mxu0
      %v2233 = vadd.f32 0.0, %v2232
      %2234 = vdwg.mxu0
      %v2235 = vrot.slane %v1692, 1
      %v2236 = vrot.slane %v1959, 1
      %v2237 = vsel %vm1117, %v2235, %v2236
      %v2239 = vsel %vm279, %v2237, 0
      %2241 = vmatpush.bf16.msra.mxu0 0
      %2242 = vmatpush.bf16.msra.mxu0 0
      %2243 = vmatpush.bf16.msra.mxu0 0
      %2244 = vmatpush.bf16.msra.mxu0 0
      %2245 = vmatpush.bf16.msra.mxu0 0
      %2246 = vmatpush.bf16.msra.mxu0 0
      %2247 = vmatpush.bf16.msra.mxu0 0
      %2248 = vmatpush.bf16.msra.mxu0 %v2023
      %2249 = vmatmul.bf16.gmra.mxu0 %v2239
      %v2250 = vpop.f32.mrf.mxu0
      %v2251 = vadd.f32 0.0, %v2250
      %v2252 = vpop.f32.mrf.mxu0
      %v2253 = vadd.f32 0.0, %v2252
      %2254 = vdwg.mxu0
      %v2255 = vadd.f32 %v1988, %v2035
      %v2256 = vadd.f32 %v1989, %v2037
      %v2257 = vadd.f32 %v1990, %v2049
      %v2258 = vadd.f32 %v1991, %v2051
      %v2259 = vadd.f32 %v1992, %v2063
      %v2260 = vadd.f32 %v1993, %v2065
      %v2261 = vadd.f32 %v1994, %v2077
      %v2262 = vadd.f32 %v1995, %v2079
      %v2263 = vadd.f32 %v1996, %v2091
      %v2264 = vadd.f32 %v1997, %v2093
      %v2265 = vadd.f32 %v1998, %v2105
      %v2266 = vadd.f32 %v1999, %v2107
      %v2267 = vadd.f32 %v2000, %v2119
      %v2268 = vadd.f32 %v2001, %v2121
      %v2269 = vadd.f32 %v2002, %v2133
      %v2270 = vadd.f32 %v2003, %v2135
      %v2271 = vadd.f32 %v2004, %v2147
      %v2272 = vadd.f32 %v2005, %v2149
      %v2273 = vadd.f32 %v2006, %v2161
      %v2274 = vadd.f32 %v2007, %v2163
      %v2275 = vadd.f32 %v2008, %v2175
      %v2276 = vadd.f32 %v2009, %v2177
      %v2277 = vadd.f32 %v2010, %v2189
      %v2278 = vadd.f32 %v2011, %v2191
      %v2279 = vadd.f32 %v2012, %v2203
      %v2280 = vadd.f32 %v2013, %v2205
      %v2281 = vadd.f32 %v2014, %v2217
      %v2282 = vadd.f32 %v2015, %v2219
      %v2283 = vadd.f32 %v2016, %v2231
      %v2284 = vadd.f32 %v2017, %v2233
      %v2285 = vadd.f32 %v2018, %v2251
      %v2286 = vadd.f32 %v2019, %v2253
      %s2287 = scalar_lea.vmem %s1, 12
      %v2288 = vld [vmem:[%s2287] sm:$0x3]
      %v2290 = vsel %vm283, %v2288, 0
      %2292 = vmatpush.bf16.msra.mxu0 0
      %2293 = vmatpush.bf16.msra.mxu0 0
      %2294 = vmatpush.bf16.msra.mxu0 0
      %2295 = vmatpush.bf16.msra.mxu0 0
      %2296 = vmatpush.bf16.msra.mxu0 0
      %2297 = vmatpush.bf16.msra.mxu0 0
      %2298 = vmatpush.bf16.msra.mxu0 0
      %2299 = vmatpush.bf16.msra.mxu0 %v2290
      %2300 = vmatmul.bf16.gmra.mxu0 %v891
      %v2301 = vpop.f32.mrf.mxu0
      %v2302 = vadd.f32 0.0, %v2301
      %v2303 = vpop.f32.mrf.mxu0
      %v2304 = vadd.f32 0.0, %v2303
      %2305 = vdwg.mxu0
      %2306 = vmatpush.bf16.msra.mxu0 0
      %2307 = vmatpush.bf16.msra.mxu0 0
      %2308 = vmatpush.bf16.msra.mxu0 0
      %2309 = vmatpush.bf16.msra.mxu0 0
      %2310 = vmatpush.bf16.msra.mxu0 0
      %2311 = vmatpush.bf16.msra.mxu0 0
      %2312 = vmatpush.bf16.msra.mxu0 0
      %2313 = vmatpush.bf16.msra.mxu0 %v2290
      %2314 = vmatmul.bf16.gmra.mxu0 %v907
      %v2315 = vpop.f32.mrf.mxu0
      %v2316 = vadd.f32 0.0, %v2315
      %v2317 = vpop.f32.mrf.mxu0
      %v2318 = vadd.f32 0.0, %v2317
      %2319 = vdwg.mxu0
      %2320 = vmatpush.bf16.msra.mxu0 0
      %2321 = vmatpush.bf16.msra.mxu0 0
      %2322 = vmatpush.bf16.msra.mxu0 0
      %2323 = vmatpush.bf16.msra.mxu0 0
      %2324 = vmatpush.bf16.msra.mxu0 0
      %2325 = vmatpush.bf16.msra.mxu0 0
      %2326 = vmatpush.bf16.msra.mxu0 0
      %2327 = vmatpush.bf16.msra.mxu0 %v2290
      %2328 = vmatmul.bf16.gmra.mxu0 %v923
      %v2329 = vpop.f32.mrf.mxu0
      %v2330 = vadd.f32 0.0, %v2329
      %v2331 = vpop.f32.mrf.mxu0
      %v2332 = vadd.f32 0.0, %v2331
      %2333 = vdwg.mxu0
      %2334 = vmatpush.bf16.msra.mxu0 0
      %2335 = vmatpush.bf16.msra.mxu0 0
      %2336 = vmatpush.bf16.msra.mxu0 0
      %2337 = vmatpush.bf16.msra.mxu0 0
      %2338 = vmatpush.bf16.msra.mxu0 0
      %2339 = vmatpush.bf16.msra.mxu0 0
      %2340 = vmatpush.bf16.msra.mxu0 0
      %2341 = vmatpush.bf16.msra.mxu0 %v2290
      %2342 = vmatmul.bf16.gmra.mxu0 %v939
      %v2343 = vpop.f32.mrf.mxu0
      %v2344 = vadd.f32 0.0, %v2343
      %v2345 = vpop.f32.mrf.mxu0
      %v2346 = vadd.f32 0.0, %v2345
      %2347 = vdwg.mxu0
      %2348 = vmatpush.bf16.msra.mxu0 0
      %2349 = vmatpush.bf16.msra.mxu0 0
      %2350 = vmatpush.bf16.msra.mxu0 0
      %2351 = vmatpush.bf16.msra.mxu0 0
      %2352 = vmatpush.bf16.msra.mxu0 0
      %2353 = vmatpush.bf16.msra.mxu0 0
      %2354 = vmatpush.bf16.msra.mxu0 0
      %2355 = vmatpush.bf16.msra.mxu0 %v2290
      %2356 = vmatmul.bf16.gmra.mxu0 %v955
      %v2357 = vpop.f32.mrf.mxu0
      %v2358 = vadd.f32 0.0, %v2357
      %v2359 = vpop.f32.mrf.mxu0
      %v2360 = vadd.f32 0.0, %v2359
      %2361 = vdwg.mxu0
      %2362 = vmatpush.bf16.msra.mxu0 0
      %2363 = vmatpush.bf16.msra.mxu0 0
      %2364 = vmatpush.bf16.msra.mxu0 0
      %2365 = vmatpush.bf16.msra.mxu0 0
      %2366 = vmatpush.bf16.msra.mxu0 0
      %2367 = vmatpush.bf16.msra.mxu0 0
      %2368 = vmatpush.bf16.msra.mxu0 0
      %2369 = vmatpush.bf16.msra.mxu0 %v2290
      %2370 = vmatmul.bf16.gmra.mxu0 %v971
      %v2371 = vpop.f32.mrf.mxu0
      %v2372 = vadd.f32 0.0, %v2371
      %v2373 = vpop.f32.mrf.mxu0
      %v2374 = vadd.f32 0.0, %v2373
      %2375 = vdwg.mxu0
      %2376 = vmatpush.bf16.msra.mxu0 0
      %2377 = vmatpush.bf16.msra.mxu0 0
      %2378 = vmatpush.bf16.msra.mxu0 0
      %2379 = vmatpush.bf16.msra.mxu0 0
      %2380 = vmatpush.bf16.msra.mxu0 0
      %2381 = vmatpush.bf16.msra.mxu0 0
      %2382 = vmatpush.bf16.msra.mxu0 0
      %2383 = vmatpush.bf16.msra.mxu0 %v2290
      %2384 = vmatmul.bf16.gmra.mxu0 %v987
      %v2385 = vpop.f32.mrf.mxu0
      %v2386 = vadd.f32 0.0, %v2385
      %v2387 = vpop.f32.mrf.mxu0
      %v2388 = vadd.f32 0.0, %v2387
      %2389 = vdwg.mxu0
      %2390 = vmatpush.bf16.msra.mxu0 0
      %2391 = vmatpush.bf16.msra.mxu0 0
      %2392 = vmatpush.bf16.msra.mxu0 0
      %2393 = vmatpush.bf16.msra.mxu0 0
      %2394 = vmatpush.bf16.msra.mxu0 0
      %2395 = vmatpush.bf16.msra.mxu0 0
      %2396 = vmatpush.bf16.msra.mxu0 0
      %2397 = vmatpush.bf16.msra.mxu0 %v2290
      %2398 = vmatmul.bf16.gmra.mxu0 %v1003
      %v2399 = vpop.f32.mrf.mxu0
      %v2400 = vadd.f32 0.0, %v2399
      %v2401 = vpop.f32.mrf.mxu0
      %v2402 = vadd.f32 0.0, %v2401
      %2403 = vdwg.mxu0
      %2404 = vmatpush.bf16.msra.mxu0 0
      %2405 = vmatpush.bf16.msra.mxu0 0
      %2406 = vmatpush.bf16.msra.mxu0 0
      %2407 = vmatpush.bf16.msra.mxu0 0
      %2408 = vmatpush.bf16.msra.mxu0 0
      %2409 = vmatpush.bf16.msra.mxu0 0
      %2410 = vmatpush.bf16.msra.mxu0 0
      %2411 = vmatpush.bf16.msra.mxu0 %v2290
      %2412 = vmatmul.bf16.gmra.mxu0 %v1019
      %v2413 = vpop.f32.mrf.mxu0
      %v2414 = vadd.f32 0.0, %v2413
      %v2415 = vpop.f32.mrf.mxu0
      %v2416 = vadd.f32 0.0, %v2415
      %2417 = vdwg.mxu0
      %2418 = vmatpush.bf16.msra.mxu0 0
      %2419 = vmatpush.bf16.msra.mxu0 0
      %2420 = vmatpush.bf16.msra.mxu0 0
      %2421 = vmatpush.bf16.msra.mxu0 0
      %2422 = vmatpush.bf16.msra.mxu0 0
      %2423 = vmatpush.bf16.msra.mxu0 0
      %2424 = vmatpush.bf16.msra.mxu0 0
      %2425 = vmatpush.bf16.msra.mxu0 %v2290
      %2426 = vmatmul.bf16.gmra.mxu0 %v1035
      %v2427 = vpop.f32.mrf.mxu0
      %v2428 = vadd.f32 0.0, %v2427
      %v2429 = vpop.f32.mrf.mxu0
      %v2430 = vadd.f32 0.0, %v2429
      %2431 = vdwg.mxu0
      %2432 = vmatpush.bf16.msra.mxu0 0
      %2433 = vmatpush.bf16.msra.mxu0 0
      %2434 = vmatpush.bf16.msra.mxu0 0
      %2435 = vmatpush.bf16.msra.mxu0 0
      %2436 = vmatpush.bf16.msra.mxu0 0
      %2437 = vmatpush.bf16.msra.mxu0 0
      %2438 = vmatpush.bf16.msra.mxu0 0
      %2439 = vmatpush.bf16.msra.mxu0 %v2290
      %2440 = vmatmul.bf16.gmra.mxu0 %v1051
      %v2441 = vpop.f32.mrf.mxu0
      %v2442 = vadd.f32 0.0, %v2441
      %v2443 = vpop.f32.mrf.mxu0
      %v2444 = vadd.f32 0.0, %v2443
      %2445 = vdwg.mxu0
      %2446 = vmatpush.bf16.msra.mxu0 0
      %2447 = vmatpush.bf16.msra.mxu0 0
      %2448 = vmatpush.bf16.msra.mxu0 0
      %2449 = vmatpush.bf16.msra.mxu0 0
      %2450 = vmatpush.bf16.msra.mxu0 0
      %2451 = vmatpush.bf16.msra.mxu0 0
      %2452 = vmatpush.bf16.msra.mxu0 0
      %2453 = vmatpush.bf16.msra.mxu0 %v2290
      %2454 = vmatmul.bf16.gmra.mxu0 %v1067
      %v2455 = vpop.f32.mrf.mxu0
      %v2456 = vadd.f32 0.0, %v2455
      %v2457 = vpop.f32.mrf.mxu0
      %v2458 = vadd.f32 0.0, %v2457
      %2459 = vdwg.mxu0
      %2460 = vmatpush.bf16.msra.mxu0 0
      %2461 = vmatpush.bf16.msra.mxu0 0
      %2462 = vmatpush.bf16.msra.mxu0 0
      %2463 = vmatpush.bf16.msra.mxu0 0
      %2464 = vmatpush.bf16.msra.mxu0 0
      %2465 = vmatpush.bf16.msra.mxu0 0
      %2466 = vmatpush.bf16.msra.mxu0 0
      %2467 = vmatpush.bf16.msra.mxu0 %v2290
      %2468 = vmatmul.bf16.gmra.mxu0 %v1083
      %v2469 = vpop.f32.mrf.mxu0
      %v2470 = vadd.f32 0.0, %v2469
      %v2471 = vpop.f32.mrf.mxu0
      %v2472 = vadd.f32 0.0, %v2471
      %2473 = vdwg.mxu0
      %2474 = vmatpush.bf16.msra.mxu0 0
      %2475 = vmatpush.bf16.msra.mxu0 0
      %2476 = vmatpush.bf16.msra.mxu0 0
      %2477 = vmatpush.bf16.msra.mxu0 0
      %2478 = vmatpush.bf16.msra.mxu0 0
      %2479 = vmatpush.bf16.msra.mxu0 0
      %2480 = vmatpush.bf16.msra.mxu0 0
      %2481 = vmatpush.bf16.msra.mxu0 %v2290
      %2482 = vmatmul.bf16.gmra.mxu0 %v1099
      %v2483 = vpop.f32.mrf.mxu0
      %v2484 = vadd.f32 0.0, %v2483
      %v2485 = vpop.f32.mrf.mxu0
      %v2486 = vadd.f32 0.0, %v2485
      %2487 = vdwg.mxu0
      %2488 = vmatpush.bf16.msra.mxu0 0
      %2489 = vmatpush.bf16.msra.mxu0 0
      %2490 = vmatpush.bf16.msra.mxu0 0
      %2491 = vmatpush.bf16.msra.mxu0 0
      %2492 = vmatpush.bf16.msra.mxu0 0
      %2493 = vmatpush.bf16.msra.mxu0 0
      %2494 = vmatpush.bf16.msra.mxu0 0
      %2495 = vmatpush.bf16.msra.mxu0 %v2290
      %2496 = vmatmul.bf16.gmra.mxu0 %v1694
      %v2497 = vpop.f32.mrf.mxu0
      %v2498 = vadd.f32 0.0, %v2497
      %v2499 = vpop.f32.mrf.mxu0
      %v2500 = vadd.f32 0.0, %v2499
      %2501 = vdwg.mxu0
      %v2504 = vunpack.c.l.b16 %v252
      %v2505 = vunpack.c.l.b16 %v253
      %v2506 = vpack.c.b16 %v2505, %v2504
      %v2508 = vsel %vm279, %v2506, 0
      %2510 = vmatpush.bf16.msra.mxu0 0
      %2511 = vmatpush.bf16.msra.mxu0 0
      %2512 = vmatpush.bf16.msra.mxu0 0
      %2513 = vmatpush.bf16.msra.mxu0 0
      %2514 = vmatpush.bf16.msra.mxu0 0
      %2515 = vmatpush.bf16.msra.mxu0 0
      %2516 = vmatpush.bf16.msra.mxu0 0
      %2517 = vmatpush.bf16.msra.mxu0 %v2290
      %2518 = vmatmul.bf16.gmra.mxu0 %v2508
      %v2519 = vpop.f32.mrf.mxu0
      %v2520 = vadd.f32 0.0, %v2519
      %v2521 = vpop.f32.mrf.mxu0
      %v2522 = vadd.f32 0.0, %v2521
      %2523 = vdwg.mxu0
      %v2524 = vadd.f32 %v2255, %v2302
      %v2525 = vadd.f32 %v2256, %v2304
      %v2526 = vadd.f32 %v2257, %v2316
      %v2527 = vadd.f32 %v2258, %v2318
      %v2528 = vadd.f32 %v2259, %v2330
      %v2529 = vadd.f32 %v2260, %v2332
      %v2530 = vadd.f32 %v2261, %v2344
      %v2531 = vadd.f32 %v2262, %v2346
      %v2532 = vadd.f32 %v2263, %v2358
      %v2533 = vadd.f32 %v2264, %v2360
      %v2534 = vadd.f32 %v2265, %v2372
      %v2535 = vadd.f32 %v2266, %v2374
      %v2536 = vadd.f32 %v2267, %v2386
      %v2537 = vadd.f32 %v2268, %v2388
      %v2538 = vadd.f32 %v2269, %v2400
      %v2539 = vadd.f32 %v2270, %v2402
      %v2540 = vadd.f32 %v2271, %v2414
      %v2541 = vadd.f32 %v2272, %v2416
      %v2542 = vadd.f32 %v2273, %v2428
      %v2543 = vadd.f32 %v2274, %v2430
      %v2544 = vadd.f32 %v2275, %v2442
      %v2545 = vadd.f32 %v2276, %v2444
      %v2546 = vadd.f32 %v2277, %v2456
      %v2547 = vadd.f32 %v2278, %v2458
      %v2548 = vadd.f32 %v2279, %v2470
      %v2549 = vadd.f32 %v2280, %v2472
      %v2550 = vadd.f32 %v2281, %v2484
      %v2551 = vadd.f32 %v2282, %v2486
      %v2552 = vadd.f32 %v2283, %v2498
      %v2553 = vadd.f32 %v2284, %v2500
      %v2554 = vadd.f32 %v2285, %v2520
      %v2555 = vadd.f32 %v2286, %v2522
      %s2556 = scalar_lea.vmem %s1, 14
      %v2557 = vld [vmem:[%s2556] sm:$0x3]
      %v2559 = vsel %vm283, %v2557, 0
      %2561 = vmatpush.bf16.msra.mxu0 0
      %2562 = vmatpush.bf16.msra.mxu0 0
      %2563 = vmatpush.bf16.msra.mxu0 0
      %2564 = vmatpush.bf16.msra.mxu0 0
      %2565 = vmatpush.bf16.msra.mxu0 0
      %2566 = vmatpush.bf16.msra.mxu0 0
      %2567 = vmatpush.bf16.msra.mxu0 0
      %2568 = vmatpush.bf16.msra.mxu0 %v2559
      %2569 = vmatmul.bf16.gmra.mxu0 %v359
      %v2570 = vpop.f32.mrf.mxu0
      %v2571 = vadd.f32 0.0, %v2570
      %v2572 = vpop.f32.mrf.mxu0
      %v2573 = vadd.f32 0.0, %v2572
      %2574 = vdwg.mxu0
      %2575 = vmatpush.bf16.msra.mxu0 0
      %2576 = vmatpush.bf16.msra.mxu0 0
      %2577 = vmatpush.bf16.msra.mxu0 0
      %2578 = vmatpush.bf16.msra.mxu0 0
      %2579 = vmatpush.bf16.msra.mxu0 0
      %2580 = vmatpush.bf16.msra.mxu0 0
      %2581 = vmatpush.bf16.msra.mxu0 0
      %2582 = vmatpush.bf16.msra.mxu0 %v2559
      %2583 = vmatmul.bf16.gmra.mxu0 %v396
      %v2584 = vpop.f32.mrf.mxu0
      %v2585 = vadd.f32 0.0, %v2584
      %v2586 = vpop.f32.mrf.mxu0
      %v2587 = vadd.f32 0.0, %v2586
      %2588 = vdwg.mxu0
      %2589 = vmatpush.bf16.msra.mxu0 0
      %2590 = vmatpush.bf16.msra.mxu0 0
      %2591 = vmatpush.bf16.msra.mxu0 0
      %2592 = vmatpush.bf16.msra.mxu0 0
      %2593 = vmatpush.bf16.msra.mxu0 0
      %2594 = vmatpush.bf16.msra.mxu0 0
      %2595 = vmatpush.bf16.msra.mxu0 0
      %2596 = vmatpush.bf16.msra.mxu0 %v2559
      %2597 = vmatmul.bf16.gmra.mxu0 %v433
      %v2598 = vpop.f32.mrf.mxu0
      %v2599 = vadd.f32 0.0, %v2598
      %v2600 = vpop.f32.mrf.mxu0
      %v2601 = vadd.f32 0.0, %v2600
      %2602 = vdwg.mxu0
      %2603 = vmatpush.bf16.msra.mxu0 0
      %2604 = vmatpush.bf16.msra.mxu0 0
      %2605 = vmatpush.bf16.msra.mxu0 0
      %2606 = vmatpush.bf16.msra.mxu0 0
      %2607 = vmatpush.bf16.msra.mxu0 0
      %2608 = vmatpush.bf16.msra.mxu0 0
      %2609 = vmatpush.bf16.msra.mxu0 0
      %2610 = vmatpush.bf16.msra.mxu0 %v2559
      %2611 = vmatmul.bf16.gmra.mxu0 %v470
      %v2612 = vpop.f32.mrf.mxu0
      %v2613 = vadd.f32 0.0, %v2612
      %v2614 = vpop.f32.mrf.mxu0
      %v2615 = vadd.f32 0.0, %v2614
      %2616 = vdwg.mxu0
      %2617 = vmatpush.bf16.msra.mxu0 0
      %2618 = vmatpush.bf16.msra.mxu0 0
      %2619 = vmatpush.bf16.msra.mxu0 0
      %2620 = vmatpush.bf16.msra.mxu0 0
      %2621 = vmatpush.bf16.msra.mxu0 0
      %2622 = vmatpush.bf16.msra.mxu0 0
      %2623 = vmatpush.bf16.msra.mxu0 0
      %2624 = vmatpush.bf16.msra.mxu0 %v2559
      %2625 = vmatmul.bf16.gmra.mxu0 %v507
      %v2626 = vpop.f32.mrf.mxu0
      %v2627 = vadd.f32 0.0, %v2626
      %v2628 = vpop.f32.mrf.mxu0
      %v2629 = vadd.f32 0.0, %v2628
      %2630 = vdwg.mxu0
      %2631 = vmatpush.bf16.msra.mxu0 0
      %2632 = vmatpush.bf16.msra.mxu0 0
      %2633 = vmatpush.bf16.msra.mxu0 0
      %2634 = vmatpush.bf16.msra.mxu0 0
      %2635 = vmatpush.bf16.msra.mxu0 0
      %2636 = vmatpush.bf16.msra.mxu0 0
      %2637 = vmatpush.bf16.msra.mxu0 0
      %2638 = vmatpush.bf16.msra.mxu0 %v2559
      %2639 = vmatmul.bf16.gmra.mxu0 %v544
      %v2640 = vpop.f32.mrf.mxu0
      %v2641 = vadd.f32 0.0, %v2640
      %v2642 = vpop.f32.mrf.mxu0
      %v2643 = vadd.f32 0.0, %v2642
      %2644 = vdwg.mxu0
      %2645 = vmatpush.bf16.msra.mxu0 0
      %2646 = vmatpush.bf16.msra.mxu0 0
      %2647 = vmatpush.bf16.msra.mxu0 0
      %2648 = vmatpush.bf16.msra.mxu0 0
      %2649 = vmatpush.bf16.msra.mxu0 0
      %2650 = vmatpush.bf16.msra.mxu0 0
      %2651 = vmatpush.bf16.msra.mxu0 0
      %2652 = vmatpush.bf16.msra.mxu0 %v2559
      %2653 = vmatmul.bf16.gmra.mxu0 %v581
      %v2654 = vpop.f32.mrf.mxu0
      %v2655 = vadd.f32 0.0, %v2654
      %v2656 = vpop.f32.mrf.mxu0
      %v2657 = vadd.f32 0.0, %v2656
      %2658 = vdwg.mxu0
      %2659 = vmatpush.bf16.msra.mxu0 0
      %2660 = vmatpush.bf16.msra.mxu0 0
      %2661 = vmatpush.bf16.msra.mxu0 0
      %2662 = vmatpush.bf16.msra.mxu0 0
      %2663 = vmatpush.bf16.msra.mxu0 0
      %2664 = vmatpush.bf16.msra.mxu0 0
      %2665 = vmatpush.bf16.msra.mxu0 0
      %2666 = vmatpush.bf16.msra.mxu0 %v2559
      %2667 = vmatmul.bf16.gmra.mxu0 %v618
      %v2668 = vpop.f32.mrf.mxu0
      %v2669 = vadd.f32 0.0, %v2668
      %v2670 = vpop.f32.mrf.mxu0
      %v2671 = vadd.f32 0.0, %v2670
      %2672 = vdwg.mxu0
      %2673 = vmatpush.bf16.msra.mxu0 0
      %2674 = vmatpush.bf16.msra.mxu0 0
      %2675 = vmatpush.bf16.msra.mxu0 0
      %2676 = vmatpush.bf16.msra.mxu0 0
      %2677 = vmatpush.bf16.msra.mxu0 0
      %2678 = vmatpush.bf16.msra.mxu0 0
      %2679 = vmatpush.bf16.msra.mxu0 0
      %2680 = vmatpush.bf16.msra.mxu0 %v2559
      %2681 = vmatmul.bf16.gmra.mxu0 %v655
      %v2682 = vpop.f32.mrf.mxu0
      %v2683 = vadd.f32 0.0, %v2682
      %v2684 = vpop.f32.mrf.mxu0
      %v2685 = vadd.f32 0.0, %v2684
      %2686 = vdwg.mxu0
      %2687 = vmatpush.bf16.msra.mxu0 0
      %2688 = vmatpush.bf16.msra.mxu0 0
      %2689 = vmatpush.bf16.msra.mxu0 0
      %2690 = vmatpush.bf16.msra.mxu0 0
      %2691 = vmatpush.bf16.msra.mxu0 0
      %2692 = vmatpush.bf16.msra.mxu0 0
      %2693 = vmatpush.bf16.msra.mxu0 0
      %2694 = vmatpush.bf16.msra.mxu0 %v2559
      %2695 = vmatmul.bf16.gmra.mxu0 %v692
      %v2696 = vpop.f32.mrf.mxu0
      %v2697 = vadd.f32 0.0, %v2696
      %v2698 = vpop.f32.mrf.mxu0
      %v2699 = vadd.f32 0.0, %v2698
      %2700 = vdwg.mxu0
      %2701 = vmatpush.bf16.msra.mxu0 0
      %2702 = vmatpush.bf16.msra.mxu0 0
      %2703 = vmatpush.bf16.msra.mxu0 0
      %2704 = vmatpush.bf16.msra.mxu0 0
      %2705 = vmatpush.bf16.msra.mxu0 0
      %2706 = vmatpush.bf16.msra.mxu0 0
      %2707 = vmatpush.bf16.msra.mxu0 0
      %2708 = vmatpush.bf16.msra.mxu0 %v2559
      %2709 = vmatmul.bf16.gmra.mxu0 %v729
      %v2710 = vpop.f32.mrf.mxu0
      %v2711 = vadd.f32 0.0, %v2710
      %v2712 = vpop.f32.mrf.mxu0
      %v2713 = vadd.f32 0.0, %v2712
      %2714 = vdwg.mxu0
      %2715 = vmatpush.bf16.msra.mxu0 0
      %2716 = vmatpush.bf16.msra.mxu0 0
      %2717 = vmatpush.bf16.msra.mxu0 0
      %2718 = vmatpush.bf16.msra.mxu0 0
      %2719 = vmatpush.bf16.msra.mxu0 0
      %2720 = vmatpush.bf16.msra.mxu0 0
      %2721 = vmatpush.bf16.msra.mxu0 0
      %2722 = vmatpush.bf16.msra.mxu0 %v2559
      %2723 = vmatmul.bf16.gmra.mxu0 %v766
      %v2724 = vpop.f32.mrf.mxu0
      %v2725 = vadd.f32 0.0, %v2724
      %v2726 = vpop.f32.mrf.mxu0
      %v2727 = vadd.f32 0.0, %v2726
      %2728 = vdwg.mxu0
      %2729 = vmatpush.bf16.msra.mxu0 0
      %2730 = vmatpush.bf16.msra.mxu0 0
      %2731 = vmatpush.bf16.msra.mxu0 0
      %2732 = vmatpush.bf16.msra.mxu0 0
      %2733 = vmatpush.bf16.msra.mxu0 0
      %2734 = vmatpush.bf16.msra.mxu0 0
      %2735 = vmatpush.bf16.msra.mxu0 0
      %2736 = vmatpush.bf16.msra.mxu0 %v2559
      %2737 = vmatmul.bf16.gmra.mxu0 %v803
      %v2738 = vpop.f32.mrf.mxu0
      %v2739 = vadd.f32 0.0, %v2738
      %v2740 = vpop.f32.mrf.mxu0
      %v2741 = vadd.f32 0.0, %v2740
      %2742 = vdwg.mxu0
      %2743 = vmatpush.bf16.msra.mxu0 0
      %2744 = vmatpush.bf16.msra.mxu0 0
      %2745 = vmatpush.bf16.msra.mxu0 0
      %2746 = vmatpush.bf16.msra.mxu0 0
      %2747 = vmatpush.bf16.msra.mxu0 0
      %2748 = vmatpush.bf16.msra.mxu0 0
      %2749 = vmatpush.bf16.msra.mxu0 0
      %2750 = vmatpush.bf16.msra.mxu0 %v2559
      %2751 = vmatmul.bf16.gmra.mxu0 %v840
      %v2752 = vpop.f32.mrf.mxu0
      %v2753 = vadd.f32 0.0, %v2752
      %v2754 = vpop.f32.mrf.mxu0
      %v2755 = vadd.f32 0.0, %v2754
      %2756 = vdwg.mxu0
      %2757 = vmatpush.bf16.msra.mxu0 0
      %2758 = vmatpush.bf16.msra.mxu0 0
      %2759 = vmatpush.bf16.msra.mxu0 0
      %2760 = vmatpush.bf16.msra.mxu0 0
      %2761 = vmatpush.bf16.msra.mxu0 0
      %2762 = vmatpush.bf16.msra.mxu0 0
      %2763 = vmatpush.bf16.msra.mxu0 0
      %2764 = vmatpush.bf16.msra.mxu0 %v2559
      %2765 = vmatmul.bf16.gmra.mxu0 %v1972
      %v2766 = vpop.f32.mrf.mxu0
      %v2767 = vadd.f32 0.0, %v2766
      %v2768 = vpop.f32.mrf.mxu0
      %v2769 = vadd.f32 0.0, %v2768
      %2770 = vdwg.mxu0
      %v2772 = vunpack.c.l.b16 %v254
      %v2773 = vpack.c.b16 %v2772, %v2772
      %v2774 = vshrl.u32 %v2506, 16
      %v2776 = vshll.u32 %v2506, 16
      %v2778 = vrot.slane %v2776, 1
      %v2779 = vor.u32 %v2774, %v2778
      %v2781 = vshll.u32 %v2773, 16
      %v2783 = vrot.slane %v2781, 1
      %v2784 = vsel %vm266, %v2779, %v2783
      %v2786 = vsel %vm279, %v2784, 0
      %2788 = vmatpush.bf16.msra.mxu0 0
      %2789 = vmatpush.bf16.msra.mxu0 0
      %2790 = vmatpush.bf16.msra.mxu0 0
      %2791 = vmatpush.bf16.msra.mxu0 0
      %2792 = vmatpush.bf16.msra.mxu0 0
      %2793 = vmatpush.bf16.msra.mxu0 0
      %2794 = vmatpush.bf16.msra.mxu0 0
      %2795 = vmatpush.bf16.msra.mxu0 %v2559
      %2796 = vmatmul.bf16.gmra.mxu0 %v2786
      %v2797 = vpop.f32.mrf.mxu0
      %v2798 = vadd.f32 0.0, %v2797
      %v2799 = vpop.f32.mrf.mxu0
      %v2800 = vadd.f32 0.0, %v2799
      %2801 = vdwg.mxu0
      %v2802 = vadd.f32 %v2524, %v2571
      %v2803 = vadd.f32 %v2525, %v2573
      %v2804 = vadd.f32 %v2526, %v2585
      %v2805 = vadd.f32 %v2527, %v2587
      %v2806 = vadd.f32 %v2528, %v2599
      %v2807 = vadd.f32 %v2529, %v2601
      %v2808 = vadd.f32 %v2530, %v2613
      %v2809 = vadd.f32 %v2531, %v2615
      %v2810 = vadd.f32 %v2532, %v2627
      %v2811 = vadd.f32 %v2533, %v2629
      %v2812 = vadd.f32 %v2534, %v2641
      %v2813 = vadd.f32 %v2535, %v2643
      %v2814 = vadd.f32 %v2536, %v2655
      %v2815 = vadd.f32 %v2537, %v2657
      %v2816 = vadd.f32 %v2538, %v2669
      %v2817 = vadd.f32 %v2539, %v2671
      %v2818 = vadd.f32 %v2540, %v2683
      %v2819 = vadd.f32 %v2541, %v2685
      %v2820 = vadd.f32 %v2542, %v2697
      %v2821 = vadd.f32 %v2543, %v2699
      %v2822 = vadd.f32 %v2544, %v2711
      %v2823 = vadd.f32 %v2545, %v2713
      %v2824 = vadd.f32 %v2546, %v2725
      %v2825 = vadd.f32 %v2547, %v2727
      %v2826 = vadd.f32 %v2548, %v2739
      %v2827 = vadd.f32 %v2549, %v2741
      %v2828 = vadd.f32 %v2550, %v2753
      %v2829 = vadd.f32 %v2551, %v2755
      %v2830 = vadd.f32 %v2552, %v2767
      %v2831 = vadd.f32 %v2553, %v2769
      %v2832 = vadd.f32 %v2554, %v2798
      %v2833 = vadd.f32 %v2555, %v2800
      %s2834 = scalar_lea.vmem %s1, 16
      %v2835 = vld [vmem:[%s2834] sm:$0x3]
      %v2837 = vsel %vm283, %v2835, 0
      %2839 = vmatpush.bf16.msra.mxu0 0
      %2840 = vmatpush.bf16.msra.mxu0 0
      %2841 = vmatpush.bf16.msra.mxu0 0
      %2842 = vmatpush.bf16.msra.mxu0 0
      %2843 = vmatpush.bf16.msra.mxu0 0
      %2844 = vmatpush.bf16.msra.mxu0 0
      %2845 = vmatpush.bf16.msra.mxu0 0
      %2846 = vmatpush.bf16.msra.mxu0 %v2837
      %2847 = vmatmul.bf16.gmra.mxu0 %v1165
      %v2848 = vpop.f32.mrf.mxu0
      %v2849 = vadd.f32 0.0, %v2848
      %v2850 = vpop.f32.mrf.mxu0
      %v2851 = vadd.f32 0.0, %v2850
      %2852 = vdwg.mxu0
      %2853 = vmatpush.bf16.msra.mxu0 0
      %2854 = vmatpush.bf16.msra.mxu0 0
      %2855 = vmatpush.bf16.msra.mxu0 0
      %2856 = vmatpush.bf16.msra.mxu0 0
      %2857 = vmatpush.bf16.msra.mxu0 0
      %2858 = vmatpush.bf16.msra.mxu0 0
      %2859 = vmatpush.bf16.msra.mxu0 0
      %2860 = vmatpush.bf16.msra.mxu0 %v2837
      %2861 = vmatmul.bf16.gmra.mxu0 %v1185
      %v2862 = vpop.f32.mrf.mxu0
      %v2863 = vadd.f32 0.0, %v2862
      %v2864 = vpop.f32.mrf.mxu0
      %v2865 = vadd.f32 0.0, %v2864
      %2866 = vdwg.mxu0
      %2867 = vmatpush.bf16.msra.mxu0 0
      %2868 = vmatpush.bf16.msra.mxu0 0
      %2869 = vmatpush.bf16.msra.mxu0 0
      %2870 = vmatpush.bf16.msra.mxu0 0
      %2871 = vmatpush.bf16.msra.mxu0 0
      %2872 = vmatpush.bf16.msra.mxu0 0
      %2873 = vmatpush.bf16.msra.mxu0 0
      %2874 = vmatpush.bf16.msra.mxu0 %v2837
      %2875 = vmatmul.bf16.gmra.mxu0 %v1205
      %v2876 = vpop.f32.mrf.mxu0
      %v2877 = vadd.f32 0.0, %v2876
      %v2878 = vpop.f32.mrf.mxu0
      %v2879 = vadd.f32 0.0, %v2878
      %2880 = vdwg.mxu0
      %2881 = vmatpush.bf16.msra.mxu0 0
      %2882 = vmatpush.bf16.msra.mxu0 0
      %2883 = vmatpush.bf16.msra.mxu0 0
      %2884 = vmatpush.bf16.msra.mxu0 0
      %2885 = vmatpush.bf16.msra.mxu0 0
      %2886 = vmatpush.bf16.msra.mxu0 0
      %2887 = vmatpush.bf16.msra.mxu0 0
      %2888 = vmatpush.bf16.msra.mxu0 %v2837
      %2889 = vmatmul.bf16.gmra.mxu0 %v1225
      %v2890 = vpop.f32.mrf.mxu0
      %v2891 = vadd.f32 0.0, %v2890
      %v2892 = vpop.f32.mrf.mxu0
      %v2893 = vadd.f32 0.0, %v2892
      %2894 = vdwg.mxu0
      %2895 = vmatpush.bf16.msra.mxu0 0
      %2896 = vmatpush.bf16.msra.mxu0 0
      %2897 = vmatpush.bf16.msra.mxu0 0
      %2898 = vmatpush.bf16.msra.mxu0 0
      %2899 = vmatpush.bf16.msra.mxu0 0
      %2900 = vmatpush.bf16.msra.mxu0 0
      %2901 = vmatpush.bf16.msra.mxu0 0
      %2902 = vmatpush.bf16.msra.mxu0 %v2837
      %2903 = vmatmul.bf16.gmra.mxu0 %v1245
      %v2904 = vpop.f32.mrf.mxu0
      %v2905 = vadd.f32 0.0, %v2904
      %v2906 = vpop.f32.mrf.mxu0
      %v2907 = vadd.f32 0.0, %v2906
      %2908 = vdwg.mxu0
      %2909 = vmatpush.bf16.msra.mxu0 0
      %2910 = vmatpush.bf16.msra.mxu0 0
      %2911 = vmatpush.bf16.msra.mxu0 0
      %2912 = vmatpush.bf16.msra.mxu0 0
      %2913 = vmatpush.bf16.msra.mxu0 0
      %2914 = vmatpush.bf16.msra.mxu0 0
      %2915 = vmatpush.bf16.msra.mxu0 0
      %2916 = vmatpush.bf16.msra.mxu0 %v2837
      %2917 = vmatmul.bf16.gmra.mxu0 %v1265
      %v2918 = vpop.f32.mrf.mxu0
      %v2919 = vadd.f32 0.0, %v2918
      %v2920 = vpop.f32.mrf.mxu0
      %v2921 = vadd.f32 0.0, %v2920
      %2922 = vdwg.mxu0
      %2923 = vmatpush.bf16.msra.mxu0 0
      %2924 = vmatpush.bf16.msra.mxu0 0
      %2925 = vmatpush.bf16.msra.mxu0 0
      %2926 = vmatpush.bf16.msra.mxu0 0
      %2927 = vmatpush.bf16.msra.mxu0 0
      %2928 = vmatpush.bf16.msra.mxu0 0
      %2929 = vmatpush.bf16.msra.mxu0 0
      %2930 = vmatpush.bf16.msra.mxu0 %v2837
      %2931 = vmatmul.bf16.gmra.mxu0 %v1285
      %v2932 = vpop.f32.mrf.mxu0
      %v2933 = vadd.f32 0.0, %v2932
      %v2934 = vpop.f32.mrf.mxu0
      %v2935 = vadd.f32 0.0, %v2934
      %2936 = vdwg.mxu0
      %2937 = vmatpush.bf16.msra.mxu0 0
      %2938 = vmatpush.bf16.msra.mxu0 0
      %2939 = vmatpush.bf16.msra.mxu0 0
      %2940 = vmatpush.bf16.msra.mxu0 0
      %2941 = vmatpush.bf16.msra.mxu0 0
      %2942 = vmatpush.bf16.msra.mxu0 0
      %2943 = vmatpush.bf16.msra.mxu0 0
      %2944 = vmatpush.bf16.msra.mxu0 %v2837
      %2945 = vmatmul.bf16.gmra.mxu0 %v1305
      %v2946 = vpop.f32.mrf.mxu0
      %v2947 = vadd.f32 0.0, %v2946
      %v2948 = vpop.f32.mrf.mxu0
      %v2949 = vadd.f32 0.0, %v2948
      %2950 = vdwg.mxu0
      %2951 = vmatpush.bf16.msra.mxu0 0
      %2952 = vmatpush.bf16.msra.mxu0 0
      %2953 = vmatpush.bf16.msra.mxu0 0
      %2954 = vmatpush.bf16.msra.mxu0 0
      %2955 = vmatpush.bf16.msra.mxu0 0
      %2956 = vmatpush.bf16.msra.mxu0 0
      %2957 = vmatpush.bf16.msra.mxu0 0
      %2958 = vmatpush.bf16.msra.mxu0 %v2837
      %2959 = vmatmul.bf16.gmra.mxu0 %v1325
      %v2960 = vpop.f32.mrf.mxu0
      %v2961 = vadd.f32 0.0, %v2960
      %v2962 = vpop.f32.mrf.mxu0
      %v2963 = vadd.f32 0.0, %v2962
      %2964 = vdwg.mxu0
      %2965 = vmatpush.bf16.msra.mxu0 0
      %2966 = vmatpush.bf16.msra.mxu0 0
      %2967 = vmatpush.bf16.msra.mxu0 0
      %2968 = vmatpush.bf16.msra.mxu0 0
      %2969 = vmatpush.bf16.msra.mxu0 0
      %2970 = vmatpush.bf16.msra.mxu0 0
      %2971 = vmatpush.bf16.msra.mxu0 0
      %2972 = vmatpush.bf16.msra.mxu0 %v2837
      %2973 = vmatmul.bf16.gmra.mxu0 %v1345
      %v2974 = vpop.f32.mrf.mxu0
      %v2975 = vadd.f32 0.0, %v2974
      %v2976 = vpop.f32.mrf.mxu0
      %v2977 = vadd.f32 0.0, %v2976
      %2978 = vdwg.mxu0
      %2979 = vmatpush.bf16.msra.mxu0 0
      %2980 = vmatpush.bf16.msra.mxu0 0
      %2981 = vmatpush.bf16.msra.mxu0 0
      %2982 = vmatpush.bf16.msra.mxu0 0
      %2983 = vmatpush.bf16.msra.mxu0 0
      %2984 = vmatpush.bf16.msra.mxu0 0
      %2985 = vmatpush.bf16.msra.mxu0 0
      %2986 = vmatpush.bf16.msra.mxu0 %v2837
      %2987 = vmatmul.bf16.gmra.mxu0 %v1365
      %v2988 = vpop.f32.mrf.mxu0
      %v2989 = vadd.f32 0.0, %v2988
      %v2990 = vpop.f32.mrf.mxu0
      %v2991 = vadd.f32 0.0, %v2990
      %2992 = vdwg.mxu0
      %2993 = vmatpush.bf16.msra.mxu0 0
      %2994 = vmatpush.bf16.msra.mxu0 0
      %2995 = vmatpush.bf16.msra.mxu0 0
      %2996 = vmatpush.bf16.msra.mxu0 0
      %2997 = vmatpush.bf16.msra.mxu0 0
      %2998 = vmatpush.bf16.msra.mxu0 0
      %2999 = vmatpush.bf16.msra.mxu0 0
      %3000 = vmatpush.bf16.msra.mxu0 %v2837
      %3001 = vmatmul.bf16.gmra.mxu0 %v1385
      %v3002 = vpop.f32.mrf.mxu0
      %v3003 = vadd.f32 0.0, %v3002
      %v3004 = vpop.f32.mrf.mxu0
      %v3005 = vadd.f32 0.0, %v3004
      %3006 = vdwg.mxu0
      %3007 = vmatpush.bf16.msra.mxu0 0
      %3008 = vmatpush.bf16.msra.mxu0 0
      %3009 = vmatpush.bf16.msra.mxu0 0
      %3010 = vmatpush.bf16.msra.mxu0 0
      %3011 = vmatpush.bf16.msra.mxu0 0
      %3012 = vmatpush.bf16.msra.mxu0 0
      %3013 = vmatpush.bf16.msra.mxu0 0
      %3014 = vmatpush.bf16.msra.mxu0 %v2837
      %3015 = vmatmul.bf16.gmra.mxu0 %v1405
      %v3016 = vpop.f32.mrf.mxu0
      %v3017 = vadd.f32 0.0, %v3016
      %v3018 = vpop.f32.mrf.mxu0
      %v3019 = vadd.f32 0.0, %v3018
      %3020 = vdwg.mxu0
      %3021 = vmatpush.bf16.msra.mxu0 0
      %3022 = vmatpush.bf16.msra.mxu0 0
      %3023 = vmatpush.bf16.msra.mxu0 0
      %3024 = vmatpush.bf16.msra.mxu0 0
      %3025 = vmatpush.bf16.msra.mxu0 0
      %3026 = vmatpush.bf16.msra.mxu0 0
      %3027 = vmatpush.bf16.msra.mxu0 0
      %3028 = vmatpush.bf16.msra.mxu0 %v2837
      %3029 = vmatmul.bf16.gmra.mxu0 %v1425
      %v3030 = vpop.f32.mrf.mxu0
      %v3031 = vadd.f32 0.0, %v3030
      %v3032 = vpop.f32.mrf.mxu0
      %v3033 = vadd.f32 0.0, %v3032
      %3034 = vdwg.mxu0
      %3035 = vmatpush.bf16.msra.mxu0 0
      %3036 = vmatpush.bf16.msra.mxu0 0
      %3037 = vmatpush.bf16.msra.mxu0 0
      %3038 = vmatpush.bf16.msra.mxu0 0
      %3039 = vmatpush.bf16.msra.mxu0 0
      %3040 = vmatpush.bf16.msra.mxu0 0
      %3041 = vmatpush.bf16.msra.mxu0 0
      %3042 = vmatpush.bf16.msra.mxu0 %v2837
      %3043 = vmatmul.bf16.gmra.mxu0 %v2239
      %v3044 = vpop.f32.mrf.mxu0
      %v3045 = vadd.f32 0.0, %v3044
      %v3046 = vpop.f32.mrf.mxu0
      %v3047 = vadd.f32 0.0, %v3046
      %3048 = vdwg.mxu0
      %v3049 = vrot.slane %v2506, 1
      %v3050 = vrot.slane %v2773, 1
      %v3051 = vsel %vm1117, %v3049, %v3050
      %v3053 = vsel %vm279, %v3051, 0
      %3055 = vmatpush.bf16.msra.mxu0 0
      %3056 = vmatpush.bf16.msra.mxu0 0
      %3057 = vmatpush.bf16.msra.mxu0 0
      %3058 = vmatpush.bf16.msra.mxu0 0
      %3059 = vmatpush.bf16.msra.mxu0 0
      %3060 = vmatpush.bf16.msra.mxu0 0
      %3061 = vmatpush.bf16.msra.mxu0 0
      %3062 = vmatpush.bf16.msra.mxu0 %v2837
      %3063 = vmatmul.bf16.gmra.mxu0 %v3053
      %v3064 = vpop.f32.mrf.mxu0
      %v3065 = vadd.f32 0.0, %v3064
      %v3066 = vpop.f32.mrf.mxu0
      %v3067 = vadd.f32 0.0, %v3066
      %3068 = vdwg.mxu0
      %v3069 = vadd.f32 %v2802, %v2849
      %v3070 = vadd.f32 %v2803, %v2851
      %v3071 = vadd.f32 %v2804, %v2863
      %v3072 = vadd.f32 %v2805, %v2865
      %v3073 = vadd.f32 %v2806, %v2877
      %v3074 = vadd.f32 %v2807, %v2879
      %v3075 = vadd.f32 %v2808, %v2891
      %v3076 = vadd.f32 %v2809, %v2893
      %v3077 = vadd.f32 %v2810, %v2905
      %v3078 = vadd.f32 %v2811, %v2907
      %v3079 = vadd.f32 %v2812, %v2919
      %v3080 = vadd.f32 %v2813, %v2921
      %v3081 = vadd.f32 %v2814, %v2933
      %v3082 = vadd.f32 %v2815, %v2935
      %v3083 = vadd.f32 %v2816, %v2947
      %v3084 = vadd.f32 %v2817, %v2949
      %v3085 = vadd.f32 %v2818, %v2961
      %v3086 = vadd.f32 %v2819, %v2963
      %v3087 = vadd.f32 %v2820, %v2975
      %v3088 = vadd.f32 %v2821, %v2977
      %v3089 = vadd.f32 %v2822, %v2989
      %v3090 = vadd.f32 %v2823, %v2991
      %v3091 = vadd.f32 %v2824, %v3003
      %v3092 = vadd.f32 %v2825, %v3005
      %v3093 = vadd.f32 %v2826, %v3017
      %v3094 = vadd.f32 %v2827, %v3019
      %v3095 = vadd.f32 %v2828, %v3031
      %v3096 = vadd.f32 %v2829, %v3033
      %v3097 = vadd.f32 %v2830, %v3045
      %v3098 = vadd.f32 %v2831, %v3047
      %v3099 = vadd.f32 %v2832, %v3065
      %v3100 = vadd.f32 %v2833, %v3067
      %v3101 = vld [vmem:[%s2] sm:$0x1]
      %v3103 = vperm.slane %v3101, 0
      %v3105 = vadd.f32 %v3069, %v3103
      %v3106 = vadd.f32 %v3070, %v3103
      %v3107 = vadd.f32 %v3071, %v3103
      %v3108 = vadd.f32 %v3072, %v3103
      %v3109 = vadd.f32 %v3073, %v3103
      %v3110 = vadd.f32 %v3074, %v3103
      %v3111 = vadd.f32 %v3075, %v3103
      %v3112 = vadd.f32 %v3076, %v3103
      %v3113 = vadd.f32 %v3077, %v3103
      %v3114 = vadd.f32 %v3078, %v3103
      %v3115 = vadd.f32 %v3079, %v3103
      %v3116 = vadd.f32 %v3080, %v3103
      %v3117 = vadd.f32 %v3081, %v3103
      %v3118 = vadd.f32 %v3082, %v3103
      %v3119 = vadd.f32 %v3083, %v3103
      %v3120 = vadd.f32 %v3084, %v3103
      %v3121 = vadd.f32 %v3085, %v3103
      %v3122 = vadd.f32 %v3086, %v3103
      %v3123 = vadd.f32 %v3087, %v3103
      %v3124 = vadd.f32 %v3088, %v3103
      %v3125 = vadd.f32 %v3089, %v3103
      %v3126 = vadd.f32 %v3090, %v3103
      %v3127 = vadd.f32 %v3091, %v3103
      %v3128 = vadd.f32 %v3092, %v3103
      %v3129 = vadd.f32 %v3093, %v3103
      %v3130 = vadd.f32 %v3094, %v3103
      %v3131 = vadd.f32 %v3095, %v3103
      %v3132 = vadd.f32 %v3096, %v3103
      %v3133 = vadd.f32 %v3097, %v3103
      %v3134 = vadd.f32 %v3098, %v3103
      %v3135 = vadd.f32 %v3099, %v3103
      %v3136 = vadd.f32 %v3100, %v3103
      %v3137 = vmax.f32 %v3105, 0.0
      %v3138 = vmax.f32 %v3106, 0.0
      %v3139 = vmax.f32 %v3107, 0.0
      %v3140 = vmax.f32 %v3108, 0.0
      %v3141 = vmax.f32 %v3109, 0.0
      %v3142 = vmax.f32 %v3110, 0.0
      %v3143 = vmax.f32 %v3111, 0.0
      %v3144 = vmax.f32 %v3112, 0.0
      %v3145 = vmax.f32 %v3113, 0.0
      %v3146 = vmax.f32 %v3114, 0.0
      %v3147 = vmax.f32 %v3115, 0.0
      %v3148 = vmax.f32 %v3116, 0.0
      %v3149 = vmax.f32 %v3117, 0.0
      %v3150 = vmax.f32 %v3118, 0.0
      %v3151 = vmax.f32 %v3119, 0.0
      %v3152 = vmax.f32 %v3120, 0.0
      %v3153 = vmax.f32 %v3121, 0.0
      %v3154 = vmax.f32 %v3122, 0.0
      %v3155 = vmax.f32 %v3123, 0.0
      %v3156 = vmax.f32 %v3124, 0.0
      %v3157 = vmax.f32 %v3125, 0.0
      %v3158 = vmax.f32 %v3126, 0.0
      %v3159 = vmax.f32 %v3127, 0.0
      %v3160 = vmax.f32 %v3128, 0.0
      %v3161 = vmax.f32 %v3129, 0.0
      %v3162 = vmax.f32 %v3130, 0.0
      %v3163 = vmax.f32 %v3131, 0.0
      %v3164 = vmax.f32 %v3132, 0.0
      %v3165 = vmax.f32 %v3133, 0.0
      %v3166 = vmax.f32 %v3134, 0.0
      %v3167 = vmax.f32 %v3135, 0.0
      %v3168 = vmax.f32 %v3136, 0.0
      %vm3169 = vcmask 64512
      %3170 = vst.msk [vmem:[%s194] sm:$0xff] %vm3169, %v3137
      %3171 = vst.msk [vmem:[%s194 + $0x8] sm:$0xff] %vm3169, %v3138
      %3172 = vst.msk [vmem:[%s194 + $0x10] sm:$0xff] %vm3169, %v3139
      %3173 = vst.msk [vmem:[%s194 + $0x18] sm:$0xff] %vm3169, %v3140
      %3174 = vst.msk [vmem:[%s194 + $0x20] sm:$0xff] %vm3169, %v3141
      %3175 = vst.msk [vmem:[%s194 + $0x28] sm:$0xff] %vm3169, %v3142
      %3176 = vst.msk [vmem:[%s194 + $0x30] sm:$0xff] %vm3169, %v3143
      %3177 = vst.msk [vmem:[%s194 + $0x38] sm:$0xff] %vm3169, %v3144
      %3178 = vst.msk [vmem:[%s194 + $0x40] sm:$0xff] %vm3169, %v3145
      %3179 = vst.msk [vmem:[%s194 + $0x48] sm:$0xff] %vm3169, %v3146
      %3180 = vst.msk [vmem:[%s194 + $0x50] sm:$0xff] %vm3169, %v3147
      %3181 = vst.msk [vmem:[%s194 + $0x58] sm:$0xff] %vm3169, %v3148
      %3182 = vst.msk [vmem:[%s194 + $0x60] sm:$0xff] %vm3169, %v3149
      %3183 = vst.msk [vmem:[%s194 + $0x68] sm:$0xff] %vm3169, %v3150
      %3184 = vst.msk [vmem:[%s194 + $0x70] sm:$0xff] %vm3169, %v3151
      %3185 = vst.msk [vmem:[%s194 + $0x78] sm:$0xff] %vm3169, %v3152
      %3186 = vst.msk [vmem:[%s194 + $0x80] sm:$0xff] %vm3169, %v3153
      %3187 = vst.msk [vmem:[%s194 + $0x88] sm:$0xff] %vm3169, %v3154
      %3188 = vst.msk [vmem:[%s194 + $0x90] sm:$0xff] %vm3169, %v3155
      %3189 = vst.msk [vmem:[%s194 + $0x98] sm:$0xff] %vm3169, %v3156
      %3190 = vst.msk [vmem:[%s194 + $0xa0] sm:$0xff] %vm3169, %v3157
      %3191 = vst.msk [vmem:[%s194 + $0xa8] sm:$0xff] %vm3169, %v3158
      %3192 = vst.msk [vmem:[%s194 + $0xb0] sm:$0xff] %vm3169, %v3159
      %3193 = vst.msk [vmem:[%s194 + $0xb8] sm:$0xff] %vm3169, %v3160
      %3194 = vst.msk [vmem:[%s194 + $0xc0] sm:$0xff] %vm3169, %v3161
      %3195 = vst.msk [vmem:[%s194 + $0xc8] sm:$0xff] %vm3169, %v3162
      %3196 = vst.msk [vmem:[%s194 + $0xd0] sm:$0xff] %vm3169, %v3163
      %3197 = vst.msk [vmem:[%s194 + $0xd8] sm:$0xff] %vm3169, %v3164
      %3198 = vst.msk [vmem:[%s194 + $0xe0] sm:$0xff] %vm3169, %v3165
      %3199 = vst.msk [vmem:[%s194 + $0xe8] sm:$0xff] %vm3169, %v3166
      %3200 = vst.msk [vmem:[%s194 + $0xf0] sm:$0xff] %vm3169, %v3167
      %3201 = vst.msk [vmem:[%s194 + $0xf8] sm:$0xff] %vm3169, %v3168
      %s3202 = smul.u32 16, %s19
      %p3203 = scmp.lt.s32.totalorder %s18, 1
      %s3204 = scalar_select %p3203, %s18, 1
      %p3205 = scmp.lt.s32.totalorder %s3202, 15
      %s3206 = scalar_select %p3205, %s3202, 15
      %s3207 = smul.addr %s3206, 2
      %s3208 = smul.addr %s3204, 32
      %s3209 = sadd.s32 %s3207, %s3208
      %s3210 = smul.addr %s3209, 8
      %s3211 = scalar_lea.vmem %s3, %s3210
      // Predicated region
      $region33: #{tpu_custom_call.1} parent=31 // pred_check
        %p3212 = pneg %p114
      $region34: #{tpu_custom_call.1} parent=31 // pred_check_branch
        %3214 = sbr.rel (%p3212) target = $region36
      $region35: #{tpu_custom_call.1} parent=31 // pred_region
        %s3215 = smul.u32 16, %s19
      $region36: #{tpu_custom_call.1} parent=31 // pred_fallthru
        _
    $region32: #{tpu_custom_call.1} parent=5 // pred_fallthru
      _
    %p3216 = scmp.le.s32.totalorder 2, %s9
    // Predicated region
    $region37: #{tpu_custom_call.1} parent=5 // pred_check
      %p3217 = pneg %p3216
    $region38: #{tpu_custom_call.1} parent=5 // pred_check_branch
      %3219 = sbr.rel (%p3217) target = $region40
    $region39: #{tpu_custom_call.1} parent=5 // pred_region
      %s3220 = ssub.s32 %s9, 2
      // Predicated region
      $region41: #{tpu_custom_call.1} parent=39 // pred_check
        %p3221 = pneg %p120
      $region42: #{tpu_custom_call.1} parent=39 // pred_check_branch
        %3223 = sbr.rel (%p3221) target = $region44
      $region43: #{tpu_custom_call.1} parent=39 // pred_region
        %s3224 = smul.u32 16, %s21
        %p3225 = scmp.lt.s32.totalorder %s20, 1
        %s3226 = scalar_select %p3225, %s20, 1
        %p3227 = scmp.lt.s32.totalorder %s3224, 15
        %s3228 = scalar_select %p3227, %s3224, 15
        %s3229 = smul.addr %s3228, 2
        %s3230 = smul.addr %s3226, 32
        %s3231 = sadd.s32 %s3229, %s3230
        %s3232 = smul.addr %s3231, 8
        %s3233 = scalar_lea.vmem %s3, %s3232
      $region44: #{tpu_custom_call.1} parent=39 // pred_fallthru
        _
    $region40: #{tpu_custom_call.1} parent=5 // pred_fallthru
      _
  $region6: #{tpu_custom_call.1} parent=0 // loop_footer
    %s13 = sadd.s32 1, %s9
  $region7: #{tpu_custom_call.1} parent=0 // loop_footer_branch
    %8 = sbr.rel target = $region3
  $region8: #{tpu_custom_call.1} parent=0 // loop_exit
    _

</llo_original>
